<compile_context>
chip_gen: v5e
topology: v5e:2x2
jax: 0.10.0
libtpu: 0.0.40
codegen_flags: <defaults>
</compile_context>

<pallas_src>
import functools
import math

import jax
import jax.numpy as jnp
from jax import lax
from jax.experimental import pallas as pl
from jax.experimental.pallas import tpu as pltpu


# ---------------------------------------------------------------------------
# Helpers
# ---------------------------------------------------------------------------

def _row_tile(n_rows: int, row_bytes: int, *, budget_bytes: int = 8 << 20,
              cap: int = 1024) -> int:
    """Sublane-aligned row tile for purely row-wise kernels.

    Budget accounts for double-buffered input + output tiles so the same tiling
    fits v7x's smaller VMEM as well as v5e/v6e. A single full block is used when
    the whole array fits (block dims == array dims is always legal).
    """
    pack = 8
    fit = max(pack, budget_bytes // max(1, 4 * row_bytes))
    tm = min(cap, fit)
    if n_rows <= tm:
        return n_rows
    return max(pack, (tm // pack) * pack)   # partial last block handled by masking


def _pick_tn(n: int, tn_max: int = 512) -> int:
    """Lane-dense output-feature tile: multiple of 128 that divides N when possible."""
    if n % 128 != 0:
        return n                      # full dim (legal), e.g. odd vocab sizes
    if n <= tn_max:
        return n
    for tn in range(tn_max, 127, -128):
        if n % tn == 0:
            return tn
    return tn_max


def _rope_tables(seq_len: int, head_dim: int, base: float = 10000.0):
    """cos/sin tables matching RotaryEmbedding: cat((freqs, freqs), -1)."""
    inv_freq = 1.0 / (base ** (jnp.arange(0, head_dim, 2, dtype=jnp.float32) / head_dim))
    freqs = jnp.outer(jnp.arange(seq_len, dtype=jnp.float32), inv_freq)
    pos = jnp.concatenate([freqs, freqs], axis=-1)            # (T, head_dim)
    return jnp.cos(pos), jnp.sin(pos)


# ---------------------------------------------------------------------------
# LayerNorm kernel (eps = 1e-5, matches F.layer_norm)
# ---------------------------------------------------------------------------

def _layer_norm_kernel(x_ref, w_ref, b_ref, o_ref, *, eps: float):
    x = x_ref[...].astype(jnp.float32)                        # (tm, D)
    mu = jnp.mean(x, axis=-1, keepdims=True)
    xc = x - mu
    var = jnp.mean(xc * xc, axis=-1, keepdims=True)
    inv = lax.rsqrt(var + eps)                                 # EUP rsqrt, one per row
    w = w_ref[...].astype(jnp.float32)
    b = b_ref[...].astype(jnp.float32)
    o_ref[...] = (xc * inv * w + b).astype(o_ref.dtype)


def layer_norm(x2d, weight, bias, *, eps: float = 1e-5):
    n_rows, d = x2d.shape
    itemsize = jnp.dtype(x2d.dtype).itemsize
    tm = _row_tile(n_rows, d * itemsize)
    grid = (pl.cdiv(n_rows, tm),)
    kernel = functools.partial(_layer_norm_kernel, eps=eps)
    return pl.pallas_call(
        kernel,
        out_shape=jax.ShapeDtypeStruct((n_rows, d), x2d.dtype),
        grid_spec=pltpu.PrefetchScalarGridSpec(
            num_scalar_prefetch=0,
            grid=grid,
            in_specs=[
                pl.BlockSpec((tm, d), lambda i: (i, 0)),
                pl.BlockSpec((1, d), lambda i: (0, 0)),
                pl.BlockSpec((1, d), lambda i: (0, 0)),
            ],
            out_specs=pl.BlockSpec((tm, d), lambda i: (i, 0)),
        ),
        compiler_params=pltpu.CompilerParams(dimension_semantics=("parallel",)),
    )(x2d, weight.reshape(1, d), bias.reshape(1, d))


# ---------------------------------------------------------------------------
# Linear kernel: y = x @ W + b  (W stored as (in, out))
# ---------------------------------------------------------------------------

def _linear_kernel(x_ref, w_ref, b_ref, o_ref):
    acc = jnp.dot(x_ref[...], w_ref[...], preferred_element_type=jnp.float32)
    o_ref[...] = (acc + b_ref[...].astype(jnp.float32)).astype(o_ref.dtype)


def linear(x2d, w, b, *, tm_max: int = 256, tn_max: int = 512):
    m, k = x2d.shape
    k2, n = w.shape
    assert k == k2
    # Contraction dim K is loaded whole per block (fine for d_model-sized K);
    # rows and output features are tiled and marked "parallel" for megacore.
    tm = m if m <= tm_max else (tm_max // 8) * 8
    tn = _pick_tn(n, tn_max)
    grid = (pl.cdiv(m, tm), pl.cdiv(n, tn))
    return pl.pallas_call(
        _linear_kernel,
        out_shape=jax.ShapeDtypeStruct((m, n), x2d.dtype),
        grid_spec=pltpu.PrefetchScalarGridSpec(
            num_scalar_prefetch=0,
            grid=grid,
            in_specs=[
                pl.BlockSpec((tm, k), lambda i, j: (i, 0)),
                pl.BlockSpec((k, tn), lambda i, j: (0, j)),
                pl.BlockSpec((1, tn), lambda i, j: (0, j)),
            ],
            out_specs=pl.BlockSpec((tm, tn), lambda i, j: (i, j)),
        ),
        compiler_params=pltpu.CompilerParams(
            dimension_semantics=("parallel", "parallel")),
    )(x2d, w, b.reshape(1, n))


# ---------------------------------------------------------------------------
# Fused RoPE + causal attention kernel
#   q/k/v: (batch*heads, T, head_dim); whole sequence per block (demo seq is tiny).
#   TODO(synk): for long sequences this should become a seq-tiled flash-attention
#   kernel; the attention_mask / explicit attention_bias path is not implemented
#   (the default forward with attention_bias=None is causal).
# ---------------------------------------------------------------------------

def _attention_kernel(q_ref, k_ref, v_ref, cos_ref, sin_ref, o_ref, *,
                      scale: float, mask_value: float = -1e30):
    q = q_ref[...].astype(jnp.float32)                         # (bh, T, hs)
    k = k_ref[...].astype(jnp.float32)
    v = v_ref[...].astype(jnp.float32)
    cos = cos_ref[...]                                         # (T, hs) f32
    sin = sin_ref[...]
    hs = q.shape[-1]
    half = hs // 2

    # rotate_half(t) == sign * roll(t, hs//2) (roll by half-period, sign flips the
    # lanes that came from the second half). roll uses the XLU slot -> cheap.
    lane = lax.broadcasted_iota(jnp.int32, q.shape, 2)
    sign = jnp.where(lane < half, -1.0, 1.0).astype(jnp.float32)

    def rope(t):
        return t * cos + sign * pltpu.roll(t, shift=half, axis=2) * sin

    q = rope(q)
    k = rope(k)

    s = jnp.einsum('bqd,bkd->bqk', q, k,
                   preferred_element_type=jnp.float32) * scale
    row = lax.broadcasted_iota(jnp.int32, s.shape, 1)
    col = lax.broadcasted_iota(jnp.int32, s.shape, 2)
    s = jnp.where(col <= row, s, mask_value)                   # causal mask
    m = jnp.max(s, axis=-1, keepdims=True)
    p = jnp.exp(s - m)
    denom = jnp.sum(p, axis=-1, keepdims=True)
    out = jnp.einsum('bqk,bkd->bqd', p, v, preferred_element_type=jnp.float32)
    out = out * pl.reciprocal(denom, approx=False)
    o_ref[...] = out.astype(o_ref.dtype)


def attention(q, k, v, cos, sin, *, bh_tile_max: int = 16):
    bh, t, hs = q.shape
    bh_tile = min(bh, bh_tile_max)
    grid = (pl.cdiv(bh, bh_tile),)
    kernel = functools.partial(_attention_kernel, scale=1.0 / math.sqrt(hs))
    qkv_spec = pl.BlockSpec((bh_tile, t, hs), lambda i: (i, 0, 0))
    tbl_spec = pl.BlockSpec((t, hs), lambda i: (0, 0))
    return pl.pallas_call(
        kernel,
        out_shape=jax.ShapeDtypeStruct((bh, t, hs), q.dtype),
        grid_spec=pltpu.PrefetchScalarGridSpec(
            num_scalar_prefetch=0,
            grid=grid,
            in_specs=[qkv_spec, qkv_spec, qkv_spec, tbl_spec, tbl_spec],
            out_specs=pl.BlockSpec((bh_tile, t, hs), lambda i: (i, 0, 0)),
        ),
        compiler_params=pltpu.CompilerParams(dimension_semantics=("parallel",)),
    )(q, k, v, cos, sin)


# ---------------------------------------------------------------------------
# SwiGLU kernel: x, gate = chunk(2, -1); out = silu(gate) * x
# ---------------------------------------------------------------------------

def _swiglu_kernel(x_ref, o_ref, *, half: int):
    x = x_ref[...].astype(jnp.float32)
    a = x[:, :half]                      # "x" half
    g = x[:, half:]                      # "gate" half
    sig = 1.0 / (1.0 + jnp.exp(-g))      # EUP exp + reciprocal
    o_ref[...] = (a * g * sig).astype(o_ref.dtype)


def swiglu(x2d):
    n_rows, w = x2d.shape
    half = w // 2
    itemsize = jnp.dtype(x2d.dtype).itemsize
    tm = _row_tile(n_rows, w * itemsize)
    grid = (pl.cdiv(n_rows, tm),)
    kernel = functools.partial(_swiglu_kernel, half=half)
    return pl.pallas_call(
        kernel,
        out_shape=jax.ShapeDtypeStruct((n_rows, half), x2d.dtype),
        grid_spec=pltpu.PrefetchScalarGridSpec(
            num_scalar_prefetch=0,
            grid=grid,
            in_specs=[pl.BlockSpec((tm, w), lambda i: (i, 0))],
            out_specs=pl.BlockSpec((tm, half), lambda i: (i, 0)),
        ),
        compiler_params=pltpu.CompilerParams(dimension_semantics=("parallel",)),
    )(x2d)


# ---------------------------------------------------------------------------
# Full CustomGPT forward built from the Pallas kernels above
# ---------------------------------------------------------------------------

def customgpt_forward(params, input_ids, config):
    b, t = input_ids.shape
    d = config['d_model']
    nh = config['n_heads']
    hs = d // nh

    # TODO(synk): embedding gather (wte lookup) left to XLA; a Pallas DMA-gather
    # kernel is possible but not worthwhile at these sizes.
    x = jnp.take(params['wte'], input_ids, axis=0).reshape(b * t, d)
    cos, sin = _rope_tables(t, hs)

    def to_heads(y):     # (B*T, D) -> (B*H, T, hs)
        return y.reshape(b, t, nh, hs).transpose(0, 2, 1, 3).reshape(b * nh, t, hs)

    def from_heads(y):   # (B*H, T, hs) -> (B*T, D)
        return y.reshape(b, nh, t, hs).transpose(0, 2, 1, 3).reshape(b * t, d)

    for blk in params['blocks']:
        # q, k, v = att_proj(att_norm(x)).split(...)
        h = layer_norm(x, blk['att_norm_w'], blk['att_norm_b'])
        qkv = linear(h, blk['att_proj_w'], blk['att_proj_b'])
        q, k, v = qkv[:, :d], qkv[:, d:2 * d], qkv[:, 2 * d:]
        att = attention(to_heads(q), to_heads(k), to_heads(v), cos, sin)
        x = x + from_heads(att)                     # residual (dropout = identity)

        # x = x + ff_out(swiglu(ff_proj(ffn_norm(x))))
        h = layer_norm(x, blk['ffn_norm_w'], blk['ffn_norm_b'])
        h = linear(h, blk['ff_proj_w'], blk['ff_proj_b'])
        h = swiglu(h)
        h = linear(h, blk['ff_out_w'], blk['ff_out_b'])
        x = x + h

    x = layer_norm(x, params['ln_f_w'], params['ln_f_b'])
    vocab = params['wte'].shape[0]
    logits = linear(x, params['wte'].T, jnp.zeros((vocab,), x.dtype))  # tied LM head, no bias
    return logits.reshape(b, t, vocab)


# ---------------------------------------------------------------------------
# Pure-JAX reference (mirrors the PyTorch math exactly; f32, inference)
# ---------------------------------------------------------------------------

def customgpt_ref(params, input_ids, config):
    hi = lax.Precision.HIGHEST
    b, t = input_ids.shape
    d = config['d_model']
    nh = config['n_heads']
    hs = d // nh
    cos, sin = _rope_tables(t, hs)
    x = params['wte'][input_ids]

    def ln(y, w, bb, eps=1e-5):
        mu = jnp.mean(y, axis=-1, keepdims=True)
        var = jnp.mean((y - mu) ** 2, axis=-1, keepdims=True)
        return (y - mu) / jnp.sqrt(var + eps) * w + bb

    def rot_half(y):
        h2 = y.shape[-1] // 2
        return jnp.concatenate([-y[..., h2:], y[..., :h2]], axis=-1)

    for blk in params['blocks']:
        h = ln(x, blk['att_norm_w'], blk['att_norm_b'])
        qkv = jnp.dot(h, blk['att_proj_w'], precision=hi) + blk['att_proj_b']
        q, k, v = jnp.split(qkv, 3, axis=-1)
        q, k, v = [y.reshape(b, t, nh, hs).transpose(0, 2, 1, 3) for y in (q, k, v)]
        q = q * cos + rot_half(q) * sin
        k = k * cos + rot_half(k) * sin
        s = jnp.einsum('bhqd,bhkd->bhqk', q, k, precision=hi) / math.sqrt(hs)
        causal = jnp.tril(jnp.ones((t, t), dtype=bool))
        s = jnp.where(causal, s, -jnp.inf)
        p = jax.nn.softmax(s, axis=-1)
        att = jnp.einsum('bhqk,bhkd->bhqd', p, v, precision=hi)
        x = x + att.transpose(0, 2, 1, 3).reshape(b, t, d)

        h = ln(x, blk['ffn_norm_w'], blk['ffn_norm_b'])
        h = jnp.dot(h, blk['ff_proj_w'], precision=hi) + blk['ff_proj_b']
        h2 = h.shape[-1] // 2
        a, g = h[..., :h2], h[..., h2:]
        h = (g * jax.nn.sigmoid(g)) * a
        h = jnp.dot(h, blk['ff_out_w'], precision=hi) + blk['ff_out_b']
        x = x + h

    x = ln(x, params['ln_f_w'], params['ln_f_b'])
    return jnp.dot(x, params['wte'].T, precision=hi)


# ---------------------------------------------------------------------------
# Parameter construction (deterministic, exercises every term in the formulas)
# ---------------------------------------------------------------------------

def init_params(key, config):
    d = config['d_model']
    vocab = config['embedding_size'] or config['vocab_size']
    mlp = config['mlp_ratio'] * d
    std = config['init_std']
    n_layers = config['n_layers']
    keys = iter(jax.random.split(key, 3 + 10 * n_layers))

    def normal(shape, s):
        return s * jax.random.normal(next(keys), shape, dtype=jnp.float32)

    params = {
        'wte': normal((vocab, d), std),
        'ln_f_w': 1.0 + normal((d,), 0.05),
        'ln_f_b': normal((d,), 0.05),
        'blocks': [],
    }
    for _ in range(n_layers):
        params['blocks'].append({
            'att_norm_w': 1.0 + normal((d,), 0.05),
            'att_norm_b': normal((d,), 0.05),
            'att_proj_w': normal((d, 3 * d), std),
            'att_proj_b': normal((3 * d,), 0.01),
            'ffn_norm_w': 1.0 + normal((d,), 0.05),
            'ffn_norm_b': normal((d,), 0.05),
            'ff_proj_w': normal((d, mlp), std),
            'ff_proj_b': normal((mlp,), 0.01),
            'ff_out_w': normal((mlp // 2, d), std / math.sqrt(2 * n_layers)),
            'ff_out_b': normal((d,), 0.01),
        })
    return params


if __name__ == "__main__":
    config = {
        'd_model': 256, 'n_heads': 2, 'n_layers': 2, 'mlp_ratio': 4,
        'vocab_size': 256, 'embedding_size': 256, 'max_sequence_length': 16,
        'init_std': 0.02, 'layer_norm_type': 'default',
        'attention_layer_norm': False,
        'residual_dropout': 0.0, 'attention_dropout': 0.0, 'embedding_dropout': 0.0,
    }
    batch, seq = 2, 8

    key = jax.random.PRNGKey(0)
    kp, kids = jax.random.split(key)
    params = init_params(kp, config)
    input_ids = jax.random.randint(kids, (batch, seq), 0, config['vocab_size'],
                                   dtype=jnp.int32)

    fwd = jax.jit(functools.partial(customgpt_forward, config=config))
    logits = jax.block_until_ready(fwd(params, input_ids))

    ref = customgpt_ref(params, input_ids, config)
    assert logits.shape == (batch, seq, config['embedding_size'])
    assert logits.dtype == jnp.float32
    max_err = float(jnp.max(jnp.abs(logits - ref)))
    assert jnp.allclose(logits, ref, atol=5e-3, rtol=5e-3), f"max abs err = {max_err}"
    print("KERNEL_OK")
</pallas_src>

<mosaic_0001>
module attributes {stable_mosaic.version = 11 : i64} {
  func.func @_attention_kernel(%arg0: i32, %arg1: memref<4x8x128xf32, #tpu.memory_space<vmem>>, %arg2: memref<4x8x128xf32, #tpu.memory_space<vmem>>, %arg3: memref<4x8x128xf32, #tpu.memory_space<vmem>>, %arg4: memref<8x128xf32, #tpu.memory_space<vmem>>, %arg5: memref<8x128xf32, #tpu.memory_space<vmem>>, %arg6: memref<4x8x128xf32, #tpu.memory_space<vmem>>) attributes {dimension_semantics = [#tpu.dimension_semantics<parallel>], iteration_bounds = array<i64: 1>, scalar_prefetch = 0 : i64, scratch_operands = 0 : i64, tpu.core_type = #tpu.core_type<tc>, window_params = [{transform_indices = @transform_0, window_bounds = array<i64: 4, 8, 128>}, {transform_indices = @transform_1, window_bounds = array<i64: 4, 8, 128>}, {transform_indices = @transform_2, window_bounds = array<i64: 4, 8, 128>}, {pipeline_mode = #tpu.pipeline_mode<synchronous>, transform_indices = @transform_3, window_bounds = array<i64: 8, 128>}, {pipeline_mode = #tpu.pipeline_mode<synchronous>, transform_indices = @transform_4, window_bounds = array<i64: 8, 128>}, {transform_indices = @transform_5, window_bounds = array<i64: 4, 8, 128>}]} {
    %c0 = arith.constant 0 : index
    %c0_0 = arith.constant 0 : index
    %c0_1 = arith.constant 0 : index
    %0 = vector.load %arg1[%c0, %c0_0, %c0_1] : memref<4x8x128xf32, #tpu.memory_space<vmem>>, vector<4x8x128xf32>
    %c0_2 = arith.constant 0 : index
    %c0_3 = arith.constant 0 : index
    %c0_4 = arith.constant 0 : index
    %1 = vector.load %arg2[%c0_2, %c0_3, %c0_4] : memref<4x8x128xf32, #tpu.memory_space<vmem>>, vector<4x8x128xf32>
    %c0_5 = arith.constant 0 : index
    %c0_6 = arith.constant 0 : index
    %c0_7 = arith.constant 0 : index
    %2 = vector.load %arg3[%c0_5, %c0_6, %c0_7] : memref<4x8x128xf32, #tpu.memory_space<vmem>>, vector<4x8x128xf32>
    %c0_8 = arith.constant 0 : index
    %c0_9 = arith.constant 0 : index
    %3 = vector.load %arg4[%c0_8, %c0_9] : memref<8x128xf32, #tpu.memory_space<vmem>>, vector<8x128xf32>
    %c0_10 = arith.constant 0 : index
    %c0_11 = arith.constant 0 : index
    %4 = vector.load %arg5[%c0_10, %c0_11] : memref<8x128xf32, #tpu.memory_space<vmem>>, vector<8x128xf32>
    %5 = tpu.iota {dimensions = array<i32: 2>} : vector<4x8x128xi32>
    %c64_i32 = arith.constant 64 : i32
    %6 = vector.broadcast %c64_i32 : i32 to vector<4x8x128xi32>
    %7 = arith.cmpi slt, %5, %6 : vector<4x8x128xi32>
    %cst = arith.constant -1.000000e+00 : f32
    %cst_12 = arith.constant 1.000000e+00 : f32
    %8 = vector.broadcast %cst : f32 to vector<4x8x128xf32>
    %9 = vector.broadcast %cst_12 : f32 to vector<4x8x128xf32>
    %10 = arith.select %7, %8, %9 : vector<4x8x128xi1>, vector<4x8x128xf32>
    %11 = vector.shape_cast %3 : vector<8x128xf32> to vector<1x8x128xf32>
    %12 = vector.broadcast %11 : vector<1x8x128xf32> to vector<4x8x128xf32>
    %13 = arith.mulf %0, %12 : vector<4x8x128xf32>
    %c64_i32_13 = arith.constant 64 : i32
    %14 = tpu.dynamic_rotate %0 by %c64_i32_13 dim 2 : vector<4x8x128xf32>, i32 -> vector<4x8x128xf32>
    %15 = arith.mulf %10, %14 : vector<4x8x128xf32>
    %16 = vector.shape_cast %4 : vector<8x128xf32> to vector<1x8x128xf32>
    %17 = vector.broadcast %16 : vector<1x8x128xf32> to vector<4x8x128xf32>
    %18 = arith.mulf %15, %17 : vector<4x8x128xf32>
    %19 = arith.addf %13, %18 : vector<4x8x128xf32>
    %20 = vector.shape_cast %3 : vector<8x128xf32> to vector<1x8x128xf32>
    %21 = vector.broadcast %20 : vector<1x8x128xf32> to vector<4x8x128xf32>
    %22 = arith.mulf %1, %21 : vector<4x8x128xf32>
    %c64_i32_14 = arith.constant 64 : i32
    %23 = tpu.dynamic_rotate %1 by %c64_i32_14 dim 2 : vector<4x8x128xf32>, i32 -> vector<4x8x128xf32>
    %24 = arith.mulf %10, %23 : vector<4x8x128xf32>
    %25 = vector.shape_cast %4 : vector<8x128xf32> to vector<1x8x128xf32>
    %26 = vector.broadcast %25 : vector<1x8x128xf32> to vector<4x8x128xf32>
    %27 = arith.mulf %24, %26 : vector<4x8x128xf32>
    %28 = arith.addf %22, %27 : vector<4x8x128xf32>
    "tpu.trace_start"() <{level = 10 : i32, message = "bqd,bkd->bqk"}> : () -> ()
    %cst_15 = arith.constant dense<0.000000e+00> : vector<4x8x8xf32>
    %29 = tpu.matmul %19, %28, %cst_15 {dimension_numbers = #tpu.dot_dimension_numbers<[2], [2], [1], [1], [0, 0, 0, 1, 1, 1], [0], [0]>} : vector<4x8x128xf32>, vector<4x8x128xf32>, vector<4x8x8xf32> -> vector<4x8x8xf32>
    "tpu.trace_stop"() : () -> ()
    %cst_16 = arith.constant 0.0883883461 : f32
    %30 = vector.broadcast %cst_16 : f32 to vector<4x8x8xf32>
    %31 = arith.mulf %29, %30 : vector<4x8x8xf32>
    %32 = tpu.iota {dimensions = array<i32: 1>} : vector<4x8x8xi32>
    %33 = tpu.iota {dimensions = array<i32: 2>} : vector<4x8x8xi32>
    %34 = arith.cmpi sle, %33, %32 : vector<4x8x8xi32>
    %cst_17 = arith.constant -1.000000e+30 : f32
    %35 = vector.broadcast %cst_17 : f32 to vector<4x8x8xf32>
    %36 = arith.select %34, %31, %35 : vector<4x8x8xi1>, vector<4x8x8xf32>
    %cst_18 = arith.constant dense<0xFF800000> : vector<4x8xf32>
    %37 = vector.multi_reduction <maximumf>, %36, %cst_18 [2] : vector<4x8x8xf32> to vector<4x8xf32>
    %38 = vector.shape_cast %37 : vector<4x8xf32> to vector<4x8x1xf32>
    %39 = vector.broadcast %38 : vector<4x8x1xf32> to vector<4x8x8xf32>
    %40 = arith.subf %36, %39 : vector<4x8x8xf32>
    %41 = math.exp %40 : vector<4x8x8xf32>
    %cst_19 = arith.constant dense<0.000000e+00> : vector<4x8xf32>
    %42 = vector.multi_reduction <add>, %41, %cst_19 [2] : vector<4x8x8xf32> to vector<4x8xf32>
    %43 = vector.shape_cast %42 : vector<4x8xf32> to vector<4x8x1xf32>
    "tpu.trace_start"() <{level = 10 : i32, message = "bqk,bkd->bqd"}> : () -> ()
    %cst_20 = arith.constant dense<0.000000e+00> : vector<4x8x128xf32>
    %44 = tpu.matmul %41, %2, %cst_20 {dimension_numbers = #tpu.dot_dimension_numbers<[2], [1], [1], [2], [0, 0, 0, 1, 1, 2], [0], [0]>} : vector<4x8x8xf32>, vector<4x8x128xf32>, vector<4x8x128xf32> -> vector<4x8x128xf32>
    "tpu.trace_stop"() : () -> ()
    %45 = tpu.reciprocal %43 : vector<4x8x1xf32> -> vector<4x8x1xf32>
    %46 = vector.broadcast %45 : vector<4x8x1xf32> to vector<4x8x128xf32>
    %47 = arith.mulf %44, %46 : vector<4x8x128xf32>
    %c0_21 = arith.constant 0 : index
    %c0_22 = arith.constant 0 : index
    %c0_23 = arith.constant 0 : index
    %48 = vector.load %arg6[%c0_21, %c0_22, %c0_23] : memref<4x8x128xf32, #tpu.memory_space<vmem>>, vector<4x8x128xf32>
    tpu.vector_store %arg6[%c0_21, %c0_22, %c0_23], %47 {strides = array<i32>} : memref<4x8x128xf32, #tpu.memory_space<vmem>>, vector<4x8x128xf32>,
    return
  }
  func.func @transform_0(%arg0: i32) -> (i32, i32, i32) {
    %c0_i32 = arith.constant 0 : i32
    %c0_i32_0 = arith.constant 0 : i32
    %c0_i32_1 = arith.constant 0 : i32
    return %arg0, %c0_i32, %c0_i32_0 : i32, i32, i32
  }
  func.func @transform_1(%arg0: i32) -> (i32, i32, i32) {
    %c0_i32 = arith.constant 0 : i32
    %c0_i32_0 = arith.constant 0 : i32
    %c0_i32_1 = arith.constant 0 : i32
    return %arg0, %c0_i32, %c0_i32_0 : i32, i32, i32
  }
  func.func @transform_2(%arg0: i32) -> (i32, i32, i32) {
    %c0_i32 = arith.constant 0 : i32
    %c0_i32_0 = arith.constant 0 : i32
    %c0_i32_1 = arith.constant 0 : i32
    return %arg0, %c0_i32, %c0_i32_0 : i32, i32, i32
  }
  func.func @transform_3(%arg0: i32) -> (i32, i32) {
    %c0_i32 = arith.constant 0 : i32
    %c0_i32_0 = arith.constant 0 : i32
    %c0_i32_1 = arith.constant 0 : i32
    return %c0_i32, %c0_i32_0 : i32, i32
  }
  func.func @transform_4(%arg0: i32) -> (i32, i32) {
    %c0_i32 = arith.constant 0 : i32
    %c0_i32_0 = arith.constant 0 : i32
    %c0_i32_1 = arith.constant 0 : i32
    return %c0_i32, %c0_i32_0 : i32, i32
  }
  func.func @transform_5(%arg0: i32) -> (i32, i32, i32) {
    %c0_i32 = arith.constant 0 : i32
    %c0_i32_0 = arith.constant 0 : i32
    %c0_i32_1 = arith.constant 0 : i32
    return %arg0, %c0_i32, %c0_i32_0 : i32, i32, i32
  }
}

module attributes {stable_mosaic.version = 11 : i64} {
  func.func @_layer_norm_kernel(%arg0: i32, %arg1: memref<16x256xf32, #tpu.memory_space<vmem>>, %arg2: memref<1x256xf32, #tpu.memory_space<vmem>>, %arg3: memref<1x256xf32, #tpu.memory_space<vmem>>, %arg4: memref<16x256xf32, #tpu.memory_space<vmem>>) attributes {dimension_semantics = [#tpu.dimension_semantics<parallel>], iteration_bounds = array<i64: 1>, scalar_prefetch = 0 : i64, scratch_operands = 0 : i64, tpu.core_type = #tpu.core_type<tc>, window_params = [{transform_indices = @transform_0, window_bounds = array<i64: 16, 256>}, {pipeline_mode = #tpu.pipeline_mode<synchronous>, transform_indices = @transform_1, window_bounds = array<i64: 1, 256>}, {pipeline_mode = #tpu.pipeline_mode<synchronous>, transform_indices = @transform_2, window_bounds = array<i64: 1, 256>}, {transform_indices = @transform_3, window_bounds = array<i64: 16, 256>}]} {
    %c0 = arith.constant 0 : index
    %c0_0 = arith.constant 0 : index
    %0 = vector.load %arg1[%c0, %c0_0] : memref<16x256xf32, #tpu.memory_space<vmem>>, vector<16x256xf32>
    %cst = arith.constant dense<0.000000e+00> : vector<16xf32>
    %1 = vector.multi_reduction <add>, %0, %cst [1] : vector<16x256xf32> to vector<16xf32>
    %2 = vector.shape_cast %1 : vector<16xf32> to vector<16x1xf32>
    %cst_1 = arith.constant 2.560000e+02 : f32
    %3 = vector.broadcast %cst_1 : f32 to vector<16x1xf32>
    %4 = arith.divf %2, %3 : vector<16x1xf32>
    %5 = vector.broadcast %4 : vector<16x1xf32> to vector<16x256xf32>
    %6 = arith.subf %0, %5 : vector<16x256xf32>
    %7 = arith.mulf %6, %6 : vector<16x256xf32>
    %cst_2 = arith.constant dense<0.000000e+00> : vector<16xf32>
    %8 = vector.multi_reduction <add>, %7, %cst_2 [1] : vector<16x256xf32> to vector<16xf32>
    %9 = vector.shape_cast %8 : vector<16xf32> to vector<16x1xf32>
    %cst_3 = arith.constant 2.560000e+02 : f32
    %10 = vector.broadcast %cst_3 : f32 to vector<16x1xf32>
    %11 = arith.divf %9, %10 : vector<16x1xf32>
    %cst_4 = arith.constant 9.99999974E-6 : f32
    %12 = vector.broadcast %cst_4 : f32 to vector<16x1xf32>
    %13 = arith.addf %11, %12 : vector<16x1xf32>
    %14 = math.rsqrt %13 : vector<16x1xf32>
    %c0_5 = arith.constant 0 : index
    %c0_6 = arith.constant 0 : index
    %15 = vector.load %arg2[%c0_5, %c0_6] : memref<1x256xf32, #tpu.memory_space<vmem>>, vector<1x256xf32>
    %c0_7 = arith.constant 0 : index
    %c0_8 = arith.constant 0 : index
    %16 = vector.load %arg3[%c0_7, %c0_8] : memref<1x256xf32, #tpu.memory_space<vmem>>, vector<1x256xf32>
    %17 = vector.broadcast %14 : vector<16x1xf32> to vector<16x256xf32>
    %18 = arith.mulf %6, %17 : vector<16x256xf32>
    %19 = vector.broadcast %15 : vector<1x256xf32> to vector<16x256xf32>
    %20 = arith.mulf %18, %19 : vector<16x256xf32>
    %21 = vector.broadcast %16 : vector<1x256xf32> to vector<16x256xf32>
    %22 = arith.addf %20, %21 : vector<16x256xf32>
    %c0_9 = arith.constant 0 : index
    %c0_10 = arith.constant 0 : index
    %23 = vector.load %arg4[%c0_9, %c0_10] : memref<16x256xf32, #tpu.memory_space<vmem>>, vector<16x256xf32>
    tpu.vector_store %arg4[%c0_9, %c0_10], %22 {strides = array<i32>} : memref<16x256xf32, #tpu.memory_space<vmem>>, vector<16x256xf32>,
    return
  }
  func.func @transform_0(%arg0: i32) -> (i32, i32) {
    %c0_i32 = arith.constant 0 : i32
    %c0_i32_0 = arith.constant 0 : i32
    return %arg0, %c0_i32 : i32, i32
  }
  func.func @transform_1(%arg0: i32) -> (i32, i32) {
    %c0_i32 = arith.constant 0 : i32
    %c0_i32_0 = arith.constant 0 : i32
    %c0_i32_1 = arith.constant 0 : i32
    return %c0_i32, %c0_i32_0 : i32, i32
  }
  func.func @transform_2(%arg0: i32) -> (i32, i32) {
    %c0_i32 = arith.constant 0 : i32
    %c0_i32_0 = arith.constant 0 : i32
    %c0_i32_1 = arith.constant 0 : i32
    return %c0_i32, %c0_i32_0 : i32, i32
  }
  func.func @transform_3(%arg0: i32) -> (i32, i32) {
    %c0_i32 = arith.constant 0 : i32
    %c0_i32_0 = arith.constant 0 : i32
    return %arg0, %c0_i32 : i32, i32
  }
}

module attributes {stable_mosaic.version = 11 : i64} {
  func.func @_linear_kernel(%arg0: i32, %arg1: i32, %arg2: memref<16x256xf32, #tpu.memory_space<vmem>>, %arg3: memref<256x384xf32, #tpu.memory_space<vmem>>, %arg4: memref<1x384xf32, #tpu.memory_space<vmem>>, %arg5: memref<16x384xf32, #tpu.memory_space<vmem>>) attributes {dimension_semantics = [#tpu.dimension_semantics<parallel>, #tpu.dimension_semantics<parallel>], iteration_bounds = array<i64: 1, 2>, scalar_prefetch = 0 : i64, scratch_operands = 0 : i64, tpu.core_type = #tpu.core_type<tc>, window_params = [{transform_indices = @transform_0, window_bounds = array<i64: 16, 256>}, {transform_indices = @transform_1, window_bounds = array<i64: 256, 384>}, {transform_indices = @transform_2, window_bounds = array<i64: 1, 384>}, {transform_indices = @transform_3, window_bounds = array<i64: 16, 384>}]} {
    %c0 = arith.constant 0 : index
    %c0_0 = arith.constant 0 : index
    %0 = vector.load %arg2[%c0, %c0_0] : memref<16x256xf32, #tpu.memory_space<vmem>>, vector<16x256xf32>
    %c0_1 = arith.constant 0 : index
    %c0_2 = arith.constant 0 : index
    %1 = vector.load %arg3[%c0_1, %c0_2] : memref<256x384xf32, #tpu.memory_space<vmem>>, vector<256x384xf32>
    %cst = arith.constant dense<0.000000e+00> : vector<16x384xf32>
    %2 = tpu.matmul %0, %1, %cst {dimension_numbers = #tpu.dot_dimension_numbers<[1], [0], [0], [1], [0, 0, 1, 1], [], []>} : vector<16x256xf32>, vector<256x384xf32>, vector<16x384xf32> -> vector<16x384xf32>
    %c0_3 = arith.constant 0 : index
    %c0_4 = arith.constant 0 : index
    %3 = vector.load %arg4[%c0_3, %c0_4] : memref<1x384xf32, #tpu.memory_space<vmem>>, vector<1x384xf32>
    %4 = vector.broadcast %3 : vector<1x384xf32> to vector<16x384xf32>
    %5 = arith.addf %2, %4 : vector<16x384xf32>
    %c0_5 = arith.constant 0 : index
    %c0_6 = arith.constant 0 : index
    %6 = vector.load %arg5[%c0_5, %c0_6] : memref<16x384xf32, #tpu.memory_space<vmem>>, vector<16x384xf32>
    tpu.vector_store %arg5[%c0_5, %c0_6], %5 {strides = array<i32>} : memref<16x384xf32, #tpu.memory_space<vmem>>, vector<16x384xf32>,
    return
  }
  func.func @transform_0(%arg0: i32, %arg1: i32) -> (i32, i32) {
    %c0_i32 = arith.constant 0 : i32
    %c0_i32_0 = arith.constant 0 : i32
    return %arg0, %c0_i32 : i32, i32
  }
  func.func @transform_1(%arg0: i32, %arg1: i32) -> (i32, i32) {
    %c0_i32 = arith.constant 0 : i32
    %c0_i32_0 = arith.constant 0 : i32
    return %c0_i32, %arg1 : i32, i32
  }
  func.func @transform_2(%arg0: i32, %arg1: i32) -> (i32, i32) {
    %c0_i32 = arith.constant 0 : i32
    %c0_i32_0 = arith.constant 0 : i32
    return %c0_i32, %arg1 : i32, i32
  }
  func.func @transform_3(%arg0: i32, %arg1: i32) -> (i32, i32) {
    %c0_i32 = arith.constant 0 : i32
    return %arg0, %arg1 : i32, i32
  }
}

module attributes {stable_mosaic.version = 11 : i64} {
  func.func @_linear_kernel(%arg0: i32, %arg1: i32, %arg2: memref<16x256xf32, #tpu.memory_space<vmem>>, %arg3: memref<256x512xf32, #tpu.memory_space<vmem>>, %arg4: memref<1x512xf32, #tpu.memory_space<vmem>>, %arg5: memref<16x512xf32, #tpu.memory_space<vmem>>) attributes {dimension_semantics = [#tpu.dimension_semantics<parallel>, #tpu.dimension_semantics<parallel>], iteration_bounds = array<i64: 1, 2>, scalar_prefetch = 0 : i64, scratch_operands = 0 : i64, tpu.core_type = #tpu.core_type<tc>, window_params = [{transform_indices = @transform_0, window_bounds = array<i64: 16, 256>}, {transform_indices = @transform_1, window_bounds = array<i64: 256, 512>}, {transform_indices = @transform_2, window_bounds = array<i64: 1, 512>}, {transform_indices = @transform_3, window_bounds = array<i64: 16, 512>}]} {
    %c0 = arith.constant 0 : index
    %c0_0 = arith.constant 0 : index
    %0 = vector.load %arg2[%c0, %c0_0] : memref<16x256xf32, #tpu.memory_space<vmem>>, vector<16x256xf32>
    %c0_1 = arith.constant 0 : index
    %c0_2 = arith.constant 0 : index
    %1 = vector.load %arg3[%c0_1, %c0_2] : memref<256x512xf32, #tpu.memory_space<vmem>>, vector<256x512xf32>
    %cst = arith.constant dense<0.000000e+00> : vector<16x512xf32>
    %2 = tpu.matmul %0, %1, %cst {dimension_numbers = #tpu.dot_dimension_numbers<[1], [0], [0], [1], [0, 0, 1, 1], [], []>} : vector<16x256xf32>, vector<256x512xf32>, vector<16x512xf32> -> vector<16x512xf32>
    %c0_3 = arith.constant 0 : index
    %c0_4 = arith.constant 0 : index
    %3 = vector.load %arg4[%c0_3, %c0_4] : memref<1x512xf32, #tpu.memory_space<vmem>>, vector<1x512xf32>
    %4 = vector.broadcast %3 : vector<1x512xf32> to vector<16x512xf32>
    %5 = arith.addf %2, %4 : vector<16x512xf32>
    %c0_5 = arith.constant 0 : index
    %c0_6 = arith.constant 0 : index
    %6 = vector.load %arg5[%c0_5, %c0_6] : memref<16x512xf32, #tpu.memory_space<vmem>>, vector<16x512xf32>
    tpu.vector_store %arg5[%c0_5, %c0_6], %5 {strides = array<i32>} : memref<16x512xf32, #tpu.memory_space<vmem>>, vector<16x512xf32>,
    return
  }
  func.func @transform_0(%arg0: i32, %arg1: i32) -> (i32, i32) {
    %c0_i32 = arith.constant 0 : i32
    %c0_i32_0 = arith.constant 0 : i32
    return %arg0, %c0_i32 : i32, i32
  }
  func.func @transform_1(%arg0: i32, %arg1: i32) -> (i32, i32) {
    %c0_i32 = arith.constant 0 : i32
    %c0_i32_0 = arith.constant 0 : i32
    return %c0_i32, %arg1 : i32, i32
  }
  func.func @transform_2(%arg0: i32, %arg1: i32) -> (i32, i32) {
    %c0_i32 = arith.constant 0 : i32
    %c0_i32_0 = arith.constant 0 : i32
    return %c0_i32, %arg1 : i32, i32
  }
  func.func @transform_3(%arg0: i32, %arg1: i32) -> (i32, i32) {
    %c0_i32 = arith.constant 0 : i32
    return %arg0, %arg1 : i32, i32
  }
}

module attributes {stable_mosaic.version = 11 : i64} {
  func.func @_swiglu_kernel(%arg0: i32, %arg1: memref<16x1024xf32, #tpu.memory_space<vmem>>, %arg2: memref<16x512xf32, #tpu.memory_space<vmem>>) attributes {dimension_semantics = [#tpu.dimension_semantics<parallel>], iteration_bounds = array<i64: 1>, scalar_prefetch = 0 : i64, scratch_operands = 0 : i64, tpu.core_type = #tpu.core_type<tc>, window_params = [{transform_indices = @transform_0, window_bounds = array<i64: 16, 1024>}, {transform_indices = @transform_1, window_bounds = array<i64: 16, 512>}]} {
    %c0 = arith.constant 0 : index
    %c0_0 = arith.constant 0 : index
    %0 = vector.load %arg1[%c0, %c0_0] : memref<16x1024xf32, #tpu.memory_space<vmem>>, vector<16x1024xf32>
    %1 = vector.extract_strided_slice %0 {offsets = [0, 0], sizes = [16, 512], strides = [1, 1]} : vector<16x1024xf32> to vector<16x512xf32>
    %2 = vector.extract_strided_slice %0 {offsets = [0, 512], sizes = [16, 512], strides = [1, 1]} : vector<16x1024xf32> to vector<16x512xf32>
    %cst = arith.constant 0.000000e+00 : f32
    %3 = vector.broadcast %cst : f32 to vector<16x512xf32>
    %4 = arith.subf %3, %2 : vector<16x512xf32>
    %5 = math.exp %4 : vector<16x512xf32>
    %cst_1 = arith.constant 1.000000e+00 : f32
    %6 = vector.broadcast %cst_1 : f32 to vector<16x512xf32>
    %7 = arith.addf %6, %5 : vector<16x512xf32>
    %cst_2 = arith.constant 1.000000e+00 : f32
    %8 = vector.broadcast %cst_2 : f32 to vector<16x512xf32>
    %9 = arith.divf %8, %7 : vector<16x512xf32>
    %10 = arith.mulf %1, %2 : vector<16x512xf32>
    %11 = arith.mulf %10, %9 : vector<16x512xf32>
    %c0_3 = arith.constant 0 : index
    %c0_4 = arith.constant 0 : index
    %12 = vector.load %arg2[%c0_3, %c0_4] : memref<16x512xf32, #tpu.memory_space<vmem>>, vector<16x512xf32>
    tpu.vector_store %arg2[%c0_3, %c0_4], %11 {strides = array<i32>} : memref<16x512xf32, #tpu.memory_space<vmem>>, vector<16x512xf32>,
    return
  }
  func.func @transform_0(%arg0: i32) -> (i32, i32) {
    %c0_i32 = arith.constant 0 : i32
    %c0_i32_0 = arith.constant 0 : i32
    return %arg0, %c0_i32 : i32, i32
  }
  func.func @transform_1(%arg0: i32) -> (i32, i32) {
    %c0_i32 = arith.constant 0 : i32
    %c0_i32_0 = arith.constant 0 : i32
    return %arg0, %c0_i32 : i32, i32
  }
}

module attributes {stable_mosaic.version = 11 : i64} {
  func.func @_linear_kernel(%arg0: i32, %arg1: i32, %arg2: memref<16x512xf32, #tpu.memory_space<vmem>>, %arg3: memref<512x256xf32, #tpu.memory_space<vmem>>, %arg4: memref<1x256xf32, #tpu.memory_space<vmem>>, %arg5: memref<16x256xf32, #tpu.memory_space<vmem>>) attributes {dimension_semantics = [#tpu.dimension_semantics<parallel>, #tpu.dimension_semantics<parallel>], iteration_bounds = array<i64: 1, 1>, scalar_prefetch = 0 : i64, scratch_operands = 0 : i64, tpu.core_type = #tpu.core_type<tc>, window_params = [{transform_indices = @transform_0, window_bounds = array<i64: 16, 512>}, {transform_indices = @transform_1, window_bounds = array<i64: 512, 256>}, {transform_indices = @transform_2, window_bounds = array<i64: 1, 256>}, {transform_indices = @transform_3, window_bounds = array<i64: 16, 256>}]} {
    %c0 = arith.constant 0 : index
    %c0_0 = arith.constant 0 : index
    %0 = vector.load %arg2[%c0, %c0_0] : memref<16x512xf32, #tpu.memory_space<vmem>>, vector<16x512xf32>
    %c0_1 = arith.constant 0 : index
    %c0_2 = arith.constant 0 : index
    %1 = vector.load %arg3[%c0_1, %c0_2] : memref<512x256xf32, #tpu.memory_space<vmem>>, vector<512x256xf32>
    %cst = arith.constant dense<0.000000e+00> : vector<16x256xf32>
    %2 = tpu.matmul %0, %1, %cst {dimension_numbers = #tpu.dot_dimension_numbers<[1], [0], [0], [1], [0, 0, 1, 1], [], []>} : vector<16x512xf32>, vector<512x256xf32>, vector<16x256xf32> -> vector<16x256xf32>
    %c0_3 = arith.constant 0 : index
    %c0_4 = arith.constant 0 : index
    %3 = vector.load %arg4[%c0_3, %c0_4] : memref<1x256xf32, #tpu.memory_space<vmem>>, vector<1x256xf32>
    %4 = vector.broadcast %3 : vector<1x256xf32> to vector<16x256xf32>
    %5 = arith.addf %2, %4 : vector<16x256xf32>
    %c0_5 = arith.constant 0 : index
    %c0_6 = arith.constant 0 : index
    %6 = vector.load %arg5[%c0_5, %c0_6] : memref<16x256xf32, #tpu.memory_space<vmem>>, vector<16x256xf32>
    tpu.vector_store %arg5[%c0_5, %c0_6], %5 {strides = array<i32>} : memref<16x256xf32, #tpu.memory_space<vmem>>, vector<16x256xf32>,
    return
  }
  func.func @transform_0(%arg0: i32, %arg1: i32) -> (i32, i32) {
    %c0_i32 = arith.constant 0 : i32
    %c0_i32_0 = arith.constant 0 : i32
    return %arg0, %c0_i32 : i32, i32
  }
  func.func @transform_1(%arg0: i32, %arg1: i32) -> (i32, i32) {
    %c0_i32 = arith.constant 0 : i32
    %c0_i32_0 = arith.constant 0 : i32
    return %c0_i32, %arg1 : i32, i32
  }
  func.func @transform_2(%arg0: i32, %arg1: i32) -> (i32, i32) {
    %c0_i32 = arith.constant 0 : i32
    %c0_i32_0 = arith.constant 0 : i32
    return %c0_i32, %arg1 : i32, i32
  }
  func.func @transform_3(%arg0: i32, %arg1: i32) -> (i32, i32) {
    %c0_i32 = arith.constant 0 : i32
    return %arg0, %arg1 : i32, i32
  }
}

module attributes {stable_mosaic.version = 11 : i64} {
  func.func @_linear_kernel(%arg0: i32, %arg1: i32, %arg2: memref<16x256xf32, #tpu.memory_space<vmem>>, %arg3: memref<256x256xf32, #tpu.memory_space<vmem>>, %arg4: memref<1x256xf32, #tpu.memory_space<vmem>>, %arg5: memref<16x256xf32, #tpu.memory_space<vmem>>) attributes {dimension_semantics = [#tpu.dimension_semantics<parallel>, #tpu.dimension_semantics<parallel>], iteration_bounds = array<i64: 1, 1>, scalar_prefetch = 0 : i64, scratch_operands = 0 : i64, tpu.core_type = #tpu.core_type<tc>, window_params = [{transform_indices = @transform_0, window_bounds = array<i64: 16, 256>}, {transform_indices = @transform_1, window_bounds = array<i64: 256, 256>}, {transform_indices = @transform_2, window_bounds = array<i64: 1, 256>}, {transform_indices = @transform_3, window_bounds = array<i64: 16, 256>}]} {
    %c0 = arith.constant 0 : index
    %c0_0 = arith.constant 0 : index
    %0 = vector.load %arg2[%c0, %c0_0] : memref<16x256xf32, #tpu.memory_space<vmem>>, vector<16x256xf32>
    %c0_1 = arith.constant 0 : index
    %c0_2 = arith.constant 0 : index
    %1 = vector.load %arg3[%c0_1, %c0_2] : memref<256x256xf32, #tpu.memory_space<vmem>>, vector<256x256xf32>
    %cst = arith.constant dense<0.000000e+00> : vector<16x256xf32>
    %2 = tpu.matmul %0, %1, %cst {dimension_numbers = #tpu.dot_dimension_numbers<[1], [0], [0], [1], [0, 0, 1, 1], [], []>} : vector<16x256xf32>, vector<256x256xf32>, vector<16x256xf32> -> vector<16x256xf32>
    %c0_3 = arith.constant 0 : index
    %c0_4 = arith.constant 0 : index
    %3 = vector.load %arg4[%c0_3, %c0_4] : memref<1x256xf32, #tpu.memory_space<vmem>>, vector<1x256xf32>
    %4 = vector.broadcast %3 : vector<1x256xf32> to vector<16x256xf32>
    %5 = arith.addf %2, %4 : vector<16x256xf32>
    %c0_5 = arith.constant 0 : index
    %c0_6 = arith.constant 0 : index
    %6 = vector.load %arg5[%c0_5, %c0_6] : memref<16x256xf32, #tpu.memory_space<vmem>>, vector<16x256xf32>
    tpu.vector_store %arg5[%c0_5, %c0_6], %5 {strides = array<i32>} : memref<16x256xf32, #tpu.memory_space<vmem>>, vector<16x256xf32>,
    return
  }
  func.func @transform_0(%arg0: i32, %arg1: i32) -> (i32, i32) {
    %c0_i32 = arith.constant 0 : i32
    %c0_i32_0 = arith.constant 0 : i32
    return %arg0, %c0_i32 : i32, i32
  }
  func.func @transform_1(%arg0: i32, %arg1: i32) -> (i32, i32) {
    %c0_i32 = arith.constant 0 : i32
    %c0_i32_0 = arith.constant 0 : i32
    return %c0_i32, %arg1 : i32, i32
  }
  func.func @transform_2(%arg0: i32, %arg1: i32) -> (i32, i32) {
    %c0_i32 = arith.constant 0 : i32
    %c0_i32_0 = arith.constant 0 : i32
    return %c0_i32, %arg1 : i32, i32
  }
  func.func @transform_3(%arg0: i32, %arg1: i32) -> (i32, i32) {
    %c0_i32 = arith.constant 0 : i32
    return %arg0, %arg1 : i32, i32
  }
}

</mosaic_0001>

<llo_original>
// kernel: customgpt_forward.16
$region0: #{customgpt_forward.16}
  #allocation0 [shape = 'u32[]', space=smem, size = 0x4, offset = 0x4, fixed_abs, tag = 'smem constant byte address 0x4 - core index']
  #allocation1 [shape = 'u32[72,128]{1,0:T(1,128)}', space=vmem, size = 0x9000, scoped, tag = 'internal scratch']
  %s0 = inlined_call_operand.vmem [shape: f32[16,256], index: 0, kind: input, shape index: {}]
  %s1 = inlined_call_operand.vmem [shape: f32[1,256], index: 1, kind: input, shape index: {}]
  %s2 = inlined_call_operand.vmem [shape: f32[1,256], index: 2, kind: input, shape index: {}]
  %s3 = inlined_call_operand.vmem [shape: f32[16,256], index: 3, kind: output, shape index: {}]
  %s4 = sld [smem:[#allocation0]]
  $region22: #{customgpt_forward.16} parent=0
    _
  %s6 = ssub.s32 1, %s4
  %s7 = scalar_select 0, %s6, %s4
  // Predicated region
  $region2: #{customgpt_forward.16} parent=0 // pred_check
    _
  $region3: #{customgpt_forward.16} parent=0 // pred_check_branch
    %9 = sbr.rel (0) target = $region5
  $region4: #{customgpt_forward.16} parent=0 // pred_region
    _
  $region5: #{customgpt_forward.16} parent=0 // pred_fallthru
    _
  // Predicated region
  $region6: #{customgpt_forward.16} parent=0 // pred_check
    _
  $region7: #{customgpt_forward.16} parent=0 // pred_check_branch
    %11 = sbr.rel (0) target = $region9
  $region8: #{customgpt_forward.16} parent=0 // pred_region
    _
  $region9: #{customgpt_forward.16} parent=0 // pred_fallthru
    _
  // Predicated region
  $region10: #{customgpt_forward.16} parent=0 // pred_check
    _
  $region11: #{customgpt_forward.16} parent=0 // pred_check_branch
    %13 = sbr.rel (0) target = $region13
  $region12: #{customgpt_forward.16} parent=0 // pred_region
    _
  $region13: #{customgpt_forward.16} parent=0 // pred_fallthru
    _
  %v14 = vld [vmem:[%s0] sm:$0xff]
  %v15 = vld [vmem:[%s0 + $0x8] sm:$0xff]
  %v16 = vld [vmem:[%s0 + $0x10] sm:$0xff]
  %v17 = vld [vmem:[%s0 + $0x18] sm:$0xff]
  %v18 = vadd.f32 %v14, %v15
  %19 = vadd.xlane.f32.xlu0 %v18
  %v20 = vpop.xlane.xlu0 %19
  %v21 = vadd.f32 %v16, %v17
  %22 = vadd.xlane.f32.xlu0 %v21
  %v23 = vpop.xlane.xlu0 %22
  %v24 = vrcp.pop 256.0
  %v25 = vmul.f32 256.0, %v24
  %v26 = vsub.f32 1.0, %v25
  %v27 = vmul.f32 %v24, %v26
  %v28 = vadd.f32 %v24, %v27
  %vm29 = vweird.f32 %v24
  %v30 = vsel %vm29, %v24, %v28
  %v31 = vmul.f32 %v20, %v30
  %v32 = vmul.f32 %v23, %v30
  %v33 = vsub.f32 %v14, %v31
  %v34 = vsub.f32 %v15, %v31
  %v35 = vsub.f32 %v16, %v32
  %v36 = vsub.f32 %v17, %v32
  %v37 = vmul.f32 %v33, %v33
  %v38 = vmul.f32 %v34, %v34
  %v39 = vmul.f32 %v35, %v35
  %v40 = vmul.f32 %v36, %v36
  %v41 = vadd.f32 %v37, %v38
  %42 = vadd.xlane.f32.xlu0 %v41
  %v43 = vpop.xlane.xlu0 %42
  %v44 = vadd.f32 %v39, %v40
  %45 = vadd.xlane.f32.xlu0 %v44
  %v46 = vpop.xlane.xlu0 %45
  %v47 = vmul.f32 %v43, %v30
  %v48 = vmul.f32 %v46, %v30
  %v49 = vadd.f32 %v47, 1e-05
  %v50 = vadd.f32 %v48, 1e-05
  %v51 = vrsqrt.pop %v49
  %v52 = vmul.f32 %v51, %v49
  %v53 = vmul.f32 %v52, %v51
  %v54 = vmul.f32 0.5, %v53
  %v55 = vsub.f32 1.5, %v54
  %v56 = vmul.f32 %v51, %v55
  %vm57 = vweird.f32 %v49
  %vm58 = vweird.f32 %v51
  %vm59 = vmor %vm57, %vm58
  %v60 = vsel %vm59, %v51, %v56
  %v61 = vrsqrt.pop %v50
  %v62 = vmul.f32 %v61, %v50
  %v63 = vmul.f32 %v62, %v61
  %v64 = vmul.f32 0.5, %v63
  %v65 = vsub.f32 1.5, %v64
  %v66 = vmul.f32 %v61, %v65
  %vm67 = vweird.f32 %v50
  %vm68 = vweird.f32 %v61
  %vm69 = vmor %vm67, %vm68
  %v70 = vsel %vm69, %v61, %v66
  %v71 = vld [vmem:[%s1] sm:$0x3]
  %v72 = vld [vmem:[%s2] sm:$0x3]
  %v73 = vmul.f32 %v33, %v60
  %v74 = vmul.f32 %v34, %v60
  %v75 = vmul.f32 %v35, %v70
  %v76 = vmul.f32 %v36, %v70
  %v78 = vperm.slane %v71, 0
  %v79 = vperm.slane %v71, 1
  %v82 = vmul.f32 %v73, %v78
  %v83 = vmul.f32 %v74, %v79
  %v84 = vmul.f32 %v75, %v78
  %v85 = vmul.f32 %v76, %v79
  %v87 = vperm.slane %v72, 0
  %v88 = vperm.slane %v72, 1
  %v91 = vadd.f32 %v82, %v87
  %v92 = vadd.f32 %v83, %v88
  %v93 = vadd.f32 %v84, %v87
  %v94 = vadd.f32 %v85, %v88
  %95 = vst [vmem:[%s3] sm:$0xff] %v91
  %96 = vst [vmem:[%s3 + $0x8] sm:$0xff] %v92
  %97 = vst [vmem:[%s3 + $0x10] sm:$0xff] %v93
  %98 = vst [vmem:[%s3 + $0x18] sm:$0xff] %v94
  // Predicated region
  $region14: #{customgpt_forward.16} parent=0 // pred_check
    _
  $region15: #{customgpt_forward.16} parent=0 // pred_check_branch
    %100 = sbr.rel (0) target = $region17
  $region16: #{customgpt_forward.16} parent=0 // pred_region
    _
  $region17: #{customgpt_forward.16} parent=0 // pred_fallthru
    _
  // Predicated region
  $region18: #{customgpt_forward.16} parent=0 // pred_check
    _
  $region19: #{customgpt_forward.16} parent=0 // pred_check_branch
    %102 = sbr.rel (0) target = $region21
  $region20: #{customgpt_forward.16} parent=0 // pred_region
    _
  $region21: #{customgpt_forward.16} parent=0 // pred_fallthru
    _

// kernel: customgpt_forward.18
$region0: #{customgpt_forward.18}
  #allocation0 [shape = 'u32[]', space=smem, size = 0x4, offset = 0x4, fixed_abs, tag = 'smem constant byte address 0x4 - core index']
  #allocation1 [shape = 'u32[72,128]{1,0:T(1,128)}', space=vmem, size = 0x9000, scoped, tag = 'internal scratch']
  %s0 = inlined_call_operand.vmem [shape: f32[4,8,128], index: 0, kind: input, shape index: {}]
  %s1 = inlined_call_operand.vmem [shape: f32[4,8,128], index: 1, kind: input, shape index: {}]
  %s2 = inlined_call_operand.vmem [shape: f32[4,8,128], index: 2, kind: input, shape index: {}]
  %s3 = inlined_call_operand.vmem [shape: f32[8,128], index: 3, kind: input, shape index: {}]
  %s4 = inlined_call_operand.vmem [shape: f32[8,128], index: 4, kind: input, shape index: {}]
  %s5 = inlined_call_operand.vmem [shape: f32[4,8,128], index: 5, kind: output, shape index: {}]
  %s6 = sld [smem:[#allocation0]]
  $region30: #{customgpt_forward.18} parent=0
    _
  %s8 = ssub.s32 1, %s6
  %s9 = scalar_select 0, %s8, %s6
  // Predicated region
  $region2: #{customgpt_forward.18} parent=0 // pred_check
    _
  $region3: #{customgpt_forward.18} parent=0 // pred_check_branch
    %11 = sbr.rel (0) target = $region5
  $region4: #{customgpt_forward.18} parent=0 // pred_region
    _
  $region5: #{customgpt_forward.18} parent=0 // pred_fallthru
    _
  // Predicated region
  $region6: #{customgpt_forward.18} parent=0 // pred_check
    _
  $region7: #{customgpt_forward.18} parent=0 // pred_check_branch
    %13 = sbr.rel (0) target = $region9
  $region8: #{customgpt_forward.18} parent=0 // pred_region
    _
  $region9: #{customgpt_forward.18} parent=0 // pred_fallthru
    _
  // Predicated region
  $region10: #{customgpt_forward.18} parent=0 // pred_check
    _
  $region11: #{customgpt_forward.18} parent=0 // pred_check_branch
    %15 = sbr.rel (0) target = $region13
  $region12: #{customgpt_forward.18} parent=0 // pred_region
    _
  $region13: #{customgpt_forward.18} parent=0 // pred_fallthru
    _
  // Predicated region
  $region14: #{customgpt_forward.18} parent=0 // pred_check
    _
  $region15: #{customgpt_forward.18} parent=0 // pred_check_branch
    %17 = sbr.rel (0) target = $region17
  $region16: #{customgpt_forward.18} parent=0 // pred_region
    _
  $region17: #{customgpt_forward.18} parent=0 // pred_fallthru
    _
  // Predicated region
  $region18: #{customgpt_forward.18} parent=0 // pred_check
    _
  $region19: #{customgpt_forward.18} parent=0 // pred_check_branch
    %19 = sbr.rel (0) target = $region21
  $region20: #{customgpt_forward.18} parent=0 // pred_region
    _
  $region21: #{customgpt_forward.18} parent=0 // pred_fallthru
    _
  %v20 = vld [vmem:[%s0] sm:$0xff]
  %v21 = vld [vmem:[%s0 + $0x8] sm:$0xff]
  %v22 = vld [vmem:[%s0 + $0x10] sm:$0xff]
  %v23 = vld [vmem:[%s0 + $0x18] sm:$0xff]
  %v24 = vld [vmem:[%s1] sm:$0xff]
  %v25 = vld [vmem:[%s1 + $0x8] sm:$0xff]
  %v26 = vld [vmem:[%s1 + $0x10] sm:$0xff]
  %v27 = vld [vmem:[%s1 + $0x18] sm:$0xff]
  %v28 = vld [vmem:[%s2] sm:$0xff]
  %v29 = vld [vmem:[%s2 + $0x8] sm:$0xff]
  %v30 = vld [vmem:[%s2 + $0x10] sm:$0xff]
  %v31 = vld [vmem:[%s2 + $0x18] sm:$0xff]
  %v32 = vld [vmem:[%s3] sm:$0xff]
  %v33 = vld [vmem:[%s4] sm:$0xff]
  %v34 = vlaneseq
  %v35 = vand.u32 %v34, 127
  %vm36 = vcmp.lt.s32.totalorder %v35, 64
  %v37 = vsel %vm36, -1.0, 1.0
  %v38 = vmul.f32 %v20, %v32
  %v39 = vmul.f32 %v21, %v32
  %v40 = vmul.f32 %v22, %v32
  %v41 = vmul.f32 %v23, %v32
  %42 = vrot.lane.b32.xlu0 %v20, 64
  %v43 = vpop.permute.xlu0 %42
  %44 = vrot.lane.b32.xlu0 %v21, 64
  %v45 = vpop.permute.xlu0 %44
  %46 = vrot.lane.b32.xlu0 %v22, 64
  %v47 = vpop.permute.xlu0 %46
  %48 = vrot.lane.b32.xlu0 %v23, 64
  %v49 = vpop.permute.xlu0 %48
  %v50 = vmul.f32 %v37, %v43
  %v51 = vmul.f32 %v37, %v45
  %v52 = vmul.f32 %v37, %v47
  %v53 = vmul.f32 %v37, %v49
  %v54 = vmul.f32 %v50, %v33
  %v55 = vmul.f32 %v51, %v33
  %v56 = vmul.f32 %v52, %v33
  %v57 = vmul.f32 %v53, %v33
  %v58 = vadd.f32 %v38, %v54
  %v59 = vadd.f32 %v39, %v55
  %v60 = vadd.f32 %v40, %v56
  %v61 = vadd.f32 %v41, %v57
  %v62 = vmul.f32 %v24, %v32
  %v63 = vmul.f32 %v25, %v32
  %v64 = vmul.f32 %v26, %v32
  %v65 = vmul.f32 %v27, %v32
  %66 = vrot.lane.b32.xlu0 %v24, 64
  %v67 = vpop.permute.xlu0 %66
  %68 = vrot.lane.b32.xlu0 %v25, 64
  %v69 = vpop.permute.xlu0 %68
  %70 = vrot.lane.b32.xlu0 %v26, 64
  %v71 = vpop.permute.xlu0 %70
  %72 = vrot.lane.b32.xlu0 %v27, 64
  %v73 = vpop.permute.xlu0 %72
  %v74 = vmul.f32 %v37, %v67
  %v75 = vmul.f32 %v37, %v69
  %v76 = vmul.f32 %v37, %v71
  %v77 = vmul.f32 %v37, %v73
  %v78 = vmul.f32 %v74, %v33
  %v79 = vmul.f32 %v75, %v33
  %v80 = vmul.f32 %v76, %v33
  %v81 = vmul.f32 %v77, %v33
  %v82 = vadd.f32 %v62, %v78
  %v83 = vadd.f32 %v63, %v79
  %v84 = vadd.f32 %v64, %v80
  %v85 = vadd.f32 %v65, %v81
  %86 = vmatpush.xpose.msra.mxu0 0.0
  %87 = vmatpush.xpose.msra.mxu0 0.0
  %88 = vmatpush.xpose.msra.mxu0 0.0
  %89 = vmatpush.xpose.msra.mxu0 0.0
  %90 = vmatpush.xpose.msra.mxu0 0.0
  %91 = vmatpush.xpose.msra.mxu0 0.0
  %92 = vmatpush.xpose.msra.mxu0 0.0
  %93 = vmatpush.xpose.msra.mxu0 0.0
  %94 = vmatpush.xpose.msra.mxu0 0.0
  %95 = vmatpush.xpose.msra.mxu0 0.0
  %96 = vmatpush.xpose.msra.mxu0 0.0
  %97 = vmatpush.xpose.msra.mxu0 0.0
  %98 = vmatpush.xpose.msra.mxu0 0.0
  %99 = vmatpush.xpose.msra.mxu0 0.0
  %100 = vmatpush.xpose.msra.mxu0 0.0
  %101 = vmatpush.xpose.msra.mxu0 %v82
  %102 = vmatmul.f32.gmra.mxu0 %v58
  %v103 = vpop.f32.mrf.mxu0
  %v104 = vadd.f32 0.0, %v103
  %105 = vdwg.mxu0
  %106 = vmatpush.xpose.msra.mxu0 0.0
  %107 = vmatpush.xpose.msra.mxu0 0.0
  %108 = vmatpush.xpose.msra.mxu0 0.0
  %109 = vmatpush.xpose.msra.mxu0 0.0
  %110 = vmatpush.xpose.msra.mxu0 0.0
  %111 = vmatpush.xpose.msra.mxu0 0.0
  %112 = vmatpush.xpose.msra.mxu0 0.0
  %113 = vmatpush.xpose.msra.mxu0 0.0
  %114 = vmatpush.xpose.msra.mxu0 0.0
  %115 = vmatpush.xpose.msra.mxu0 0.0
  %116 = vmatpush.xpose.msra.mxu0 0.0
  %117 = vmatpush.xpose.msra.mxu0 0.0
  %118 = vmatpush.xpose.msra.mxu0 0.0
  %119 = vmatpush.xpose.msra.mxu0 0.0
  %120 = vmatpush.xpose.msra.mxu0 0.0
  %121 = vmatpush.xpose.msra.mxu0 %v83
  %122 = vmatmul.f32.gmra.mxu0 %v59
  %v123 = vpop.f32.mrf.mxu0
  %v124 = vadd.f32 0.0, %v123
  %125 = vdwg.mxu0
  %126 = vmatpush.xpose.msra.mxu0 0.0
  %127 = vmatpush.xpose.msra.mxu0 0.0
  %128 = vmatpush.xpose.msra.mxu0 0.0
  %129 = vmatpush.xpose.msra.mxu0 0.0
  %130 = vmatpush.xpose.msra.mxu0 0.0
  %131 = vmatpush.xpose.msra.mxu0 0.0
  %132 = vmatpush.xpose.msra.mxu0 0.0
  %133 = vmatpush.xpose.msra.mxu0 0.0
  %134 = vmatpush.xpose.msra.mxu0 0.0
  %135 = vmatpush.xpose.msra.mxu0 0.0
  %136 = vmatpush.xpose.msra.mxu0 0.0
  %137 = vmatpush.xpose.msra.mxu0 0.0
  %138 = vmatpush.xpose.msra.mxu0 0.0
  %139 = vmatpush.xpose.msra.mxu0 0.0
  %140 = vmatpush.xpose.msra.mxu0 0.0
  %141 = vmatpush.xpose.msra.mxu0 %v84
  %142 = vmatmul.f32.gmra.mxu0 %v60
  %v143 = vpop.f32.mrf.mxu0
  %v144 = vadd.f32 0.0, %v143
  %145 = vdwg.mxu0
  %146 = vmatpush.xpose.msra.mxu0 0.0
  %147 = vmatpush.xpose.msra.mxu0 0.0
  %148 = vmatpush.xpose.msra.mxu0 0.0
  %149 = vmatpush.xpose.msra.mxu0 0.0
  %150 = vmatpush.xpose.msra.mxu0 0.0
  %151 = vmatpush.xpose.msra.mxu0 0.0
  %152 = vmatpush.xpose.msra.mxu0 0.0
  %153 = vmatpush.xpose.msra.mxu0 0.0
  %154 = vmatpush.xpose.msra.mxu0 0.0
  %155 = vmatpush.xpose.msra.mxu0 0.0
  %156 = vmatpush.xpose.msra.mxu0 0.0
  %157 = vmatpush.xpose.msra.mxu0 0.0
  %158 = vmatpush.xpose.msra.mxu0 0.0
  %159 = vmatpush.xpose.msra.mxu0 0.0
  %160 = vmatpush.xpose.msra.mxu0 0.0
  %161 = vmatpush.xpose.msra.mxu0 %v85
  %162 = vmatmul.f32.gmra.mxu0 %v61
  %v163 = vpop.f32.mrf.mxu0
  %v164 = vadd.f32 0.0, %v163
  %165 = vdwg.mxu0
  %v166 = vmul.f32 %v104, 0.088388346
  %v167 = vmul.f32 %v124, 0.088388346
  %v168 = vmul.f32 %v144, 0.088388346
  %v169 = vmul.f32 %v164, 0.088388346
  %v170 = vlaneseq
  %v171 = vshrl.u32 %v170, 7
  %vm172 = vcmp.le.s32.totalorder %v35, %v171
  %v173 = vsel %vm172, %v166, -1e+30
  %v174 = vsel %vm172, %v167, -1e+30
  %v175 = vsel %vm172, %v168, -1e+30
  %v176 = vsel %vm172, %v169, -1e+30
  %vm177 = vcmask 64512
  %v178 = vsel %vm177, %v173, -inf
  %179 = vmax.xlane.f32.xlu0 %v178
  %v180 = vpop.xlane.xlu0 %179
  %v181 = vsel %vm177, %v174, -inf
  %182 = vmax.xlane.f32.xlu0 %v181
  %v183 = vpop.xlane.xlu0 %182
  %v184 = vsel %vm177, %v175, -inf
  %185 = vmax.xlane.f32.xlu0 %v184
  %v186 = vpop.xlane.xlu0 %185
  %v187 = vsel %vm177, %v176, -inf
  %188 = vmax.xlane.f32.xlu0 %v187
  %v189 = vpop.xlane.xlu0 %188
  %v190 = vsub.f32 %v173, %v180
  %v191 = vsub.f32 %v174, %v183
  %v192 = vsub.f32 %v175, %v186
  %v193 = vsub.f32 %v176, %v189
  %v194 = vmul.f32 %v190, 1.442695
  %v195 = vpow.pop %v194
  %v196 = vmul.f32 %v191, 1.442695
  %v197 = vpow.pop %v196
  %v198 = vmul.f32 %v192, 1.442695
  %v199 = vpow.pop %v198
  %v200 = vmul.f32 %v193, 1.442695
  %v201 = vpow.pop %v200
  %v202 = vsel %vm177, %v195, 0.0
  %203 = vadd.xlane.f32.xlu0 %v202
  %v204 = vpop.xlane.xlu0 %203
  %v205 = vsel %vm177, %v197, 0.0
  %206 = vadd.xlane.f32.xlu0 %v205
  %v207 = vpop.xlane.xlu0 %206
  %v208 = vsel %vm177, %v199, 0.0
  %209 = vadd.xlane.f32.xlu0 %v208
  %v210 = vpop.xlane.xlu0 %209
  %v211 = vsel %vm177, %v201, 0.0
  %212 = vadd.xlane.f32.xlu0 %v211
  %v213 = vpop.xlane.xlu0 %212
  %v215 = vsel %vm177, %v195, 0
  %217 = vmatpush.msra.mxu0 0.0
  %218 = vmatpush.msra.mxu0 0.0
  %219 = vmatpush.msra.mxu0 0.0
  %220 = vmatpush.msra.mxu0 0.0
  %221 = vmatpush.msra.mxu0 0.0
  %222 = vmatpush.msra.mxu0 0.0
  %223 = vmatpush.msra.mxu0 0.0
  %224 = vmatpush.msra.mxu0 0.0
  %225 = vmatpush.msra.mxu0 0.0
  %226 = vmatpush.msra.mxu0 0.0
  %227 = vmatpush.msra.mxu0 0.0
  %228 = vmatpush.msra.mxu0 0.0
  %229 = vmatpush.msra.mxu0 0.0
  %230 = vmatpush.msra.mxu0 0.0
  %231 = vmatpush.msra.mxu0 0.0
  %232 = vmatpush.msra.mxu0 %v28
  %233 = vmatmul.f32.gmra.mxu0 %v215
  %v234 = vpop.f32.mrf.mxu0
  %v235 = vadd.f32 0.0, %v234
  %236 = vdwg.mxu0
  %v238 = vsel %vm177, %v197, 0
  %240 = vmatpush.msra.mxu0 0.0
  %241 = vmatpush.msra.mxu0 0.0
  %242 = vmatpush.msra.mxu0 0.0
  %243 = vmatpush.msra.mxu0 0.0
  %244 = vmatpush.msra.mxu0 0.0
  %245 = vmatpush.msra.mxu0 0.0
  %246 = vmatpush.msra.mxu0 0.0
  %247 = vmatpush.msra.mxu0 0.0
  %248 = vmatpush.msra.mxu0 0.0
  %249 = vmatpush.msra.mxu0 0.0
  %250 = vmatpush.msra.mxu0 0.0
  %251 = vmatpush.msra.mxu0 0.0
  %252 = vmatpush.msra.mxu0 0.0
  %253 = vmatpush.msra.mxu0 0.0
  %254 = vmatpush.msra.mxu0 0.0
  %255 = vmatpush.msra.mxu0 %v29
  %256 = vmatmul.f32.gmra.mxu0 %v238
  %v257 = vpop.f32.mrf.mxu0
  %v258 = vadd.f32 0.0, %v257
  %259 = vdwg.mxu0
  %v261 = vsel %vm177, %v199, 0
  %263 = vmatpush.msra.mxu0 0.0
  %264 = vmatpush.msra.mxu0 0.0
  %265 = vmatpush.msra.mxu0 0.0
  %266 = vmatpush.msra.mxu0 0.0
  %267 = vmatpush.msra.mxu0 0.0
  %268 = vmatpush.msra.mxu0 0.0
  %269 = vmatpush.msra.mxu0 0.0
  %270 = vmatpush.msra.mxu0 0.0
  %271 = vmatpush.msra.mxu0 0.0
  %272 = vmatpush.msra.mxu0 0.0
  %273 = vmatpush.msra.mxu0 0.0
  %274 = vmatpush.msra.mxu0 0.0
  %275 = vmatpush.msra.mxu0 0.0
  %276 = vmatpush.msra.mxu0 0.0
  %277 = vmatpush.msra.mxu0 0.0
  %278 = vmatpush.msra.mxu0 %v30
  %279 = vmatmul.f32.gmra.mxu0 %v261
  %v280 = vpop.f32.mrf.mxu0
  %v281 = vadd.f32 0.0, %v280
  %282 = vdwg.mxu0
  %v284 = vsel %vm177, %v201, 0
  %286 = vmatpush.msra.mxu0 0.0
  %287 = vmatpush.msra.mxu0 0.0
  %288 = vmatpush.msra.mxu0 0.0
  %289 = vmatpush.msra.mxu0 0.0
  %290 = vmatpush.msra.mxu0 0.0
  %291 = vmatpush.msra.mxu0 0.0
  %292 = vmatpush.msra.mxu0 0.0
  %293 = vmatpush.msra.mxu0 0.0
  %294 = vmatpush.msra.mxu0 0.0
  %295 = vmatpush.msra.mxu0 0.0
  %296 = vmatpush.msra.mxu0 0.0
  %297 = vmatpush.msra.mxu0 0.0
  %298 = vmatpush.msra.mxu0 0.0
  %299 = vmatpush.msra.mxu0 0.0
  %300 = vmatpush.msra.mxu0 0.0
  %301 = vmatpush.msra.mxu0 %v31
  %302 = vmatmul.f32.gmra.mxu0 %v284
  %v303 = vpop.f32.mrf.mxu0
  %v304 = vadd.f32 0.0, %v303
  %305 = vdwg.mxu0
  %v306 = vrcp.pop %v204
  %v307 = vmul.f32 %v204, %v306
  %v308 = vsub.f32 1.0, %v307
  %v309 = vmul.f32 %v306, %v308
  %v310 = vadd.f32 %v306, %v309
  %vm311 = vweird.f32 %v204
  %vm312 = vweird.f32 %v306
  %vm313 = vmor %vm311, %vm312
  %v314 = vsel %vm313, %v306, %v310
  %v315 = vand.u32 2147483647, %v204
  %vm316 = vcmp.eq.f32.partialorder %v315, 8.507059e+37
  %v317 = vand.u32 %v204, 2147483648
  %v318 = vor.u32 1.1754944e-38, %v317
  %v319 = vsel %vm316, %v318, %v314
  %v320 = vrcp.pop %v207
  %v321 = vmul.f32 %v207, %v320
  %v322 = vsub.f32 1.0, %v321
  %v323 = vmul.f32 %v320, %v322
  %v324 = vadd.f32 %v320, %v323
  %vm325 = vweird.f32 %v207
  %vm326 = vweird.f32 %v320
  %vm327 = vmor %vm325, %vm326
  %v328 = vsel %vm327, %v320, %v324
  %v329 = vand.u32 2147483647, %v207
  %vm330 = vcmp.eq.f32.partialorder %v329, 8.507059e+37
  %v331 = vand.u32 %v207, 2147483648
  %v332 = vor.u32 1.1754944e-38, %v331
  %v333 = vsel %vm330, %v332, %v328
  %v334 = vrcp.pop %v210
  %v335 = vmul.f32 %v210, %v334
  %v336 = vsub.f32 1.0, %v335
  %v337 = vmul.f32 %v334, %v336
  %v338 = vadd.f32 %v334, %v337
  %vm339 = vweird.f32 %v210
  %vm340 = vweird.f32 %v334
  %vm341 = vmor %vm339, %vm340
  %v342 = vsel %vm341, %v334, %v338
  %v343 = vand.u32 2147483647, %v210
  %vm344 = vcmp.eq.f32.partialorder %v343, 8.507059e+37
  %v345 = vand.u32 %v210, 2147483648
  %v346 = vor.u32 1.1754944e-38, %v345
  %v347 = vsel %vm344, %v346, %v342
  %v348 = vrcp.pop %v213
  %v349 = vmul.f32 %v213, %v348
  %v350 = vsub.f32 1.0, %v349
  %v351 = vmul.f32 %v348, %v350
  %v352 = vadd.f32 %v348, %v351
  %vm353 = vweird.f32 %v213
  %vm354 = vweird.f32 %v348
  %vm355 = vmor %vm353, %vm354
  %v356 = vsel %vm355, %v348, %v352
  %v357 = vand.u32 2147483647, %v213
  %vm358 = vcmp.eq.f32.partialorder %v357, 8.507059e+37
  %v359 = vand.u32 %v213, 2147483648
  %v360 = vor.u32 1.1754944e-38, %v359
  %v361 = vsel %vm358, %v360, %v356
  %v362 = vmul.f32 %v235, %v319
  %v363 = vmul.f32 %v258, %v333
  %v364 = vmul.f32 %v281, %v347
  %v365 = vmul.f32 %v304, %v361
  %366 = vst [vmem:[%s5] sm:$0xff] %v362
  %367 = vst [vmem:[%s5 + $0x8] sm:$0xff] %v363
  %368 = vst [vmem:[%s5 + $0x10] sm:$0xff] %v364
  %369 = vst [vmem:[%s5 + $0x18] sm:$0xff] %v365
  // Predicated region
  $region22: #{customgpt_forward.18} parent=0 // pred_check
    _
  $region23: #{customgpt_forward.18} parent=0 // pred_check_branch
    %371 = sbr.rel (0) target = $region25
  $region24: #{customgpt_forward.18} parent=0 // pred_region
    _
  $region25: #{customgpt_forward.18} parent=0 // pred_fallthru
    _
  // Predicated region
  $region26: #{customgpt_forward.18} parent=0 // pred_check
    _
  $region27: #{customgpt_forward.18} parent=0 // pred_check_branch
    %373 = sbr.rel (0) target = $region29
  $region28: #{customgpt_forward.18} parent=0 // pred_region
    _
  $region29: #{customgpt_forward.18} parent=0 // pred_fallthru
    _

// kernel: customgpt_forward.17
$region0: #{customgpt_forward.17}
  #allocation0 [shape = 'u32[]', space=smem, size = 0x4, offset = 0x4, fixed_abs, tag = 'smem constant byte address 0x4 - core index']
  #allocation1 [shape = 'u32[72,128]{1,0:T(1,128)}', space=vmem, size = 0x9000, scoped, tag = 'internal scratch']
  %s0 = inlined_call_operand.vmem [shape: f32[16,256], index: 0, kind: input, shape index: {}]
  %s1 = inlined_call_operand.hbm [shape: f32[256,768], index: 1, kind: input, shape index: {}]
  %s2 = inlined_call_operand.vmem [shape: f32[1,768], index: 2, kind: input, shape index: {}]
  %s3 = inlined_call_operand.vmem [shape: f32[16,768], index: 3, kind: output, shape index: {}]
  %s4 = sld [smem:[#allocation0]]
  $region68: #{customgpt_forward.17} parent=0
    _
  %s6 = ssub.s32 1, %s4
  %s7 = scalar_select 0, %s6, %s4
  $region1: #{customgpt_forward.17} parent=0
    #allocation2 [shape = 'u8[786432]{0}', space=vmem, size = 0xc0000, scoped, tag = 'input window, operand 1']
    #allocation3 [shape = 's32[2]{0}', space=sflag, size = 0x8, scoped, tag = 'scoped memory for customgpt_forward.17']
    #allocation4 [shape = 'u8[49152]{0}', space=vmem, size = 0xc000, scoped, tag = 'output window, operand 0']
    %8 = vsyncpa [#allocation3], 0
    %s9 = scalar_lea.sflag [#allocation3], 1
    %10 = vsyncpa %s9, 0
    loop: start=0, step=1, limit=4
    $region2: #{customgpt_forward.17} parent=1 // loop_pre_header
      _
    $region3: #{customgpt_forward.17} parent=1 // loop_header
      %s12 = sphi 0, %s16
      %p13 = scmp.ge.s32.totalorder %s12, 4
      %s19 = sphi 0, %s31
      %s20 = sphi 0, %s27
      %s21 = sphi 0, %s19
      %s22 = sphi 0, %s20
      %s23 = sphi 0, %s21
      %s24 = sphi 0, %s22
      %s34 = sphi 0, %s36
      %s37 = sphi 0, %s34
      %s38 = sphi 0, %s37
      %s54 = sphi 0, %s38
      %s60 = sphi 0, %s62
      %s63 = sphi 0, %s60
      %s64 = sphi 0, %s63
      %s80 = sphi 0, %s64
      %s86 = sphi 0, %s88
      %s89 = sphi 0, %s86
      %s90 = sphi 0, %s89
      %s106 = sphi 0, %s90
      %s114 = sphi 0, %s116
      %s117 = sphi 0, %s114
      %s118 = sphi 0, %s117
      %s134 = sphi 0, %s118
    $region4: #{customgpt_forward.17} parent=1 // loop_header_branch
      %15 = sbr.rel (%p13) target = $region8
    $region5: #{customgpt_forward.17} parent=1 // loop_body
      %s17 = ssub.s32 %s12, 1
      %s18 = ssub.s32 %s12, 2
      %s25 = sadd.s32 1, %s20
      %p26 = scmp.ge.s32.totalorder %s25, 2
      %s27 = scalar_select %p26, 0, %s25
      %s28 = sadd.s32 1, %s19
      %s29 = scalar_select %p26, %s28, %s19
      %p30 = scmp.ge.s32.totalorder %s29, 1
      %s31 = scalar_select %p30, 0, %s29
      %s32 = ssub.s32 %s19, %s31
      %p33 = scmp.eq.s32.totalorder %s32, 0
      %s35 = sadd.s32 %s34, 1
      %s36 = scalar_select %p33, %s34, %s35
      %p39 = pneg %p33
      %p40 = scmp.eq.s32.totalorder %s12, 1
      %p41 = por %p39, %p40
      %p42 = scmp.ne.s32.totalorder %s34, %s37
      %p43 = scmp.eq.s32.totalorder %s12, 0
      %p44 = por %p42, %p43
      %p45 = scmp.ne.s32.totalorder %s34, %s37
      %p46 = scmp.eq.s32.totalorder %s17, 1
      %p47 = por %p45, %p46
      %p48 = scmp.ne.s32.totalorder %s37, %s38
      %p49 = scmp.eq.s32.totalorder %s17, 0
      %p50 = por %p48, %p49
      %p51 = scmp.ne.s32.totalorder %s37, %s38
      %p52 = scmp.eq.s32.totalorder %s18, 1
      %p53 = por %p51, %p52
      %p55 = scmp.ne.s32.totalorder %s38, %s54
      %p56 = scmp.eq.s32.totalorder %s18, 0
      %p57 = por %p55, %p56
      %s58 = ssub.s32 %s20, %s27
      %p59 = scmp.eq.s32.totalorder %s58, 0
      %s61 = sadd.s32 %s60, 1
      %s62 = scalar_select %p59, %s60, %s61
      %p65 = pneg %p59
      %p66 = scmp.eq.s32.totalorder %s12, 1
      %p67 = por %p65, %p66
      %p68 = scmp.ne.s32.totalorder %s60, %s63
      %p69 = scmp.eq.s32.totalorder %s12, 0
      %p70 = por %p68, %p69
      %p71 = scmp.ne.s32.totalorder %s60, %s63
      %p72 = scmp.eq.s32.totalorder %s17, 1
      %p73 = por %p71, %p72
      %p74 = scmp.ne.s32.totalorder %s63, %s64
      %p75 = scmp.eq.s32.totalorder %s17, 0
      %p76 = por %p74, %p75
      %p77 = scmp.ne.s32.totalorder %s63, %s64
      %p78 = scmp.eq.s32.totalorder %s18, 1
      %p79 = por %p77, %p78
      %p81 = scmp.ne.s32.totalorder %s64, %s80
      %p82 = scmp.eq.s32.totalorder %s18, 0
      %p83 = por %p81, %p82
      %s84 = ssub.s32 %s20, %s27
      %p85 = scmp.eq.s32.totalorder %s84, 0
      %s87 = sadd.s32 %s86, 1
      %s88 = scalar_select %p85, %s86, %s87
      %p91 = pneg %p85
      %p92 = scmp.eq.s32.totalorder %s12, 1
      %p93 = por %p91, %p92
      %p94 = scmp.ne.s32.totalorder %s86, %s89
      %p95 = scmp.eq.s32.totalorder %s12, 0
      %p96 = por %p94, %p95
      %p97 = scmp.ne.s32.totalorder %s86, %s89
      %p98 = scmp.eq.s32.totalorder %s17, 1
      %p99 = por %p97, %p98
      %p100 = scmp.ne.s32.totalorder %s89, %s90
      %p101 = scmp.eq.s32.totalorder %s17, 0
      %p102 = por %p100, %p101
      %p103 = scmp.ne.s32.totalorder %s89, %s90
      %p104 = scmp.eq.s32.totalorder %s18, 1
      %p105 = por %p103, %p104
      %p107 = scmp.ne.s32.totalorder %s90, %s106
      %p108 = scmp.eq.s32.totalorder %s18, 0
      %p109 = por %p107, %p108
      %s110 = ssub.s32 %s19, %s31
      %s111 = ssub.s32 %s20, %s27
      %s112 = sor.u32 %s110, %s111
      %p113 = scmp.eq.s32.totalorder %s112, 0
      %s115 = sadd.s32 %s114, 1
      %s116 = scalar_select %p113, %s114, %s115
      %p119 = pneg %p113
      %p120 = scmp.eq.s32.totalorder %s12, 1
      %p121 = por %p119, %p120
      %p122 = scmp.ne.s32.totalorder %s114, %s117
      %p123 = scmp.eq.s32.totalorder %s12, 0
      %p124 = por %p122, %p123
      %p125 = scmp.ne.s32.totalorder %s114, %s117
      %p126 = scmp.eq.s32.totalorder %s17, 1
      %p127 = por %p125, %p126
      %p128 = scmp.ne.s32.totalorder %s117, %s118
      %p129 = scmp.eq.s32.totalorder %s17, 0
      %p130 = por %p128, %p129
      %p131 = scmp.ne.s32.totalorder %s117, %s118
      %p132 = scmp.eq.s32.totalorder %s18, 1
      %p133 = por %p131, %p132
      %p135 = scmp.ne.s32.totalorder %s118, %s134
      %p136 = scmp.eq.s32.totalorder %s18, 0
      %p137 = por %p135, %p136
      %p138 = scmp.le.s32.totalorder 1, %s12
      %p139 = scmp.lt.s32.totalorder %s12, 3
      %p140 = pnand %p138, %p139
      %p141 = pneg %p140
      // Predicated region
      $region9: #{customgpt_forward.17} parent=5 // pred_check
        _
      $region10: #{customgpt_forward.17} parent=5 // pred_check_branch
        %143 = sbr.rel (%p140) target = $region12
      $region11: #{customgpt_forward.17} parent=5 // pred_region
        %s144 = ssub.s32 %s12, 1
        // Predicated region
        $region13: #{customgpt_forward.17} parent=11 // pred_check
          %p145 = pneg %p50
        $region14: #{customgpt_forward.17} parent=11 // pred_check_branch
          %147 = sbr.rel (%p145) target = $region16
        $region15: #{customgpt_forward.17} parent=11 // pred_region
          %s148 = smul.u32 2, %s21
          %p149 = scmp.lt.s32.totalorder %s148, 1
          %s150 = scalar_select %p149, %s148, 1
          %s151 = smul.addr %s150, 2
          %s152 = smul.addr %s151, 8
          %s153 = scalar_lea.vmem %s0, %s152
          %s154 = smul.u32 2, %s21
        $region16: #{customgpt_forward.17} parent=11 // pred_fallthru
          _
      $region12: #{customgpt_forward.17} parent=5 // pred_fallthru
        _
      %p155 = scmp.lt.s32.totalorder %s12, 2
      // Predicated region
      $region17: #{customgpt_forward.17} parent=5 // pred_check
        %p156 = pneg %p155
      $region18: #{customgpt_forward.17} parent=5 // pred_check_branch
        %158 = sbr.rel (%p156) target = $region20
      $region19: #{customgpt_forward.17} parent=5 // pred_region
        // Predicated region
        $region21: #{customgpt_forward.17} parent=19 // pred_check
          %p159 = pneg %p70
        $region22: #{customgpt_forward.17} parent=19 // pred_check_branch
          %161 = sbr.rel (%p159) target = $region24
        $region23: #{customgpt_forward.17} parent=19 // pred_region
          %s162 = sand.u32 %s60, 1
          %s163 = scalar_lea.sflag [#allocation3], %s162
          %s164 = sand.u32 %s60, 1
          %s165 = smul.addr %s164, 768
          %s166 = scalar_lea.vmem [#allocation2], %s165
          %s167 = smul.u32 3, %s20
          %169 = vsyncadd %s163, 0
          %s170 = smul.addr %s167, 8
          %s171 = scalar_lea.hbm %s1, %s170
          %s172 = sshll.u32 %s171, 4
          %s173 = int_to_ptr.hbm [resolvable:$true] %s172
          %s174 = sshll.u32 %s166, 4
          %s175 = int_to_ptr.vmem [resolvable:$true] %s174
          %180 = dma.hbm_to_vmem [thread:$0]  %s173, 12288, %s175, %s163, 768, 384, 24
        $region24: #{customgpt_forward.17} parent=19 // pred_fallthru
          _
        // Predicated region
        $region25: #{customgpt_forward.17} parent=19 // pred_check
          %p181 = pneg %p96
        $region26: #{customgpt_forward.17} parent=19 // pred_check_branch
          %183 = sbr.rel (%p181) target = $region28
        $region27: #{customgpt_forward.17} parent=19 // pred_region
          %s184 = smul.u32 3, %s20
          %p185 = scmp.lt.s32.totalorder %s184, 5
          %s186 = scalar_select %p185, %s184, 5
          %s187 = scalar_lea.vmem %s2, %s186
          %s188 = smul.u32 3, %s20
        $region28: #{customgpt_forward.17} parent=19 // pred_fallthru
          _
      $region20: #{customgpt_forward.17} parent=5 // pred_fallthru
        _
      %p189 = scmp.le.s32.totalorder 1, %s12
      %p190 = scmp.lt.s32.totalorder %s12, 3
      %p191 = pnand %p189, %p190
      %p192 = pneg %p191
      // Predicated region
      $region29: #{customgpt_forward.17} parent=5 // pred_check
        _
      $region30: #{customgpt_forward.17} parent=5 // pred_check_branch
        %194 = sbr.rel (%p191) target = $region32
      $region31: #{customgpt_forward.17} parent=5 // pred_region
        %s195 = ssub.s32 %s12, 1
        %s196 = sand.u32 %s63, 1
        %s197 = scalar_lea.sflag [#allocation3], %s196
        %s198 = sand.u32 %s63, 1
        %s199 = smul.addr %s198, 768
        %s200 = scalar_lea.vmem [#allocation2], %s199
        // Predicated region
        $region33: #{customgpt_forward.17} parent=31 // pred_check
          %p201 = pneg %p76
        $region34: #{customgpt_forward.17} parent=31 // pred_check_branch
          %203 = sbr.rel (%p201) target = $region36
        $region35: #{customgpt_forward.17} parent=31 // pred_region
          %205 = dma.done %s197, 12288
        $region36: #{customgpt_forward.17} parent=31 // pred_fallthru
          _
        %s206 = smul.u32 2, %s21
        %p207 = scmp.lt.s32.totalorder %s206, 1
        %s208 = scalar_select %p207, %s206, 1
        %s209 = smul.addr %s208, 2
        %s210 = smul.addr %s209, 8
        %s211 = scalar_lea.vmem %s0, %s210
        %p212 = pneg %p50
        %p213 = pneg %p47
        %s214 = sand.u32 %s63, 1
        %s215 = scalar_lea.sflag [#allocation3], %s214
        %s216 = sand.u32 %s63, 1
        %s217 = smul.addr %s216, 768
        %s218 = scalar_lea.vmem [#allocation2], %s217
        %p219 = pneg %p76
        %p220 = pneg %p73
        %s221 = smul.u32 3, %s22
        %p222 = scmp.lt.s32.totalorder %s221, 5
        %s223 = scalar_select %p222, %s221, 5
        %s224 = scalar_lea.vmem %s2, %s223
        %p225 = pneg %p102
        %p226 = pneg %p99
        %p227 = pneg %p130
        %p228 = pneg %p127
        %s229 = sand.u32 %s117, 1
        %s230 = sand.u32 %s117, 1
        %s231 = smul.addr %s230, 48
        %s232 = scalar_lea.vmem [#allocation4], %s231
        %s233 = smul.u32 2, %s21
        %p234 = scmp.lt.s32.totalorder %s233, 1
        %s235 = scalar_select %p234, %s233, 1
        %s236 = smul.addr %s235, 2
        %s237 = smul.addr %s236, 8
        %s238 = scalar_lea.vmem %s0, %s237
        %s239 = smul.u32 2, %s21
        %s240 = smul.u32 3, %s22
        %s241 = smul.u32 3, %s22
        %p242 = scmp.lt.s32.totalorder %s241, 5
        %s243 = scalar_select %p242, %s241, 5
        %s244 = scalar_lea.vmem %s2, %s243
        %s245 = smul.u32 3, %s22
        %s246 = smul.u32 2, %s21
        %s247 = smul.u32 3, %s22
        %v248 = vld [vmem:[%s238] sm:$0xff]
        %v249 = vld [vmem:[%s238 + $0x8] sm:$0xff]
        %v250 = vld [vmem:[%s238 + $0x10] sm:$0xff]
        %v251 = vld [vmem:[%s238 + $0x18] sm:$0xff]
        %v252 = vld [vmem:[%s200] sm:$0xff]
        %v253 = vld [vmem:[%s200 + $0x8] sm:$0xff]
        %v254 = vld [vmem:[%s200 + $0x10] sm:$0xff]
        %v255 = vld [vmem:[%s200 + $0x18] sm:$0xff]
        %v256 = vld [vmem:[%s200 + $0x20] sm:$0xff]
        %v257 = vld [vmem:[%s200 + $0x28] sm:$0xff]
        %v258 = vld [vmem:[%s200 + $0x30] sm:$0xff]
        %v259 = vld [vmem:[%s200 + $0x38] sm:$0xff]
        %v260 = vld [vmem:[%s200 + $0x40] sm:$0xff]
        %v261 = vld [vmem:[%s200 + $0x48] sm:$0xff]
        %v262 = vld [vmem:[%s200 + $0x50] sm:$0xff]
        %v263 = vld [vmem:[%s200 + $0x58] sm:$0xff]
        %v264 = vld [vmem:[%s200 + $0x60] sm:$0xff]
        %v265 = vld [vmem:[%s200 + $0x68] sm:$0xff]
        %v266 = vld [vmem:[%s200 + $0x70] sm:$0xff]
        %v267 = vld [vmem:[%s200 + $0x78] sm:$0xff]
        %v268 = vld [vmem:[%s200 + $0x80] sm:$0xff]
        %v269 = vld [vmem:[%s200 + $0x88] sm:$0xff]
        %v270 = vld [vmem:[%s200 + $0x90] sm:$0xff]
        %v271 = vld [vmem:[%s200 + $0x98] sm:$0xff]
        %v272 = vld [vmem:[%s200 + $0xa0] sm:$0xff]
        %v273 = vld [vmem:[%s200 + $0xa8] sm:$0xff]
        %v274 = vld [vmem:[%s200 + $0xb0] sm:$0xff]
        %v275 = vld [vmem:[%s200 + $0xb8] sm:$0xff]
        %v276 = vld [vmem:[%s200 + $0xc0] sm:$0xff]
        %v277 = vld [vmem:[%s200 + $0xc8] sm:$0xff]
        %v278 = vld [vmem:[%s200 + $0xd0] sm:$0xff]
        %v279 = vld [vmem:[%s200 + $0xd8] sm:$0xff]
        %v280 = vld [vmem:[%s200 + $0xe0] sm:$0xff]
        %v281 = vld [vmem:[%s200 + $0xe8] sm:$0xff]
        %v282 = vld [vmem:[%s200 + $0xf0] sm:$0xff]
        %v283 = vld [vmem:[%s200 + $0xf8] sm:$0xff]
        %v284 = vld [vmem:[%s200 + $0x100] sm:$0xff]
        %v285 = vld [vmem:[%s200 + $0x108] sm:$0xff]
        %v286 = vld [vmem:[%s200 + $0x110] sm:$0xff]
        %v287 = vld [vmem:[%s200 + $0x118] sm:$0xff]
        %v288 = vld [vmem:[%s200 + $0x120] sm:$0xff]
        %v289 = vld [vmem:[%s200 + $0x128] sm:$0xff]
        %v290 = vld [vmem:[%s200 + $0x130] sm:$0xff]
        %v291 = vld [vmem:[%s200 + $0x138] sm:$0xff]
        %v292 = vld [vmem:[%s200 + $0x140] sm:$0xff]
        %v293 = vld [vmem:[%s200 + $0x148] sm:$0xff]
        %v294 = vld [vmem:[%s200 + $0x150] sm:$0xff]
        %v295 = vld [vmem:[%s200 + $0x158] sm:$0xff]
        %v296 = vld [vmem:[%s200 + $0x160] sm:$0xff]
        %v297 = vld [vmem:[%s200 + $0x168] sm:$0xff]
        %v298 = vld [vmem:[%s200 + $0x170] sm:$0xff]
        %v299 = vld [vmem:[%s200 + $0x178] sm:$0xff]
        %v300 = vld [vmem:[%s200 + $0x180] sm:$0xff]
        %v301 = vld [vmem:[%s200 + $0x188] sm:$0xff]
        %v302 = vld [vmem:[%s200 + $0x190] sm:$0xff]
        %v303 = vld [vmem:[%s200 + $0x198] sm:$0xff]
        %v304 = vld [vmem:[%s200 + $0x1a0] sm:$0xff]
        %v305 = vld [vmem:[%s200 + $0x1a8] sm:$0xff]
        %v306 = vld [vmem:[%s200 + $0x1b0] sm:$0xff]
        %v307 = vld [vmem:[%s200 + $0x1b8] sm:$0xff]
        %v308 = vld [vmem:[%s200 + $0x1c0] sm:$0xff]
        %v309 = vld [vmem:[%s200 + $0x1c8] sm:$0xff]
        %v310 = vld [vmem:[%s200 + $0x1d0] sm:$0xff]
        %v311 = vld [vmem:[%s200 + $0x1d8] sm:$0xff]
        %v312 = vld [vmem:[%s200 + $0x1e0] sm:$0xff]
        %v313 = vld [vmem:[%s200 + $0x1e8] sm:$0xff]
        %v314 = vld [vmem:[%s200 + $0x1f0] sm:$0xff]
        %v315 = vld [vmem:[%s200 + $0x1f8] sm:$0xff]
        %v316 = vld [vmem:[%s200 + $0x200] sm:$0xff]
        %v317 = vld [vmem:[%s200 + $0x208] sm:$0xff]
        %v318 = vld [vmem:[%s200 + $0x210] sm:$0xff]
        %v319 = vld [vmem:[%s200 + $0x218] sm:$0xff]
        %v320 = vld [vmem:[%s200 + $0x220] sm:$0xff]
        %v321 = vld [vmem:[%s200 + $0x228] sm:$0xff]
        %v322 = vld [vmem:[%s200 + $0x230] sm:$0xff]
        %v323 = vld [vmem:[%s200 + $0x238] sm:$0xff]
        %v324 = vld [vmem:[%s200 + $0x240] sm:$0xff]
        %v325 = vld [vmem:[%s200 + $0x248] sm:$0xff]
        %v326 = vld [vmem:[%s200 + $0x250] sm:$0xff]
        %v327 = vld [vmem:[%s200 + $0x258] sm:$0xff]
        %v328 = vld [vmem:[%s200 + $0x260] sm:$0xff]
        %v329 = vld [vmem:[%s200 + $0x268] sm:$0xff]
        %v330 = vld [vmem:[%s200 + $0x270] sm:$0xff]
        %v331 = vld [vmem:[%s200 + $0x278] sm:$0xff]
        %v332 = vld [vmem:[%s200 + $0x280] sm:$0xff]
        %v333 = vld [vmem:[%s200 + $0x288] sm:$0xff]
        %v334 = vld [vmem:[%s200 + $0x290] sm:$0xff]
        %v335 = vld [vmem:[%s200 + $0x298] sm:$0xff]
        %v336 = vld [vmem:[%s200 + $0x2a0] sm:$0xff]
        %v337 = vld [vmem:[%s200 + $0x2a8] sm:$0xff]
        %v338 = vld [vmem:[%s200 + $0x2b0] sm:$0xff]
        %v339 = vld [vmem:[%s200 + $0x2b8] sm:$0xff]
        %v340 = vld [vmem:[%s200 + $0x2c0] sm:$0xff]
        %v341 = vld [vmem:[%s200 + $0x2c8] sm:$0xff]
        %v342 = vld [vmem:[%s200 + $0x2d0] sm:$0xff]
        %v343 = vld [vmem:[%s200 + $0x2d8] sm:$0xff]
        %v344 = vld [vmem:[%s200 + $0x2e0] sm:$0xff]
        %v345 = vld [vmem:[%s200 + $0x2e8] sm:$0xff]
        %v346 = vld [vmem:[%s200 + $0x2f0] sm:$0xff]
        %v347 = vld [vmem:[%s200 + $0x2f8] sm:$0xff]
        %v348 = vld [vmem:[%s244] sm:$0x7]
        %v350 = vperm.slane %v348, 0
        %v351 = vperm.slane %v348, 1
        %v352 = vperm.slane %v348, 2
        %356 = vmatpush.msra.mxu0 %v297
        %357 = vmatpush.msra.mxu0 %v294
        %358 = vmatpush.msra.mxu0 %v291
        %359 = vmatpush.msra.mxu0 %v288
        %360 = vmatpush.msra.mxu0 %v285
        %361 = vmatpush.msra.mxu0 %v282
        %362 = vmatpush.msra.mxu0 %v279
        %363 = vmatpush.msra.mxu0 %v276
        %364 = vmatpush.msra.mxu0 %v273
        %365 = vmatpush.msra.mxu0 %v270
        %366 = vmatpush.msra.mxu0 %v267
        %367 = vmatpush.msra.mxu0 %v264
        %368 = vmatpush.msra.mxu0 %v261
        %369 = vmatpush.msra.mxu0 %v258
        %370 = vmatpush.msra.mxu0 %v255
        %371 = vmatpush.msra.mxu0 %v252
        %372 = vmatmul.f32.gmra.mxu0 %v248
        %v373 = vpop.f32.mrf.mxu0
        %v374 = vadd.f32 %v350, %v373
        %375 = vmatmul.f32.gmra.mxu0 %v250
        %v376 = vpop.f32.mrf.mxu0
        %v377 = vadd.f32 %v350, %v376
        %378 = vdwg.mxu0
        %379 = vmatpush.msra.mxu0 %v345
        %380 = vmatpush.msra.mxu0 %v342
        %381 = vmatpush.msra.mxu0 %v339
        %382 = vmatpush.msra.mxu0 %v336
        %383 = vmatpush.msra.mxu0 %v333
        %384 = vmatpush.msra.mxu0 %v330
        %385 = vmatpush.msra.mxu0 %v327
        %386 = vmatpush.msra.mxu0 %v324
        %387 = vmatpush.msra.mxu0 %v321
        %388 = vmatpush.msra.mxu0 %v318
        %389 = vmatpush.msra.mxu0 %v315
        %390 = vmatpush.msra.mxu0 %v312
        %391 = vmatpush.msra.mxu0 %v309
        %392 = vmatpush.msra.mxu0 %v306
        %393 = vmatpush.msra.mxu0 %v303
        %394 = vmatpush.msra.mxu0 %v300
        %395 = vmatmul.f32.gmra.mxu0 %v249
        %v396 = vpop.f32.mrf.mxu0
        %v397 = vadd.f32 %v374, %v396
        %398 = vmatmul.f32.gmra.mxu0 %v251
        %v399 = vpop.f32.mrf.mxu0
        %v400 = vadd.f32 %v377, %v399
        %401 = vdwg.mxu0
        %402 = vmatpush.msra.mxu0 %v298
        %403 = vmatpush.msra.mxu0 %v295
        %404 = vmatpush.msra.mxu0 %v292
        %405 = vmatpush.msra.mxu0 %v289
        %406 = vmatpush.msra.mxu0 %v286
        %407 = vmatpush.msra.mxu0 %v283
        %408 = vmatpush.msra.mxu0 %v280
        %409 = vmatpush.msra.mxu0 %v277
        %410 = vmatpush.msra.mxu0 %v274
        %411 = vmatpush.msra.mxu0 %v271
        %412 = vmatpush.msra.mxu0 %v268
        %413 = vmatpush.msra.mxu0 %v265
        %414 = vmatpush.msra.mxu0 %v262
        %415 = vmatpush.msra.mxu0 %v259
        %416 = vmatpush.msra.mxu0 %v256
        %417 = vmatpush.msra.mxu0 %v253
        %418 = vmatmul.f32.gmra.mxu0 %v248
        %v419 = vpop.f32.mrf.mxu0
        %v420 = vadd.f32 %v351, %v419
        %421 = vmatmul.f32.gmra.mxu0 %v250
        %v422 = vpop.f32.mrf.mxu0
        %v423 = vadd.f32 %v351, %v422
        %424 = vdwg.mxu0
        %425 = vmatpush.msra.mxu0 %v346
        %426 = vmatpush.msra.mxu0 %v343
        %427 = vmatpush.msra.mxu0 %v340
        %428 = vmatpush.msra.mxu0 %v337
        %429 = vmatpush.msra.mxu0 %v334
        %430 = vmatpush.msra.mxu0 %v331
        %431 = vmatpush.msra.mxu0 %v328
        %432 = vmatpush.msra.mxu0 %v325
        %433 = vmatpush.msra.mxu0 %v322
        %434 = vmatpush.msra.mxu0 %v319
        %435 = vmatpush.msra.mxu0 %v316
        %436 = vmatpush.msra.mxu0 %v313
        %437 = vmatpush.msra.mxu0 %v310
        %438 = vmatpush.msra.mxu0 %v307
        %439 = vmatpush.msra.mxu0 %v304
        %440 = vmatpush.msra.mxu0 %v301
        %441 = vmatmul.f32.gmra.mxu0 %v249
        %v442 = vpop.f32.mrf.mxu0
        %v443 = vadd.f32 %v420, %v442
        %444 = vmatmul.f32.gmra.mxu0 %v251
        %v445 = vpop.f32.mrf.mxu0
        %v446 = vadd.f32 %v423, %v445
        %447 = vdwg.mxu0
        %448 = vmatpush.msra.mxu0 %v299
        %449 = vmatpush.msra.mxu0 %v296
        %450 = vmatpush.msra.mxu0 %v293
        %451 = vmatpush.msra.mxu0 %v290
        %452 = vmatpush.msra.mxu0 %v287
        %453 = vmatpush.msra.mxu0 %v284
        %454 = vmatpush.msra.mxu0 %v281
        %455 = vmatpush.msra.mxu0 %v278
        %456 = vmatpush.msra.mxu0 %v275
        %457 = vmatpush.msra.mxu0 %v272
        %458 = vmatpush.msra.mxu0 %v269
        %459 = vmatpush.msra.mxu0 %v266
        %460 = vmatpush.msra.mxu0 %v263
        %461 = vmatpush.msra.mxu0 %v260
        %462 = vmatpush.msra.mxu0 %v257
        %463 = vmatpush.msra.mxu0 %v254
        %464 = vmatmul.f32.gmra.mxu0 %v248
        %v465 = vpop.f32.mrf.mxu0
        %v466 = vadd.f32 %v352, %v465
        %467 = vmatmul.f32.gmra.mxu0 %v250
        %v468 = vpop.f32.mrf.mxu0
        %v469 = vadd.f32 %v352, %v468
        %470 = vdwg.mxu0
        %471 = vmatpush.msra.mxu0 %v347
        %472 = vmatpush.msra.mxu0 %v344
        %473 = vmatpush.msra.mxu0 %v341
        %474 = vmatpush.msra.mxu0 %v338
        %475 = vmatpush.msra.mxu0 %v335
        %476 = vmatpush.msra.mxu0 %v332
        %477 = vmatpush.msra.mxu0 %v329
        %478 = vmatpush.msra.mxu0 %v326
        %479 = vmatpush.msra.mxu0 %v323
        %480 = vmatpush.msra.mxu0 %v320
        %481 = vmatpush.msra.mxu0 %v317
        %482 = vmatpush.msra.mxu0 %v314
        %483 = vmatpush.msra.mxu0 %v311
        %484 = vmatpush.msra.mxu0 %v308
        %485 = vmatpush.msra.mxu0 %v305
        %486 = vmatpush.msra.mxu0 %v302
        %487 = vmatmul.f32.gmra.mxu0 %v249
        %v488 = vpop.f32.mrf.mxu0
        %v489 = vadd.f32 %v466, %v488
        %490 = vmatmul.f32.gmra.mxu0 %v251
        %v491 = vpop.f32.mrf.mxu0
        %v492 = vadd.f32 %v469, %v491
        %493 = vdwg.mxu0
        %494 = vst [vmem:[%s232] sm:$0xff] %v397
        %495 = vst [vmem:[%s232 + $0x8] sm:$0xff] %v443
        %496 = vst [vmem:[%s232 + $0x10] sm:$0xff] %v489
        %497 = vst [vmem:[%s232 + $0x18] sm:$0xff] %v400
        %498 = vst [vmem:[%s232 + $0x20] sm:$0xff] %v446
        %499 = vst [vmem:[%s232 + $0x28] sm:$0xff] %v492
        %s500 = sand.u32 %s117, 1
        %s501 = sand.u32 %s117, 1
        %s502 = smul.addr %s501, 48
        %s503 = scalar_lea.vmem [#allocation4], %s502
        // Predicated region
        $region37: #{customgpt_forward.17} parent=31 // pred_check
          %p504 = pneg %p127
        $region38: #{customgpt_forward.17} parent=31 // pred_check_branch
          %506 = sbr.rel (%p504) target = $region40
        $region39: #{customgpt_forward.17} parent=31 // pred_region
          %s507 = smul.u32 2, %s21
          %s508 = smul.u32 3, %s22
          %s509 = smul.addr %s507, 6
          %s510 = sadd.s32 %s508, %s509
          %s511 = smul.addr %s510, 8
          %s512 = scalar_lea.vmem %s3, %s511
          // Predicated region
          $region41: #{customgpt_forward.17} parent=39 // pred_check
            _
          $region42: #{customgpt_forward.17} parent=39 // pred_check_branch
            %514 = sbr.rel (0) target = $region44
          $region43: #{customgpt_forward.17} parent=39 // pred_region
            // Predicated region
            $region45: #{customgpt_forward.17} parent=43 // pred_check
              _
            $region46: #{customgpt_forward.17} parent=43 // pred_check_branch
              %516 = sbr.rel (0) target = $region48
            $region47: #{customgpt_forward.17} parent=43 // pred_region
              loop: start=0, step=1, limit=1
              $region49: #{customgpt_forward.17} parent=47 // loop_pre_header
                _
              $region50: #{customgpt_forward.17} parent=47 // loop_header
                %s518 = sphi 0, %s522
                %p519 = scmp.ge.s32.totalorder %s518, 1
                %s523 = sphi %s503, %s503
                %s524 = sphi %s512, %s512
              $region51: #{customgpt_forward.17} parent=47 // loop_header_branch
                %521 = sbr.rel (%p519) target = $region55
              $region52: #{customgpt_forward.17} parent=47 // loop_body
                %v525 = vld [vmem:[%s523] sm:$0xff]
                %526 = vst [vmem:[%s524] sm:$0xff] %v525
                %v527 = vld [vmem:[%s523 + $0x8] sm:$0xff]
                %528 = vst [vmem:[%s524 + $0x8] sm:$0xff] %v527
                %v529 = vld [vmem:[%s523 + $0x10] sm:$0xff]
                %530 = vst [vmem:[%s524 + $0x10] sm:$0xff] %v529
                %v531 = vld [vmem:[%s523 + $0x18] sm:$0xff]
                %532 = vst [vmem:[%s524 + $0x30] sm:$0xff] %v531
                %v533 = vld [vmem:[%s523 + $0x20] sm:$0xff]
                %534 = vst [vmem:[%s524 + $0x38] sm:$0xff] %v533
                %v535 = vld [vmem:[%s523 + $0x28] sm:$0xff]
                %536 = vst [vmem:[%s524 + $0x40] sm:$0xff] %v535
              $region53: #{customgpt_forward.17} parent=47 // loop_footer
                %s522 = sadd.s32 1, %s518
              $region54: #{customgpt_forward.17} parent=47 // loop_footer_branch
                %517 = sbr.rel target = $region50
              $region55: #{customgpt_forward.17} parent=47 // loop_exit
                _
            $region48: #{customgpt_forward.17} parent=43 // pred_fallthru
              _
            // Predicated region
            $region56: #{customgpt_forward.17} parent=43 // pred_check
              _
            $region57: #{customgpt_forward.17} parent=43 // pred_check_branch
              %538 = sbr.rel target = $region59
            $region58: #{customgpt_forward.17} parent=43 // pred_region
              _
            $region59: #{customgpt_forward.17} parent=43 // pred_fallthru
              _
          $region44: #{customgpt_forward.17} parent=39 // pred_fallthru
            _
          %539 = vnop
        $region40: #{customgpt_forward.17} parent=31 // pred_fallthru
          _
      $region32: #{customgpt_forward.17} parent=5 // pred_fallthru
        _
      %p540 = scmp.le.s32.totalorder 2, %s12
      // Predicated region
      $region60: #{customgpt_forward.17} parent=5 // pred_check
        %p541 = pneg %p540
      $region61: #{customgpt_forward.17} parent=5 // pred_check_branch
        %543 = sbr.rel (%p541) target = $region63
      $region62: #{customgpt_forward.17} parent=5 // pred_region
        %s544 = ssub.s32 %s12, 2
        // Predicated region
        $region64: #{customgpt_forward.17} parent=62 // pred_check
          %p545 = pneg %p133
        $region65: #{customgpt_forward.17} parent=62 // pred_check_branch
          %547 = sbr.rel (%p545) target = $region67
        $region66: #{customgpt_forward.17} parent=62 // pred_region
          %s548 = sand.u32 %s118, 1
          %s549 = sand.u32 %s118, 1
          %s550 = smul.addr %s549, 48
          %s551 = scalar_lea.vmem [#allocation4], %s550
        $region67: #{customgpt_forward.17} parent=62 // pred_fallthru
          _
      $region63: #{customgpt_forward.17} parent=5 // pred_fallthru
        _
    $region6: #{customgpt_forward.17} parent=1 // loop_footer
      %s16 = sadd.s32 1, %s12
    $region7: #{customgpt_forward.17} parent=1 // loop_footer_branch
      %11 = sbr.rel target = $region3
    $region8: #{customgpt_forward.17} parent=1 // loop_exit
      _
    %552 = vsyncpa [#allocation3], 1
    %s553 = scalar_lea.sflag [#allocation3], 1
    %554 = vsyncpa %s553, 1

// kernel: customgpt_forward.20
$region0: #{customgpt_forward.20}
  #allocation0 [shape = 'u32[]', space=smem, size = 0x4, offset = 0x4, fixed_abs, tag = 'smem constant byte address 0x4 - core index']
  #allocation1 [shape = 'u32[72,128]{1,0:T(1,128)}', space=vmem, size = 0x9000, scoped, tag = 'internal scratch']
  %s0 = inlined_call_operand.vmem [shape: f32[16,256], index: 0, kind: input, shape index: {}]
  %s1 = inlined_call_operand.hbm [shape: f32[256,1024], index: 1, kind: input, shape index: {}]
  %s2 = inlined_call_operand.vmem [shape: f32[1,1024], index: 2, kind: input, shape index: {}]
  %s3 = inlined_call_operand.vmem [shape: f32[16,1024], index: 3, kind: output, shape index: {}]
  %s4 = sld [smem:[#allocation0]]
  $region68: #{customgpt_forward.20} parent=0
    _
  %s6 = ssub.s32 1, %s4
  %s7 = scalar_select 0, %s6, %s4
  $region1: #{customgpt_forward.20} parent=0
    #allocation2 [shape = 'u8[1048576]{0}', space=vmem, size = 0x100000, scoped, tag = 'input window, operand 1']
    #allocation3 [shape = 's32[2]{0}', space=sflag, size = 0x8, scoped, tag = 'scoped memory for customgpt_forward.20']
    #allocation4 [shape = 'u8[65536]{0}', space=vmem, size = 0x10000, scoped, tag = 'output window, operand 0']
    %8 = vsyncpa [#allocation3], 0
    %s9 = scalar_lea.sflag [#allocation3], 1
    %10 = vsyncpa %s9, 0
    loop: start=0, step=1, limit=4
    $region2: #{customgpt_forward.20} parent=1 // loop_pre_header
      _
    $region3: #{customgpt_forward.20} parent=1 // loop_header
      %s12 = sphi 0, %s16
      %p13 = scmp.ge.s32.totalorder %s12, 4
      %s19 = sphi 0, %s31
      %s20 = sphi 0, %s27
      %s21 = sphi 0, %s19
      %s22 = sphi 0, %s20
      %s23 = sphi 0, %s21
      %s24 = sphi 0, %s22
      %s34 = sphi 0, %s36
      %s37 = sphi 0, %s34
      %s38 = sphi 0, %s37
      %s54 = sphi 0, %s38
      %s60 = sphi 0, %s62
      %s63 = sphi 0, %s60
      %s64 = sphi 0, %s63
      %s80 = sphi 0, %s64
      %s86 = sphi 0, %s88
      %s89 = sphi 0, %s86
      %s90 = sphi 0, %s89
      %s106 = sphi 0, %s90
      %s114 = sphi 0, %s116
      %s117 = sphi 0, %s114
      %s118 = sphi 0, %s117
      %s134 = sphi 0, %s118
    $region4: #{customgpt_forward.20} parent=1 // loop_header_branch
      %15 = sbr.rel (%p13) target = $region8
    $region5: #{customgpt_forward.20} parent=1 // loop_body
      %s17 = ssub.s32 %s12, 1
      %s18 = ssub.s32 %s12, 2
      %s25 = sadd.s32 1, %s20
      %p26 = scmp.ge.s32.totalorder %s25, 2
      %s27 = scalar_select %p26, 0, %s25
      %s28 = sadd.s32 1, %s19
      %s29 = scalar_select %p26, %s28, %s19
      %p30 = scmp.ge.s32.totalorder %s29, 1
      %s31 = scalar_select %p30, 0, %s29
      %s32 = ssub.s32 %s19, %s31
      %p33 = scmp.eq.s32.totalorder %s32, 0
      %s35 = sadd.s32 %s34, 1
      %s36 = scalar_select %p33, %s34, %s35
      %p39 = pneg %p33
      %p40 = scmp.eq.s32.totalorder %s12, 1
      %p41 = por %p39, %p40
      %p42 = scmp.ne.s32.totalorder %s34, %s37
      %p43 = scmp.eq.s32.totalorder %s12, 0
      %p44 = por %p42, %p43
      %p45 = scmp.ne.s32.totalorder %s34, %s37
      %p46 = scmp.eq.s32.totalorder %s17, 1
      %p47 = por %p45, %p46
      %p48 = scmp.ne.s32.totalorder %s37, %s38
      %p49 = scmp.eq.s32.totalorder %s17, 0
      %p50 = por %p48, %p49
      %p51 = scmp.ne.s32.totalorder %s37, %s38
      %p52 = scmp.eq.s32.totalorder %s18, 1
      %p53 = por %p51, %p52
      %p55 = scmp.ne.s32.totalorder %s38, %s54
      %p56 = scmp.eq.s32.totalorder %s18, 0
      %p57 = por %p55, %p56
      %s58 = ssub.s32 %s20, %s27
      %p59 = scmp.eq.s32.totalorder %s58, 0
      %s61 = sadd.s32 %s60, 1
      %s62 = scalar_select %p59, %s60, %s61
      %p65 = pneg %p59
      %p66 = scmp.eq.s32.totalorder %s12, 1
      %p67 = por %p65, %p66
      %p68 = scmp.ne.s32.totalorder %s60, %s63
      %p69 = scmp.eq.s32.totalorder %s12, 0
      %p70 = por %p68, %p69
      %p71 = scmp.ne.s32.totalorder %s60, %s63
      %p72 = scmp.eq.s32.totalorder %s17, 1
      %p73 = por %p71, %p72
      %p74 = scmp.ne.s32.totalorder %s63, %s64
      %p75 = scmp.eq.s32.totalorder %s17, 0
      %p76 = por %p74, %p75
      %p77 = scmp.ne.s32.totalorder %s63, %s64
      %p78 = scmp.eq.s32.totalorder %s18, 1
      %p79 = por %p77, %p78
      %p81 = scmp.ne.s32.totalorder %s64, %s80
      %p82 = scmp.eq.s32.totalorder %s18, 0
      %p83 = por %p81, %p82
      %s84 = ssub.s32 %s20, %s27
      %p85 = scmp.eq.s32.totalorder %s84, 0
      %s87 = sadd.s32 %s86, 1
      %s88 = scalar_select %p85, %s86, %s87
      %p91 = pneg %p85
      %p92 = scmp.eq.s32.totalorder %s12, 1
      %p93 = por %p91, %p92
      %p94 = scmp.ne.s32.totalorder %s86, %s89
      %p95 = scmp.eq.s32.totalorder %s12, 0
      %p96 = por %p94, %p95
      %p97 = scmp.ne.s32.totalorder %s86, %s89
      %p98 = scmp.eq.s32.totalorder %s17, 1
      %p99 = por %p97, %p98
      %p100 = scmp.ne.s32.totalorder %s89, %s90
      %p101 = scmp.eq.s32.totalorder %s17, 0
      %p102 = por %p100, %p101
      %p103 = scmp.ne.s32.totalorder %s89, %s90
      %p104 = scmp.eq.s32.totalorder %s18, 1
      %p105 = por %p103, %p104
      %p107 = scmp.ne.s32.totalorder %s90, %s106
      %p108 = scmp.eq.s32.totalorder %s18, 0
      %p109 = por %p107, %p108
      %s110 = ssub.s32 %s19, %s31
      %s111 = ssub.s32 %s20, %s27
      %s112 = sor.u32 %s110, %s111
      %p113 = scmp.eq.s32.totalorder %s112, 0
      %s115 = sadd.s32 %s114, 1
      %s116 = scalar_select %p113, %s114, %s115
      %p119 = pneg %p113
      %p120 = scmp.eq.s32.totalorder %s12, 1
      %p121 = por %p119, %p120
      %p122 = scmp.ne.s32.totalorder %s114, %s117
      %p123 = scmp.eq.s32.totalorder %s12, 0
      %p124 = por %p122, %p123
      %p125 = scmp.ne.s32.totalorder %s114, %s117
      %p126 = scmp.eq.s32.totalorder %s17, 1
      %p127 = por %p125, %p126
      %p128 = scmp.ne.s32.totalorder %s117, %s118
      %p129 = scmp.eq.s32.totalorder %s17, 0
      %p130 = por %p128, %p129
      %p131 = scmp.ne.s32.totalorder %s117, %s118
      %p132 = scmp.eq.s32.totalorder %s18, 1
      %p133 = por %p131, %p132
      %p135 = scmp.ne.s32.totalorder %s118, %s134
      %p136 = scmp.eq.s32.totalorder %s18, 0
      %p137 = por %p135, %p136
      %p138 = scmp.le.s32.totalorder 1, %s12
      %p139 = scmp.lt.s32.totalorder %s12, 3
      %p140 = pnand %p138, %p139
      %p141 = pneg %p140
      // Predicated region
      $region9: #{customgpt_forward.20} parent=5 // pred_check
        _
      $region10: #{customgpt_forward.20} parent=5 // pred_check_branch
        %143 = sbr.rel (%p140) target = $region12
      $region11: #{customgpt_forward.20} parent=5 // pred_region
        %s144 = ssub.s32 %s12, 1
        // Predicated region
        $region13: #{customgpt_forward.20} parent=11 // pred_check
          %p145 = pneg %p50
        $region14: #{customgpt_forward.20} parent=11 // pred_check_branch
          %147 = sbr.rel (%p145) target = $region16
        $region15: #{customgpt_forward.20} parent=11 // pred_region
          %s148 = smul.u32 2, %s21
          %p149 = scmp.lt.s32.totalorder %s148, 1
          %s150 = scalar_select %p149, %s148, 1
          %s151 = smul.addr %s150, 2
          %s152 = smul.addr %s151, 8
          %s153 = scalar_lea.vmem %s0, %s152
          %s154 = smul.u32 2, %s21
        $region16: #{customgpt_forward.20} parent=11 // pred_fallthru
          _
      $region12: #{customgpt_forward.20} parent=5 // pred_fallthru
        _
      %p155 = scmp.lt.s32.totalorder %s12, 2
      // Predicated region
      $region17: #{customgpt_forward.20} parent=5 // pred_check
        %p156 = pneg %p155
      $region18: #{customgpt_forward.20} parent=5 // pred_check_branch
        %158 = sbr.rel (%p156) target = $region20
      $region19: #{customgpt_forward.20} parent=5 // pred_region
        // Predicated region
        $region21: #{customgpt_forward.20} parent=19 // pred_check
          %p159 = pneg %p70
        $region22: #{customgpt_forward.20} parent=19 // pred_check_branch
          %161 = sbr.rel (%p159) target = $region24
        $region23: #{customgpt_forward.20} parent=19 // pred_region
          %s162 = sand.u32 %s60, 1
          %s163 = scalar_lea.sflag [#allocation3], %s162
          %s164 = sand.u32 %s60, 1
          %s165 = smul.addr %s164, 1024
          %s166 = scalar_lea.vmem [#allocation2], %s165
          %s167 = smul.u32 4, %s20
          %169 = vsyncadd %s163, 0
          %s170 = smul.addr %s167, 8
          %s171 = scalar_lea.hbm %s1, %s170
          %s172 = sshll.u32 %s171, 4
          %s173 = int_to_ptr.hbm [resolvable:$true] %s172
          %s174 = sshll.u32 %s166, 4
          %s175 = int_to_ptr.vmem [resolvable:$true] %s174
          %180 = dma.hbm_to_vmem [thread:$0]  %s173, 16384, %s175, %s163, 1024, 512, 32
        $region24: #{customgpt_forward.20} parent=19 // pred_fallthru
          _
        // Predicated region
        $region25: #{customgpt_forward.20} parent=19 // pred_check
          %p181 = pneg %p96
        $region26: #{customgpt_forward.20} parent=19 // pred_check_branch
          %183 = sbr.rel (%p181) target = $region28
        $region27: #{customgpt_forward.20} parent=19 // pred_region
          %s184 = smul.u32 4, %s20
          %p185 = scmp.lt.s32.totalorder %s184, 7
          %s186 = scalar_select %p185, %s184, 7
          %s187 = scalar_lea.vmem %s2, %s186
          %s188 = smul.u32 4, %s20
        $region28: #{customgpt_forward.20} parent=19 // pred_fallthru
          _
      $region20: #{customgpt_forward.20} parent=5 // pred_fallthru
        _
      %p189 = scmp.le.s32.totalorder 1, %s12
      %p190 = scmp.lt.s32.totalorder %s12, 3
      %p191 = pnand %p189, %p190
      %p192 = pneg %p191
      // Predicated region
      $region29: #{customgpt_forward.20} parent=5 // pred_check
        _
      $region30: #{customgpt_forward.20} parent=5 // pred_check_branch
        %194 = sbr.rel (%p191) target = $region32
      $region31: #{customgpt_forward.20} parent=5 // pred_region
        %s195 = ssub.s32 %s12, 1
        %s196 = sand.u32 %s63, 1
        %s197 = scalar_lea.sflag [#allocation3], %s196
        %s198 = sand.u32 %s63, 1
        %s199 = smul.addr %s198, 1024
        %s200 = scalar_lea.vmem [#allocation2], %s199
        // Predicated region
        $region33: #{customgpt_forward.20} parent=31 // pred_check
          %p201 = pneg %p76
        $region34: #{customgpt_forward.20} parent=31 // pred_check_branch
          %203 = sbr.rel (%p201) target = $region36
        $region35: #{customgpt_forward.20} parent=31 // pred_region
          %205 = dma.done %s197, 16384
        $region36: #{customgpt_forward.20} parent=31 // pred_fallthru
          _
        %s206 = smul.u32 2, %s21
        %p207 = scmp.lt.s32.totalorder %s206, 1
        %s208 = scalar_select %p207, %s206, 1
        %s209 = smul.addr %s208, 2
        %s210 = smul.addr %s209, 8
        %s211 = scalar_lea.vmem %s0, %s210
        %p212 = pneg %p50
        %p213 = pneg %p47
        %s214 = sand.u32 %s63, 1
        %s215 = scalar_lea.sflag [#allocation3], %s214
        %s216 = sand.u32 %s63, 1
        %s217 = smul.addr %s216, 1024
        %s218 = scalar_lea.vmem [#allocation2], %s217
        %p219 = pneg %p76
        %p220 = pneg %p73
        %s221 = smul.u32 4, %s22
        %p222 = scmp.lt.s32.totalorder %s221, 7
        %s223 = scalar_select %p222, %s221, 7
        %s224 = scalar_lea.vmem %s2, %s223
        %p225 = pneg %p102
        %p226 = pneg %p99
        %p227 = pneg %p130
        %p228 = pneg %p127
        %s229 = sand.u32 %s117, 1
        %s230 = sand.u32 %s117, 1
        %s231 = smul.addr %s230, 64
        %s232 = scalar_lea.vmem [#allocation4], %s231
        %s233 = smul.u32 2, %s21
        %p234 = scmp.lt.s32.totalorder %s233, 1
        %s235 = scalar_select %p234, %s233, 1
        %s236 = smul.addr %s235, 2
        %s237 = smul.addr %s236, 8
        %s238 = scalar_lea.vmem %s0, %s237
        %s239 = smul.u32 2, %s21
        %s240 = smul.u32 4, %s22
        %s241 = smul.u32 4, %s22
        %p242 = scmp.lt.s32.totalorder %s241, 7
        %s243 = scalar_select %p242, %s241, 7
        %s244 = scalar_lea.vmem %s2, %s243
        %s245 = smul.u32 4, %s22
        %s246 = smul.u32 2, %s21
        %s247 = smul.u32 4, %s22
        %v248 = vld [vmem:[%s238] sm:$0xff]
        %v249 = vld [vmem:[%s238 + $0x8] sm:$0xff]
        %v250 = vld [vmem:[%s238 + $0x10] sm:$0xff]
        %v251 = vld [vmem:[%s238 + $0x18] sm:$0xff]
        %v252 = vld [vmem:[%s200] sm:$0xff]
        %v253 = vld [vmem:[%s200 + $0x8] sm:$0xff]
        %v254 = vld [vmem:[%s200 + $0x10] sm:$0xff]
        %v255 = vld [vmem:[%s200 + $0x18] sm:$0xff]
        %v256 = vld [vmem:[%s200 + $0x20] sm:$0xff]
        %v257 = vld [vmem:[%s200 + $0x28] sm:$0xff]
        %v258 = vld [vmem:[%s200 + $0x30] sm:$0xff]
        %v259 = vld [vmem:[%s200 + $0x38] sm:$0xff]
        %v260 = vld [vmem:[%s200 + $0x40] sm:$0xff]
        %v261 = vld [vmem:[%s200 + $0x48] sm:$0xff]
        %v262 = vld [vmem:[%s200 + $0x50] sm:$0xff]
        %v263 = vld [vmem:[%s200 + $0x58] sm:$0xff]
        %v264 = vld [vmem:[%s200 + $0x60] sm:$0xff]
        %v265 = vld [vmem:[%s200 + $0x68] sm:$0xff]
        %v266 = vld [vmem:[%s200 + $0x70] sm:$0xff]
        %v267 = vld [vmem:[%s200 + $0x78] sm:$0xff]
        %v268 = vld [vmem:[%s200 + $0x80] sm:$0xff]
        %v269 = vld [vmem:[%s200 + $0x88] sm:$0xff]
        %v270 = vld [vmem:[%s200 + $0x90] sm:$0xff]
        %v271 = vld [vmem:[%s200 + $0x98] sm:$0xff]
        %v272 = vld [vmem:[%s200 + $0xa0] sm:$0xff]
        %v273 = vld [vmem:[%s200 + $0xa8] sm:$0xff]
        %v274 = vld [vmem:[%s200 + $0xb0] sm:$0xff]
        %v275 = vld [vmem:[%s200 + $0xb8] sm:$0xff]
        %v276 = vld [vmem:[%s200 + $0xc0] sm:$0xff]
        %v277 = vld [vmem:[%s200 + $0xc8] sm:$0xff]
        %v278 = vld [vmem:[%s200 + $0xd0] sm:$0xff]
        %v279 = vld [vmem:[%s200 + $0xd8] sm:$0xff]
        %v280 = vld [vmem:[%s200 + $0xe0] sm:$0xff]
        %v281 = vld [vmem:[%s200 + $0xe8] sm:$0xff]
        %v282 = vld [vmem:[%s200 + $0xf0] sm:$0xff]
        %v283 = vld [vmem:[%s200 + $0xf8] sm:$0xff]
        %v284 = vld [vmem:[%s200 + $0x100] sm:$0xff]
        %v285 = vld [vmem:[%s200 + $0x108] sm:$0xff]
        %v286 = vld [vmem:[%s200 + $0x110] sm:$0xff]
        %v287 = vld [vmem:[%s200 + $0x118] sm:$0xff]
        %v288 = vld [vmem:[%s200 + $0x120] sm:$0xff]
        %v289 = vld [vmem:[%s200 + $0x128] sm:$0xff]
        %v290 = vld [vmem:[%s200 + $0x130] sm:$0xff]
        %v291 = vld [vmem:[%s200 + $0x138] sm:$0xff]
        %v292 = vld [vmem:[%s200 + $0x140] sm:$0xff]
        %v293 = vld [vmem:[%s200 + $0x148] sm:$0xff]
        %v294 = vld [vmem:[%s200 + $0x150] sm:$0xff]
        %v295 = vld [vmem:[%s200 + $0x158] sm:$0xff]
        %v296 = vld [vmem:[%s200 + $0x160] sm:$0xff]
        %v297 = vld [vmem:[%s200 + $0x168] sm:$0xff]
        %v298 = vld [vmem:[%s200 + $0x170] sm:$0xff]
        %v299 = vld [vmem:[%s200 + $0x178] sm:$0xff]
        %v300 = vld [vmem:[%s200 + $0x180] sm:$0xff]
        %v301 = vld [vmem:[%s200 + $0x188] sm:$0xff]
        %v302 = vld [vmem:[%s200 + $0x190] sm:$0xff]
        %v303 = vld [vmem:[%s200 + $0x198] sm:$0xff]
        %v304 = vld [vmem:[%s200 + $0x1a0] sm:$0xff]
        %v305 = vld [vmem:[%s200 + $0x1a8] sm:$0xff]
        %v306 = vld [vmem:[%s200 + $0x1b0] sm:$0xff]
        %v307 = vld [vmem:[%s200 + $0x1b8] sm:$0xff]
        %v308 = vld [vmem:[%s200 + $0x1c0] sm:$0xff]
        %v309 = vld [vmem:[%s200 + $0x1c8] sm:$0xff]
        %v310 = vld [vmem:[%s200 + $0x1d0] sm:$0xff]
        %v311 = vld [vmem:[%s200 + $0x1d8] sm:$0xff]
        %v312 = vld [vmem:[%s200 + $0x1e0] sm:$0xff]
        %v313 = vld [vmem:[%s200 + $0x1e8] sm:$0xff]
        %v314 = vld [vmem:[%s200 + $0x1f0] sm:$0xff]
        %v315 = vld [vmem:[%s200 + $0x1f8] sm:$0xff]
        %v316 = vld [vmem:[%s200 + $0x200] sm:$0xff]
        %v317 = vld [vmem:[%s200 + $0x208] sm:$0xff]
        %v318 = vld [vmem:[%s200 + $0x210] sm:$0xff]
        %v319 = vld [vmem:[%s200 + $0x218] sm:$0xff]
        %v320 = vld [vmem:[%s200 + $0x220] sm:$0xff]
        %v321 = vld [vmem:[%s200 + $0x228] sm:$0xff]
        %v322 = vld [vmem:[%s200 + $0x230] sm:$0xff]
        %v323 = vld [vmem:[%s200 + $0x238] sm:$0xff]
        %v324 = vld [vmem:[%s200 + $0x240] sm:$0xff]
        %v325 = vld [vmem:[%s200 + $0x248] sm:$0xff]
        %v326 = vld [vmem:[%s200 + $0x250] sm:$0xff]
        %v327 = vld [vmem:[%s200 + $0x258] sm:$0xff]
        %v328 = vld [vmem:[%s200 + $0x260] sm:$0xff]
        %v329 = vld [vmem:[%s200 + $0x268] sm:$0xff]
        %v330 = vld [vmem:[%s200 + $0x270] sm:$0xff]
        %v331 = vld [vmem:[%s200 + $0x278] sm:$0xff]
        %v332 = vld [vmem:[%s200 + $0x280] sm:$0xff]
        %v333 = vld [vmem:[%s200 + $0x288] sm:$0xff]
        %v334 = vld [vmem:[%s200 + $0x290] sm:$0xff]
        %v335 = vld [vmem:[%s200 + $0x298] sm:$0xff]
        %v336 = vld [vmem:[%s200 + $0x2a0] sm:$0xff]
        %v337 = vld [vmem:[%s200 + $0x2a8] sm:$0xff]
        %v338 = vld [vmem:[%s200 + $0x2b0] sm:$0xff]
        %v339 = vld [vmem:[%s200 + $0x2b8] sm:$0xff]
        %v340 = vld [vmem:[%s200 + $0x2c0] sm:$0xff]
        %v341 = vld [vmem:[%s200 + $0x2c8] sm:$0xff]
        %v342 = vld [vmem:[%s200 + $0x2d0] sm:$0xff]
        %v343 = vld [vmem:[%s200 + $0x2d8] sm:$0xff]
        %v344 = vld [vmem:[%s200 + $0x2e0] sm:$0xff]
        %v345 = vld [vmem:[%s200 + $0x2e8] sm:$0xff]
        %v346 = vld [vmem:[%s200 + $0x2f0] sm:$0xff]
        %v347 = vld [vmem:[%s200 + $0x2f8] sm:$0xff]
        %v348 = vld [vmem:[%s200 + $0x300] sm:$0xff]
        %v349 = vld [vmem:[%s200 + $0x308] sm:$0xff]
        %v350 = vld [vmem:[%s200 + $0x310] sm:$0xff]
        %v351 = vld [vmem:[%s200 + $0x318] sm:$0xff]
        %v352 = vld [vmem:[%s200 + $0x320] sm:$0xff]
        %v353 = vld [vmem:[%s200 + $0x328] sm:$0xff]
        %v354 = vld [vmem:[%s200 + $0x330] sm:$0xff]
        %v355 = vld [vmem:[%s200 + $0x338] sm:$0xff]
        %v356 = vld [vmem:[%s200 + $0x340] sm:$0xff]
        %v357 = vld [vmem:[%s200 + $0x348] sm:$0xff]
        %v358 = vld [vmem:[%s200 + $0x350] sm:$0xff]
        %v359 = vld [vmem:[%s200 + $0x358] sm:$0xff]
        %v360 = vld [vmem:[%s200 + $0x360] sm:$0xff]
        %v361 = vld [vmem:[%s200 + $0x368] sm:$0xff]
        %v362 = vld [vmem:[%s200 + $0x370] sm:$0xff]
        %v363 = vld [vmem:[%s200 + $0x378] sm:$0xff]
        %v364 = vld [vmem:[%s200 + $0x380] sm:$0xff]
        %v365 = vld [vmem:[%s200 + $0x388] sm:$0xff]
        %v366 = vld [vmem:[%s200 + $0x390] sm:$0xff]
        %v367 = vld [vmem:[%s200 + $0x398] sm:$0xff]
        %v368 = vld [vmem:[%s200 + $0x3a0] sm:$0xff]
        %v369 = vld [vmem:[%s200 + $0x3a8] sm:$0xff]
        %v370 = vld [vmem:[%s200 + $0x3b0] sm:$0xff]
        %v371 = vld [vmem:[%s200 + $0x3b8] sm:$0xff]
        %v372 = vld [vmem:[%s200 + $0x3c0] sm:$0xff]
        %v373 = vld [vmem:[%s200 + $0x3c8] sm:$0xff]
        %v374 = vld [vmem:[%s200 + $0x3d0] sm:$0xff]
        %v375 = vld [vmem:[%s200 + $0x3d8] sm:$0xff]
        %v376 = vld [vmem:[%s200 + $0x3e0] sm:$0xff]
        %v377 = vld [vmem:[%s200 + $0x3e8] sm:$0xff]
        %v378 = vld [vmem:[%s200 + $0x3f0] sm:$0xff]
        %v379 = vld [vmem:[%s200 + $0x3f8] sm:$0xff]
        %v380 = vld [vmem:[%s244] sm:$0xf]
        %v382 = vperm.slane %v380, 0
        %v383 = vperm.slane %v380, 1
        %v384 = vperm.slane %v380, 2
        %v385 = vperm.slane %v380, 3
        %390 = vmatpush.msra.mxu0 %v312
        %391 = vmatpush.msra.mxu0 %v308
        %392 = vmatpush.msra.mxu0 %v304
        %393 = vmatpush.msra.mxu0 %v300
        %394 = vmatpush.msra.mxu0 %v296
        %395 = vmatpush.msra.mxu0 %v292
        %396 = vmatpush.msra.mxu0 %v288
        %397 = vmatpush.msra.mxu0 %v284
        %398 = vmatpush.msra.mxu0 %v280
        %399 = vmatpush.msra.mxu0 %v276
        %400 = vmatpush.msra.mxu0 %v272
        %401 = vmatpush.msra.mxu0 %v268
        %402 = vmatpush.msra.mxu0 %v264
        %403 = vmatpush.msra.mxu0 %v260
        %404 = vmatpush.msra.mxu0 %v256
        %405 = vmatpush.msra.mxu0 %v252
        %406 = vmatmul.f32.gmra.mxu0 %v248
        %v407 = vpop.f32.mrf.mxu0
        %v408 = vadd.f32 %v382, %v407
        %409 = vmatmul.f32.gmra.mxu0 %v250
        %v410 = vpop.f32.mrf.mxu0
        %v411 = vadd.f32 %v382, %v410
        %412 = vdwg.mxu0
        %413 = vmatpush.msra.mxu0 %v376
        %414 = vmatpush.msra.mxu0 %v372
        %415 = vmatpush.msra.mxu0 %v368
        %416 = vmatpush.msra.mxu0 %v364
        %417 = vmatpush.msra.mxu0 %v360
        %418 = vmatpush.msra.mxu0 %v356
        %419 = vmatpush.msra.mxu0 %v352
        %420 = vmatpush.msra.mxu0 %v348
        %421 = vmatpush.msra.mxu0 %v344
        %422 = vmatpush.msra.mxu0 %v340
        %423 = vmatpush.msra.mxu0 %v336
        %424 = vmatpush.msra.mxu0 %v332
        %425 = vmatpush.msra.mxu0 %v328
        %426 = vmatpush.msra.mxu0 %v324
        %427 = vmatpush.msra.mxu0 %v320
        %428 = vmatpush.msra.mxu0 %v316
        %429 = vmatmul.f32.gmra.mxu0 %v249
        %v430 = vpop.f32.mrf.mxu0
        %v431 = vadd.f32 %v408, %v430
        %432 = vmatmul.f32.gmra.mxu0 %v251
        %v433 = vpop.f32.mrf.mxu0
        %v434 = vadd.f32 %v411, %v433
        %435 = vdwg.mxu0
        %436 = vmatpush.msra.mxu0 %v313
        %437 = vmatpush.msra.mxu0 %v309
        %438 = vmatpush.msra.mxu0 %v305
        %439 = vmatpush.msra.mxu0 %v301
        %440 = vmatpush.msra.mxu0 %v297
        %441 = vmatpush.msra.mxu0 %v293
        %442 = vmatpush.msra.mxu0 %v289
        %443 = vmatpush.msra.mxu0 %v285
        %444 = vmatpush.msra.mxu0 %v281
        %445 = vmatpush.msra.mxu0 %v277
        %446 = vmatpush.msra.mxu0 %v273
        %447 = vmatpush.msra.mxu0 %v269
        %448 = vmatpush.msra.mxu0 %v265
        %449 = vmatpush.msra.mxu0 %v261
        %450 = vmatpush.msra.mxu0 %v257
        %451 = vmatpush.msra.mxu0 %v253
        %452 = vmatmul.f32.gmra.mxu0 %v248
        %v453 = vpop.f32.mrf.mxu0
        %v454 = vadd.f32 %v383, %v453
        %455 = vmatmul.f32.gmra.mxu0 %v250
        %v456 = vpop.f32.mrf.mxu0
        %v457 = vadd.f32 %v383, %v456
        %458 = vdwg.mxu0
        %459 = vmatpush.msra.mxu0 %v377
        %460 = vmatpush.msra.mxu0 %v373
        %461 = vmatpush.msra.mxu0 %v369
        %462 = vmatpush.msra.mxu0 %v365
        %463 = vmatpush.msra.mxu0 %v361
        %464 = vmatpush.msra.mxu0 %v357
        %465 = vmatpush.msra.mxu0 %v353
        %466 = vmatpush.msra.mxu0 %v349
        %467 = vmatpush.msra.mxu0 %v345
        %468 = vmatpush.msra.mxu0 %v341
        %469 = vmatpush.msra.mxu0 %v337
        %470 = vmatpush.msra.mxu0 %v333
        %471 = vmatpush.msra.mxu0 %v329
        %472 = vmatpush.msra.mxu0 %v325
        %473 = vmatpush.msra.mxu0 %v321
        %474 = vmatpush.msra.mxu0 %v317
        %475 = vmatmul.f32.gmra.mxu0 %v249
        %v476 = vpop.f32.mrf.mxu0
        %v477 = vadd.f32 %v454, %v476
        %478 = vmatmul.f32.gmra.mxu0 %v251
        %v479 = vpop.f32.mrf.mxu0
        %v480 = vadd.f32 %v457, %v479
        %481 = vdwg.mxu0
        %482 = vmatpush.msra.mxu0 %v314
        %483 = vmatpush.msra.mxu0 %v310
        %484 = vmatpush.msra.mxu0 %v306
        %485 = vmatpush.msra.mxu0 %v302
        %486 = vmatpush.msra.mxu0 %v298
        %487 = vmatpush.msra.mxu0 %v294
        %488 = vmatpush.msra.mxu0 %v290
        %489 = vmatpush.msra.mxu0 %v286
        %490 = vmatpush.msra.mxu0 %v282
        %491 = vmatpush.msra.mxu0 %v278
        %492 = vmatpush.msra.mxu0 %v274
        %493 = vmatpush.msra.mxu0 %v270
        %494 = vmatpush.msra.mxu0 %v266
        %495 = vmatpush.msra.mxu0 %v262
        %496 = vmatpush.msra.mxu0 %v258
        %497 = vmatpush.msra.mxu0 %v254
        %498 = vmatmul.f32.gmra.mxu0 %v248
        %v499 = vpop.f32.mrf.mxu0
        %v500 = vadd.f32 %v384, %v499
        %501 = vmatmul.f32.gmra.mxu0 %v250
        %v502 = vpop.f32.mrf.mxu0
        %v503 = vadd.f32 %v384, %v502
        %504 = vdwg.mxu0
        %505 = vmatpush.msra.mxu0 %v378
        %506 = vmatpush.msra.mxu0 %v374
        %507 = vmatpush.msra.mxu0 %v370
        %508 = vmatpush.msra.mxu0 %v366
        %509 = vmatpush.msra.mxu0 %v362
        %510 = vmatpush.msra.mxu0 %v358
        %511 = vmatpush.msra.mxu0 %v354
        %512 = vmatpush.msra.mxu0 %v350
        %513 = vmatpush.msra.mxu0 %v346
        %514 = vmatpush.msra.mxu0 %v342
        %515 = vmatpush.msra.mxu0 %v338
        %516 = vmatpush.msra.mxu0 %v334
        %517 = vmatpush.msra.mxu0 %v330
        %518 = vmatpush.msra.mxu0 %v326
        %519 = vmatpush.msra.mxu0 %v322
        %520 = vmatpush.msra.mxu0 %v318
        %521 = vmatmul.f32.gmra.mxu0 %v249
        %v522 = vpop.f32.mrf.mxu0
        %v523 = vadd.f32 %v500, %v522
        %524 = vmatmul.f32.gmra.mxu0 %v251
        %v525 = vpop.f32.mrf.mxu0
        %v526 = vadd.f32 %v503, %v525
        %527 = vdwg.mxu0
        %528 = vmatpush.msra.mxu0 %v315
        %529 = vmatpush.msra.mxu0 %v311
        %530 = vmatpush.msra.mxu0 %v307
        %531 = vmatpush.msra.mxu0 %v303
        %532 = vmatpush.msra.mxu0 %v299
        %533 = vmatpush.msra.mxu0 %v295
        %534 = vmatpush.msra.mxu0 %v291
        %535 = vmatpush.msra.mxu0 %v287
        %536 = vmatpush.msra.mxu0 %v283
        %537 = vmatpush.msra.mxu0 %v279
        %538 = vmatpush.msra.mxu0 %v275
        %539 = vmatpush.msra.mxu0 %v271
        %540 = vmatpush.msra.mxu0 %v267
        %541 = vmatpush.msra.mxu0 %v263
        %542 = vmatpush.msra.mxu0 %v259
        %543 = vmatpush.msra.mxu0 %v255
        %544 = vmatmul.f32.gmra.mxu0 %v248
        %v545 = vpop.f32.mrf.mxu0
        %v546 = vadd.f32 %v385, %v545
        %547 = vmatmul.f32.gmra.mxu0 %v250
        %v548 = vpop.f32.mrf.mxu0
        %v549 = vadd.f32 %v385, %v548
        %550 = vdwg.mxu0
        %551 = vmatpush.msra.mxu0 %v379
        %552 = vmatpush.msra.mxu0 %v375
        %553 = vmatpush.msra.mxu0 %v371
        %554 = vmatpush.msra.mxu0 %v367
        %555 = vmatpush.msra.mxu0 %v363
        %556 = vmatpush.msra.mxu0 %v359
        %557 = vmatpush.msra.mxu0 %v355
        %558 = vmatpush.msra.mxu0 %v351
        %559 = vmatpush.msra.mxu0 %v347
        %560 = vmatpush.msra.mxu0 %v343
        %561 = vmatpush.msra.mxu0 %v339
        %562 = vmatpush.msra.mxu0 %v335
        %563 = vmatpush.msra.mxu0 %v331
        %564 = vmatpush.msra.mxu0 %v327
        %565 = vmatpush.msra.mxu0 %v323
        %566 = vmatpush.msra.mxu0 %v319
        %567 = vmatmul.f32.gmra.mxu0 %v249
        %v568 = vpop.f32.mrf.mxu0
        %v569 = vadd.f32 %v546, %v568
        %570 = vmatmul.f32.gmra.mxu0 %v251
        %v571 = vpop.f32.mrf.mxu0
        %v572 = vadd.f32 %v549, %v571
        %573 = vdwg.mxu0
        %574 = vst [vmem:[%s232] sm:$0xff] %v431
        %575 = vst [vmem:[%s232 + $0x8] sm:$0xff] %v477
        %576 = vst [vmem:[%s232 + $0x10] sm:$0xff] %v523
        %577 = vst [vmem:[%s232 + $0x18] sm:$0xff] %v569
        %578 = vst [vmem:[%s232 + $0x20] sm:$0xff] %v434
        %579 = vst [vmem:[%s232 + $0x28] sm:$0xff] %v480
        %580 = vst [vmem:[%s232 + $0x30] sm:$0xff] %v526
        %581 = vst [vmem:[%s232 + $0x38] sm:$0xff] %v572
        %s582 = sand.u32 %s117, 1
        %s583 = sand.u32 %s117, 1
        %s584 = smul.addr %s583, 64
        %s585 = scalar_lea.vmem [#allocation4], %s584
        // Predicated region
        $region37: #{customgpt_forward.20} parent=31 // pred_check
          %p586 = pneg %p127
        $region38: #{customgpt_forward.20} parent=31 // pred_check_branch
          %588 = sbr.rel (%p586) target = $region40
        $region39: #{customgpt_forward.20} parent=31 // pred_region
          %s589 = smul.u32 2, %s21
          %s590 = smul.u32 4, %s22
          %s591 = smul.addr %s589, 8
          %s592 = sadd.s32 %s590, %s591
          %s593 = smul.addr %s592, 8
          %s594 = scalar_lea.vmem %s3, %s593
          // Predicated region
          $region41: #{customgpt_forward.20} parent=39 // pred_check
            _
          $region42: #{customgpt_forward.20} parent=39 // pred_check_branch
            %596 = sbr.rel (0) target = $region44
          $region43: #{customgpt_forward.20} parent=39 // pred_region
            // Predicated region
            $region45: #{customgpt_forward.20} parent=43 // pred_check
              _
            $region46: #{customgpt_forward.20} parent=43 // pred_check_branch
              %598 = sbr.rel (0) target = $region48
            $region47: #{customgpt_forward.20} parent=43 // pred_region
              loop: start=0, step=1, limit=1
              $region49: #{customgpt_forward.20} parent=47 // loop_pre_header
                _
              $region50: #{customgpt_forward.20} parent=47 // loop_header
                %s600 = sphi 0, %s604
                %p601 = scmp.ge.s32.totalorder %s600, 1
                %s605 = sphi %s585, %s585
                %s606 = sphi %s594, %s594
              $region51: #{customgpt_forward.20} parent=47 // loop_header_branch
                %603 = sbr.rel (%p601) target = $region55
              $region52: #{customgpt_forward.20} parent=47 // loop_body
                %v607 = vld [vmem:[%s605] sm:$0xff]
                %608 = vst [vmem:[%s606] sm:$0xff] %v607
                %v609 = vld [vmem:[%s605 + $0x8] sm:$0xff]
                %610 = vst [vmem:[%s606 + $0x8] sm:$0xff] %v609
                %v611 = vld [vmem:[%s605 + $0x10] sm:$0xff]
                %612 = vst [vmem:[%s606 + $0x10] sm:$0xff] %v611
                %v613 = vld [vmem:[%s605 + $0x18] sm:$0xff]
                %614 = vst [vmem:[%s606 + $0x18] sm:$0xff] %v613
                %v615 = vld [vmem:[%s605 + $0x20] sm:$0xff]
                %616 = vst [vmem:[%s606 + $0x40] sm:$0xff] %v615
                %v617 = vld [vmem:[%s605 + $0x28] sm:$0xff]
                %618 = vst [vmem:[%s606 + $0x48] sm:$0xff] %v617
                %v619 = vld [vmem:[%s605 + $0x30] sm:$0xff]
                %620 = vst [vmem:[%s606 + $0x50] sm:$0xff] %v619
                %v621 = vld [vmem:[%s605 + $0x38] sm:$0xff]
                %622 = vst [vmem:[%s606 + $0x58] sm:$0xff] %v621
              $region53: #{customgpt_forward.20} parent=47 // loop_footer
                %s604 = sadd.s32 1, %s600
              $region54: #{customgpt_forward.20} parent=47 // loop_footer_branch
                %599 = sbr.rel target = $region50
              $region55: #{customgpt_forward.20} parent=47 // loop_exit
                _
            $region48: #{customgpt_forward.20} parent=43 // pred_fallthru
              _
            // Predicated region
            $region56: #{customgpt_forward.20} parent=43 // pred_check
              _
            $region57: #{customgpt_forward.20} parent=43 // pred_check_branch
              %624 = sbr.rel target = $region59
            $region58: #{customgpt_forward.20} parent=43 // pred_region
              _
            $region59: #{customgpt_forward.20} parent=43 // pred_fallthru
              _
          $region44: #{customgpt_forward.20} parent=39 // pred_fallthru
            _
          %625 = vnop
        $region40: #{customgpt_forward.20} parent=31 // pred_fallthru
          _
      $region32: #{customgpt_forward.20} parent=5 // pred_fallthru
        _
      %p626 = scmp.le.s32.totalorder 2, %s12
      // Predicated region
      $region60: #{customgpt_forward.20} parent=5 // pred_check
        %p627 = pneg %p626
      $region61: #{customgpt_forward.20} parent=5 // pred_check_branch
        %629 = sbr.rel (%p627) target = $region63
      $region62: #{customgpt_forward.20} parent=5 // pred_region
        %s630 = ssub.s32 %s12, 2
        // Predicated region
        $region64: #{customgpt_forward.20} parent=62 // pred_check
          %p631 = pneg %p133
        $region65: #{customgpt_forward.20} parent=62 // pred_check_branch
          %633 = sbr.rel (%p631) target = $region67
        $region66: #{customgpt_forward.20} parent=62 // pred_region
          %s634 = sand.u32 %s118, 1
          %s635 = sand.u32 %s118, 1
          %s636 = smul.addr %s635, 64
          %s637 = scalar_lea.vmem [#allocation4], %s636
        $region67: #{customgpt_forward.20} parent=62 // pred_fallthru
          _
      $region63: #{customgpt_forward.20} parent=5 // pred_fallthru
        _
    $region6: #{customgpt_forward.20} parent=1 // loop_footer
      %s16 = sadd.s32 1, %s12
    $region7: #{customgpt_forward.20} parent=1 // loop_footer_branch
      %11 = sbr.rel target = $region3
    $region8: #{customgpt_forward.20} parent=1 // loop_exit
      _
    %638 = vsyncpa [#allocation3], 1
    %s639 = scalar_lea.sflag [#allocation3], 1
    %640 = vsyncpa %s639, 1

// kernel: customgpt_forward.21
$region0: #{customgpt_forward.21}
  #allocation0 [shape = 'u32[]', space=smem, size = 0x4, offset = 0x4, fixed_abs, tag = 'smem constant byte address 0x4 - core index']
  #allocation1 [shape = 'u32[72,128]{1,0:T(1,128)}', space=vmem, size = 0x9000, scoped, tag = 'internal scratch']
  %s0 = inlined_call_operand.vmem [shape: f32[16,1024], index: 0, kind: input, shape index: {}]
  %s1 = inlined_call_operand.vmem [shape: f32[16,512], index: 1, kind: output, shape index: {}]
  %s2 = sld [smem:[#allocation0]]
  $region14: #{customgpt_forward.21} parent=0
    _
  %s4 = ssub.s32 1, %s2
  %s5 = scalar_select 0, %s4, %s2
  // Predicated region
  $region2: #{customgpt_forward.21} parent=0 // pred_check
    _
  $region3: #{customgpt_forward.21} parent=0 // pred_check_branch
    %7 = sbr.rel (0) target = $region5
  $region4: #{customgpt_forward.21} parent=0 // pred_region
    _
  $region5: #{customgpt_forward.21} parent=0 // pred_fallthru
    _
  %v8 = vld [vmem:[%s0] sm:$0xff]
  %v9 = vld [vmem:[%s0 + $0x8] sm:$0xff]
  %v10 = vld [vmem:[%s0 + $0x10] sm:$0xff]
  %v11 = vld [vmem:[%s0 + $0x18] sm:$0xff]
  %v12 = vld [vmem:[%s0 + $0x20] sm:$0xff]
  %v13 = vld [vmem:[%s0 + $0x28] sm:$0xff]
  %v14 = vld [vmem:[%s0 + $0x30] sm:$0xff]
  %v15 = vld [vmem:[%s0 + $0x38] sm:$0xff]
  %v16 = vld [vmem:[%s0 + $0x40] sm:$0xff]
  %v17 = vld [vmem:[%s0 + $0x48] sm:$0xff]
  %v18 = vld [vmem:[%s0 + $0x50] sm:$0xff]
  %v19 = vld [vmem:[%s0 + $0x58] sm:$0xff]
  %v20 = vld [vmem:[%s0 + $0x60] sm:$0xff]
  %v21 = vld [vmem:[%s0 + $0x68] sm:$0xff]
  %v22 = vld [vmem:[%s0 + $0x70] sm:$0xff]
  %v23 = vld [vmem:[%s0 + $0x78] sm:$0xff]
  %v24 = vsub.f32 0.0, %v12
  %v25 = vsub.f32 0.0, %v13
  %v26 = vsub.f32 0.0, %v14
  %v27 = vsub.f32 0.0, %v15
  %v28 = vsub.f32 0.0, %v20
  %v29 = vsub.f32 0.0, %v21
  %v30 = vsub.f32 0.0, %v22
  %v31 = vsub.f32 0.0, %v23
  %v32 = vmul.f32 %v24, 1.442695
  %v33 = vpow.pop %v32
  %v34 = vmul.f32 %v25, 1.442695
  %v35 = vpow.pop %v34
  %v36 = vmul.f32 %v26, 1.442695
  %v37 = vpow.pop %v36
  %v38 = vmul.f32 %v27, 1.442695
  %v39 = vpow.pop %v38
  %v40 = vmul.f32 %v28, 1.442695
  %v41 = vpow.pop %v40
  %v42 = vmul.f32 %v29, 1.442695
  %v43 = vpow.pop %v42
  %v44 = vmul.f32 %v30, 1.442695
  %v45 = vpow.pop %v44
  %v46 = vmul.f32 %v31, 1.442695
  %v47 = vpow.pop %v46
  %v48 = vadd.f32 %v33, 1.0
  %v49 = vadd.f32 %v35, 1.0
  %v50 = vadd.f32 %v37, 1.0
  %v51 = vadd.f32 %v39, 1.0
  %v52 = vadd.f32 %v41, 1.0
  %v53 = vadd.f32 %v43, 1.0
  %v54 = vadd.f32 %v45, 1.0
  %v55 = vadd.f32 %v47, 1.0
  %v56 = vrcp.pop %v48
  %v57 = vmul.f32 %v48, %v56
  %v58 = vsub.f32 1.0, %v57
  %v59 = vmul.f32 %v56, %v58
  %v60 = vadd.f32 %v56, %v59
  %vm61 = vweird.f32 %v48
  %vm62 = vweird.f32 %v56
  %vm63 = vmor %vm61, %vm62
  %v64 = vsel %vm63, %v56, %v60
  %v65 = vand.u32 2147483647, %v48
  %vm66 = vcmp.eq.f32.partialorder %v65, 8.507059e+37
  %v67 = vand.u32 %v48, 2147483648
  %v68 = vor.u32 1.1754944e-38, %v67
  %v69 = vsel %vm66, %v68, %v64
  %v70 = vmul.f32 1.0, %v69
  %v71 = vrcp.pop %v49
  %v72 = vmul.f32 %v49, %v71
  %v73 = vsub.f32 1.0, %v72
  %v74 = vmul.f32 %v71, %v73
  %v75 = vadd.f32 %v71, %v74
  %vm76 = vweird.f32 %v49
  %vm77 = vweird.f32 %v71
  %vm78 = vmor %vm76, %vm77
  %v79 = vsel %vm78, %v71, %v75
  %v80 = vand.u32 2147483647, %v49
  %vm81 = vcmp.eq.f32.partialorder %v80, 8.507059e+37
  %v82 = vand.u32 %v49, 2147483648
  %v83 = vor.u32 1.1754944e-38, %v82
  %v84 = vsel %vm81, %v83, %v79
  %v85 = vmul.f32 1.0, %v84
  %v86 = vrcp.pop %v50
  %v87 = vmul.f32 %v50, %v86
  %v88 = vsub.f32 1.0, %v87
  %v89 = vmul.f32 %v86, %v88
  %v90 = vadd.f32 %v86, %v89
  %vm91 = vweird.f32 %v50
  %vm92 = vweird.f32 %v86
  %vm93 = vmor %vm91, %vm92
  %v94 = vsel %vm93, %v86, %v90
  %v95 = vand.u32 2147483647, %v50
  %vm96 = vcmp.eq.f32.partialorder %v95, 8.507059e+37
  %v97 = vand.u32 %v50, 2147483648
  %v98 = vor.u32 1.1754944e-38, %v97
  %v99 = vsel %vm96, %v98, %v94
  %v100 = vmul.f32 1.0, %v99
  %v101 = vrcp.pop %v51
  %v102 = vmul.f32 %v51, %v101
  %v103 = vsub.f32 1.0, %v102
  %v104 = vmul.f32 %v101, %v103
  %v105 = vadd.f32 %v101, %v104
  %vm106 = vweird.f32 %v51
  %vm107 = vweird.f32 %v101
  %vm108 = vmor %vm106, %vm107
  %v109 = vsel %vm108, %v101, %v105
  %v110 = vand.u32 2147483647, %v51
  %vm111 = vcmp.eq.f32.partialorder %v110, 8.507059e+37
  %v112 = vand.u32 %v51, 2147483648
  %v113 = vor.u32 1.1754944e-38, %v112
  %v114 = vsel %vm111, %v113, %v109
  %v115 = vmul.f32 1.0, %v114
  %v116 = vrcp.pop %v52
  %v117 = vmul.f32 %v52, %v116
  %v118 = vsub.f32 1.0, %v117
  %v119 = vmul.f32 %v116, %v118
  %v120 = vadd.f32 %v116, %v119
  %vm121 = vweird.f32 %v52
  %vm122 = vweird.f32 %v116
  %vm123 = vmor %vm121, %vm122
  %v124 = vsel %vm123, %v116, %v120
  %v125 = vand.u32 2147483647, %v52
  %vm126 = vcmp.eq.f32.partialorder %v125, 8.507059e+37
  %v127 = vand.u32 %v52, 2147483648
  %v128 = vor.u32 1.1754944e-38, %v127
  %v129 = vsel %vm126, %v128, %v124
  %v130 = vmul.f32 1.0, %v129
  %v131 = vrcp.pop %v53
  %v132 = vmul.f32 %v53, %v131
  %v133 = vsub.f32 1.0, %v132
  %v134 = vmul.f32 %v131, %v133
  %v135 = vadd.f32 %v131, %v134
  %vm136 = vweird.f32 %v53
  %vm137 = vweird.f32 %v131
  %vm138 = vmor %vm136, %vm137
  %v139 = vsel %vm138, %v131, %v135
  %v140 = vand.u32 2147483647, %v53
  %vm141 = vcmp.eq.f32.partialorder %v140, 8.507059e+37
  %v142 = vand.u32 %v53, 2147483648
  %v143 = vor.u32 1.1754944e-38, %v142
  %v144 = vsel %vm141, %v143, %v139
  %v145 = vmul.f32 1.0, %v144
  %v146 = vrcp.pop %v54
  %v147 = vmul.f32 %v54, %v146
  %v148 = vsub.f32 1.0, %v147
  %v149 = vmul.f32 %v146, %v148
  %v150 = vadd.f32 %v146, %v149
  %vm151 = vweird.f32 %v54
  %vm152 = vweird.f32 %v146
  %vm153 = vmor %vm151, %vm152
  %v154 = vsel %vm153, %v146, %v150
  %v155 = vand.u32 2147483647, %v54
  %vm156 = vcmp.eq.f32.partialorder %v155, 8.507059e+37
  %v157 = vand.u32 %v54, 2147483648
  %v158 = vor.u32 1.1754944e-38, %v157
  %v159 = vsel %vm156, %v158, %v154
  %v160 = vmul.f32 1.0, %v159
  %v161 = vrcp.pop %v55
  %v162 = vmul.f32 %v55, %v161
  %v163 = vsub.f32 1.0, %v162
  %v164 = vmul.f32 %v161, %v163
  %v165 = vadd.f32 %v161, %v164
  %vm166 = vweird.f32 %v55
  %vm167 = vweird.f32 %v161
  %vm168 = vmor %vm166, %vm167
  %v169 = vsel %vm168, %v161, %v165
  %v170 = vand.u32 2147483647, %v55
  %vm171 = vcmp.eq.f32.partialorder %v170, 8.507059e+37
  %v172 = vand.u32 %v55, 2147483648
  %v173 = vor.u32 1.1754944e-38, %v172
  %v174 = vsel %vm171, %v173, %v169
  %v175 = vmul.f32 1.0, %v174
  %v176 = vmul.f32 %v8, %v12
  %v177 = vmul.f32 %v9, %v13
  %v178 = vmul.f32 %v10, %v14
  %v179 = vmul.f32 %v11, %v15
  %v180 = vmul.f32 %v16, %v20
  %v181 = vmul.f32 %v17, %v21
  %v182 = vmul.f32 %v18, %v22
  %v183 = vmul.f32 %v19, %v23
  %v184 = vmul.f32 %v176, %v70
  %v185 = vmul.f32 %v177, %v85
  %v186 = vmul.f32 %v178, %v100
  %v187 = vmul.f32 %v179, %v115
  %v188 = vmul.f32 %v180, %v130
  %v189 = vmul.f32 %v181, %v145
  %v190 = vmul.f32 %v182, %v160
  %v191 = vmul.f32 %v183, %v175
  %192 = vst [vmem:[%s1] sm:$0xff] %v184
  %193 = vst [vmem:[%s1 + $0x8] sm:$0xff] %v185
  %194 = vst [vmem:[%s1 + $0x10] sm:$0xff] %v186
  %195 = vst [vmem:[%s1 + $0x18] sm:$0xff] %v187
  %196 = vst [vmem:[%s1 + $0x20] sm:$0xff] %v188
  %197 = vst [vmem:[%s1 + $0x28] sm:$0xff] %v189
  %198 = vst [vmem:[%s1 + $0x30] sm:$0xff] %v190
  %199 = vst [vmem:[%s1 + $0x38] sm:$0xff] %v191
  // Predicated region
  $region6: #{customgpt_forward.21} parent=0 // pred_check
    _
  $region7: #{customgpt_forward.21} parent=0 // pred_check_branch
    %201 = sbr.rel (0) target = $region9
  $region8: #{customgpt_forward.21} parent=0 // pred_region
    _
  $region9: #{customgpt_forward.21} parent=0 // pred_fallthru
    _
  // Predicated region
  $region10: #{customgpt_forward.21} parent=0 // pred_check
    _
  $region11: #{customgpt_forward.21} parent=0 // pred_check_branch
    %203 = sbr.rel (0) target = $region13
  $region12: #{customgpt_forward.21} parent=0 // pred_region
    _
  $region13: #{customgpt_forward.21} parent=0 // pred_fallthru
    _

// kernel: customgpt_forward.22
$region0: #{customgpt_forward.22}
  #allocation0 [shape = 'u32[]', space=smem, size = 0x4, offset = 0x4, fixed_abs, tag = 'smem constant byte address 0x4 - core index']
  #allocation1 [shape = 'u32[72,128]{1,0:T(1,128)}', space=vmem, size = 0x9000, scoped, tag = 'internal scratch']
  %s0 = inlined_call_operand.vmem [shape: f32[16,512], index: 0, kind: input, shape index: {}]
  %s1 = inlined_call_operand.hbm [shape: f32[512,256], index: 1, kind: input, shape index: {}]
  %s2 = inlined_call_operand.vmem [shape: f32[1,256], index: 2, kind: input, shape index: {}]
  %s3 = inlined_call_operand.vmem [shape: f32[16,256], index: 3, kind: output, shape index: {}]
  %s4 = sld [smem:[#allocation0]]
  $region26: #{customgpt_forward.22} parent=0
    _
  %s6 = ssub.s32 1, %s4
  %s7 = scalar_select 0, %s6, %s4
  $region1: #{customgpt_forward.22} parent=0
    #allocation2 [shape = 'u8[524288]{0}', space=vmem, size = 0x80000, scoped, tag = 'input window, operand 1, single buffered']
    #allocation3 [shape = 's32[1]{0}', space=sflag, size = 0x4, scoped, tag = 'scoped memory for customgpt_forward.22']
    %8 = vsyncpa [#allocation3], 0
    // Predicated region
    $region2: #{customgpt_forward.22} parent=1 // pred_check
      _
    $region3: #{customgpt_forward.22} parent=1 // pred_check_branch
      %10 = sbr.rel (0) target = $region5
    $region4: #{customgpt_forward.22} parent=1 // pred_region
      _
    $region5: #{customgpt_forward.22} parent=1 // pred_fallthru
      _
    // Predicated region
    $region6: #{customgpt_forward.22} parent=1 // pred_check
      _
    $region7: #{customgpt_forward.22} parent=1 // pred_check_branch
      %12 = sbr.rel (0) target = $region9
    $region8: #{customgpt_forward.22} parent=1 // pred_region
      %14 = vsyncadd [#allocation3], 0
      %s15 = sshll.u32 %s1, 4
      %s16 = int_to_ptr.hbm [resolvable:$true] %s15
      %s17 = sshll.u32 [#allocation2], 4
      %s18 = int_to_ptr.vmem [resolvable:$true] %s17
      %23 = dma.hbm_to_vmem [thread:$0]  %s16, 16384, %s18, [#allocation3], 256, 256, 16
    $region9: #{customgpt_forward.22} parent=1 // pred_fallthru
      _
    // Predicated region
    $region10: #{customgpt_forward.22} parent=1 // pred_check
      _
    $region11: #{customgpt_forward.22} parent=1 // pred_check_branch
      %25 = sbr.rel (0) target = $region13
    $region12: #{customgpt_forward.22} parent=1 // pred_region
      _
    $region13: #{customgpt_forward.22} parent=1 // pred_fallthru
      _
    // Predicated region
    $region14: #{customgpt_forward.22} parent=1 // pred_check
      _
    $region15: #{customgpt_forward.22} parent=1 // pred_check_branch
      %27 = sbr.rel (0) target = $region17
    $region16: #{customgpt_forward.22} parent=1 // pred_region
      %29 = dma.done [#allocation3], 16384
    $region17: #{customgpt_forward.22} parent=1 // pred_fallthru
      _
    %v30 = vld [vmem:[%s0] sm:$0xff]
    %v31 = vld [vmem:[%s0 + $0x8] sm:$0xff]
    %v32 = vld [vmem:[%s0 + $0x10] sm:$0xff]
    %v33 = vld [vmem:[%s0 + $0x18] sm:$0xff]
    %v34 = vld [vmem:[%s0 + $0x20] sm:$0xff]
    %v35 = vld [vmem:[%s0 + $0x28] sm:$0xff]
    %v36 = vld [vmem:[%s0 + $0x30] sm:$0xff]
    %v37 = vld [vmem:[%s0 + $0x38] sm:$0xff]
    %v38 = vld [vmem:[#allocation2] sm:$0xff]
    %v39 = vld [vmem:[#allocation2 + $0x8] sm:$0xff]
    %v40 = vld [vmem:[#allocation2 + $0x10] sm:$0xff]
    %v41 = vld [vmem:[#allocation2 + $0x18] sm:$0xff]
    %v42 = vld [vmem:[#allocation2 + $0x20] sm:$0xff]
    %v43 = vld [vmem:[#allocation2 + $0x28] sm:$0xff]
    %v44 = vld [vmem:[#allocation2 + $0x30] sm:$0xff]
    %v45 = vld [vmem:[#allocation2 + $0x38] sm:$0xff]
    %v46 = vld [vmem:[#allocation2 + $0x40] sm:$0xff]
    %v47 = vld [vmem:[#allocation2 + $0x48] sm:$0xff]
    %v48 = vld [vmem:[#allocation2 + $0x50] sm:$0xff]
    %v49 = vld [vmem:[#allocation2 + $0x58] sm:$0xff]
    %v50 = vld [vmem:[#allocation2 + $0x60] sm:$0xff]
    %v51 = vld [vmem:[#allocation2 + $0x68] sm:$0xff]
    %v52 = vld [vmem:[#allocation2 + $0x70] sm:$0xff]
    %v53 = vld [vmem:[#allocation2 + $0x78] sm:$0xff]
    %v54 = vld [vmem:[#allocation2 + $0x80] sm:$0xff]
    %v55 = vld [vmem:[#allocation2 + $0x88] sm:$0xff]
    %v56 = vld [vmem:[#allocation2 + $0x90] sm:$0xff]
    %v57 = vld [vmem:[#allocation2 + $0x98] sm:$0xff]
    %v58 = vld [vmem:[#allocation2 + $0xa0] sm:$0xff]
    %v59 = vld [vmem:[#allocation2 + $0xa8] sm:$0xff]
    %v60 = vld [vmem:[#allocation2 + $0xb0] sm:$0xff]
    %v61 = vld [vmem:[#allocation2 + $0xb8] sm:$0xff]
    %v62 = vld [vmem:[#allocation2 + $0xc0] sm:$0xff]
    %v63 = vld [vmem:[#allocation2 + $0xc8] sm:$0xff]
    %v64 = vld [vmem:[#allocation2 + $0xd0] sm:$0xff]
    %v65 = vld [vmem:[#allocation2 + $0xd8] sm:$0xff]
    %v66 = vld [vmem:[#allocation2 + $0xe0] sm:$0xff]
    %v67 = vld [vmem:[#allocation2 + $0xe8] sm:$0xff]
    %v68 = vld [vmem:[#allocation2 + $0xf0] sm:$0xff]
    %v69 = vld [vmem:[#allocation2 + $0xf8] sm:$0xff]
    %v70 = vld [vmem:[#allocation2 + $0x100] sm:$0xff]
    %v71 = vld [vmem:[#allocation2 + $0x108] sm:$0xff]
    %v72 = vld [vmem:[#allocation2 + $0x110] sm:$0xff]
    %v73 = vld [vmem:[#allocation2 + $0x118] sm:$0xff]
    %v74 = vld [vmem:[#allocation2 + $0x120] sm:$0xff]
    %v75 = vld [vmem:[#allocation2 + $0x128] sm:$0xff]
    %v76 = vld [vmem:[#allocation2 + $0x130] sm:$0xff]
    %v77 = vld [vmem:[#allocation2 + $0x138] sm:$0xff]
    %v78 = vld [vmem:[#allocation2 + $0x140] sm:$0xff]
    %v79 = vld [vmem:[#allocation2 + $0x148] sm:$0xff]
    %v80 = vld [vmem:[#allocation2 + $0x150] sm:$0xff]
    %v81 = vld [vmem:[#allocation2 + $0x158] sm:$0xff]
    %v82 = vld [vmem:[#allocation2 + $0x160] sm:$0xff]
    %v83 = vld [vmem:[#allocation2 + $0x168] sm:$0xff]
    %v84 = vld [vmem:[#allocation2 + $0x170] sm:$0xff]
    %v85 = vld [vmem:[#allocation2 + $0x178] sm:$0xff]
    %v86 = vld [vmem:[#allocation2 + $0x180] sm:$0xff]
    %v87 = vld [vmem:[#allocation2 + $0x188] sm:$0xff]
    %v88 = vld [vmem:[#allocation2 + $0x190] sm:$0xff]
    %v89 = vld [vmem:[#allocation2 + $0x198] sm:$0xff]
    %v90 = vld [vmem:[#allocation2 + $0x1a0] sm:$0xff]
    %v91 = vld [vmem:[#allocation2 + $0x1a8] sm:$0xff]
    %v92 = vld [vmem:[#allocation2 + $0x1b0] sm:$0xff]
    %v93 = vld [vmem:[#allocation2 + $0x1b8] sm:$0xff]
    %v94 = vld [vmem:[#allocation2 + $0x1c0] sm:$0xff]
    %v95 = vld [vmem:[#allocation2 + $0x1c8] sm:$0xff]
    %v96 = vld [vmem:[#allocation2 + $0x1d0] sm:$0xff]
    %v97 = vld [vmem:[#allocation2 + $0x1d8] sm:$0xff]
    %v98 = vld [vmem:[#allocation2 + $0x1e0] sm:$0xff]
    %v99 = vld [vmem:[#allocation2 + $0x1e8] sm:$0xff]
    %v100 = vld [vmem:[#allocation2 + $0x1f0] sm:$0xff]
    %v101 = vld [vmem:[#allocation2 + $0x1f8] sm:$0xff]
    %v102 = vld [vmem:[#allocation2 + $0x200] sm:$0xff]
    %v103 = vld [vmem:[#allocation2 + $0x208] sm:$0xff]
    %v104 = vld [vmem:[#allocation2 + $0x210] sm:$0xff]
    %v105 = vld [vmem:[#allocation2 + $0x218] sm:$0xff]
    %v106 = vld [vmem:[#allocation2 + $0x220] sm:$0xff]
    %v107 = vld [vmem:[#allocation2 + $0x228] sm:$0xff]
    %v108 = vld [vmem:[#allocation2 + $0x230] sm:$0xff]
    %v109 = vld [vmem:[#allocation2 + $0x238] sm:$0xff]
    %v110 = vld [vmem:[#allocation2 + $0x240] sm:$0xff]
    %v111 = vld [vmem:[#allocation2 + $0x248] sm:$0xff]
    %v112 = vld [vmem:[#allocation2 + $0x250] sm:$0xff]
    %v113 = vld [vmem:[#allocation2 + $0x258] sm:$0xff]
    %v114 = vld [vmem:[#allocation2 + $0x260] sm:$0xff]
    %v115 = vld [vmem:[#allocation2 + $0x268] sm:$0xff]
    %v116 = vld [vmem:[#allocation2 + $0x270] sm:$0xff]
    %v117 = vld [vmem:[#allocation2 + $0x278] sm:$0xff]
    %v118 = vld [vmem:[#allocation2 + $0x280] sm:$0xff]
    %v119 = vld [vmem:[#allocation2 + $0x288] sm:$0xff]
    %v120 = vld [vmem:[#allocation2 + $0x290] sm:$0xff]
    %v121 = vld [vmem:[#allocation2 + $0x298] sm:$0xff]
    %v122 = vld [vmem:[#allocation2 + $0x2a0] sm:$0xff]
    %v123 = vld [vmem:[#allocation2 + $0x2a8] sm:$0xff]
    %v124 = vld [vmem:[#allocation2 + $0x2b0] sm:$0xff]
    %v125 = vld [vmem:[#allocation2 + $0x2b8] sm:$0xff]
    %v126 = vld [vmem:[#allocation2 + $0x2c0] sm:$0xff]
    %v127 = vld [vmem:[#allocation2 + $0x2c8] sm:$0xff]
    %v128 = vld [vmem:[#allocation2 + $0x2d0] sm:$0xff]
    %v129 = vld [vmem:[#allocation2 + $0x2d8] sm:$0xff]
    %v130 = vld [vmem:[#allocation2 + $0x2e0] sm:$0xff]
    %v131 = vld [vmem:[#allocation2 + $0x2e8] sm:$0xff]
    %v132 = vld [vmem:[#allocation2 + $0x2f0] sm:$0xff]
    %v133 = vld [vmem:[#allocation2 + $0x2f8] sm:$0xff]
    %v134 = vld [vmem:[#allocation2 + $0x300] sm:$0xff]
    %v135 = vld [vmem:[#allocation2 + $0x308] sm:$0xff]
    %v136 = vld [vmem:[#allocation2 + $0x310] sm:$0xff]
    %v137 = vld [vmem:[#allocation2 + $0x318] sm:$0xff]
    %v138 = vld [vmem:[#allocation2 + $0x320] sm:$0xff]
    %v139 = vld [vmem:[#allocation2 + $0x328] sm:$0xff]
    %v140 = vld [vmem:[#allocation2 + $0x330] sm:$0xff]
    %v141 = vld [vmem:[#allocation2 + $0x338] sm:$0xff]
    %v142 = vld [vmem:[#allocation2 + $0x340] sm:$0xff]
    %v143 = vld [vmem:[#allocation2 + $0x348] sm:$0xff]
    %v144 = vld [vmem:[#allocation2 + $0x350] sm:$0xff]
    %v145 = vld [vmem:[#allocation2 + $0x358] sm:$0xff]
    %v146 = vld [vmem:[#allocation2 + $0x360] sm:$0xff]
    %v147 = vld [vmem:[#allocation2 + $0x368] sm:$0xff]
    %v148 = vld [vmem:[#allocation2 + $0x370] sm:$0xff]
    %v149 = vld [vmem:[#allocation2 + $0x378] sm:$0xff]
    %v150 = vld [vmem:[#allocation2 + $0x380] sm:$0xff]
    %v151 = vld [vmem:[#allocation2 + $0x388] sm:$0xff]
    %v152 = vld [vmem:[#allocation2 + $0x390] sm:$0xff]
    %v153 = vld [vmem:[#allocation2 + $0x398] sm:$0xff]
    %v154 = vld [vmem:[#allocation2 + $0x3a0] sm:$0xff]
    %v155 = vld [vmem:[#allocation2 + $0x3a8] sm:$0xff]
    %v156 = vld [vmem:[#allocation2 + $0x3b0] sm:$0xff]
    %v157 = vld [vmem:[#allocation2 + $0x3b8] sm:$0xff]
    %v158 = vld [vmem:[#allocation2 + $0x3c0] sm:$0xff]
    %v159 = vld [vmem:[#allocation2 + $0x3c8] sm:$0xff]
    %v160 = vld [vmem:[#allocation2 + $0x3d0] sm:$0xff]
    %v161 = vld [vmem:[#allocation2 + $0x3d8] sm:$0xff]
    %v162 = vld [vmem:[#allocation2 + $0x3e0] sm:$0xff]
    %v163 = vld [vmem:[#allocation2 + $0x3e8] sm:$0xff]
    %v164 = vld [vmem:[#allocation2 + $0x3f0] sm:$0xff]
    %v165 = vld [vmem:[#allocation2 + $0x3f8] sm:$0xff]
    %v166 = vld [vmem:[%s2] sm:$0x3]
    %v168 = vperm.slane %v166, 0
    %v169 = vperm.slane %v166, 1
    %172 = vmatpush.msra.mxu0 %v68
    %173 = vmatpush.msra.mxu0 %v66
    %174 = vmatpush.msra.mxu0 %v64
    %175 = vmatpush.msra.mxu0 %v62
    %176 = vmatpush.msra.mxu0 %v60
    %177 = vmatpush.msra.mxu0 %v58
    %178 = vmatpush.msra.mxu0 %v56
    %179 = vmatpush.msra.mxu0 %v54
    %180 = vmatpush.msra.mxu0 %v52
    %181 = vmatpush.msra.mxu0 %v50
    %182 = vmatpush.msra.mxu0 %v48
    %183 = vmatpush.msra.mxu0 %v46
    %184 = vmatpush.msra.mxu0 %v44
    %185 = vmatpush.msra.mxu0 %v42
    %186 = vmatpush.msra.mxu0 %v40
    %187 = vmatpush.msra.mxu0 %v38
    %188 = vmatmul.f32.gmra.mxu0 %v30
    %v189 = vpop.f32.mrf.mxu0
    %v190 = vadd.f32 %v168, %v189
    %191 = vmatmul.f32.gmra.mxu0 %v34
    %v192 = vpop.f32.mrf.mxu0
    %v193 = vadd.f32 %v168, %v192
    %194 = vdwg.mxu0
    %195 = vmatpush.msra.mxu0 %v100
    %196 = vmatpush.msra.mxu0 %v98
    %197 = vmatpush.msra.mxu0 %v96
    %198 = vmatpush.msra.mxu0 %v94
    %199 = vmatpush.msra.mxu0 %v92
    %200 = vmatpush.msra.mxu0 %v90
    %201 = vmatpush.msra.mxu0 %v88
    %202 = vmatpush.msra.mxu0 %v86
    %203 = vmatpush.msra.mxu0 %v84
    %204 = vmatpush.msra.mxu0 %v82
    %205 = vmatpush.msra.mxu0 %v80
    %206 = vmatpush.msra.mxu0 %v78
    %207 = vmatpush.msra.mxu0 %v76
    %208 = vmatpush.msra.mxu0 %v74
    %209 = vmatpush.msra.mxu0 %v72
    %210 = vmatpush.msra.mxu0 %v70
    %211 = vmatmul.f32.gmra.mxu0 %v31
    %v212 = vpop.f32.mrf.mxu0
    %v213 = vadd.f32 %v190, %v212
    %214 = vmatmul.f32.gmra.mxu0 %v35
    %v215 = vpop.f32.mrf.mxu0
    %v216 = vadd.f32 %v193, %v215
    %217 = vdwg.mxu0
    %218 = vmatpush.msra.mxu0 %v132
    %219 = vmatpush.msra.mxu0 %v130
    %220 = vmatpush.msra.mxu0 %v128
    %221 = vmatpush.msra.mxu0 %v126
    %222 = vmatpush.msra.mxu0 %v124
    %223 = vmatpush.msra.mxu0 %v122
    %224 = vmatpush.msra.mxu0 %v120
    %225 = vmatpush.msra.mxu0 %v118
    %226 = vmatpush.msra.mxu0 %v116
    %227 = vmatpush.msra.mxu0 %v114
    %228 = vmatpush.msra.mxu0 %v112
    %229 = vmatpush.msra.mxu0 %v110
    %230 = vmatpush.msra.mxu0 %v108
    %231 = vmatpush.msra.mxu0 %v106
    %232 = vmatpush.msra.mxu0 %v104
    %233 = vmatpush.msra.mxu0 %v102
    %234 = vmatmul.f32.gmra.mxu0 %v32
    %v235 = vpop.f32.mrf.mxu0
    %v236 = vadd.f32 %v213, %v235
    %237 = vmatmul.f32.gmra.mxu0 %v36
    %v238 = vpop.f32.mrf.mxu0
    %v239 = vadd.f32 %v216, %v238
    %240 = vdwg.mxu0
    %241 = vmatpush.msra.mxu0 %v164
    %242 = vmatpush.msra.mxu0 %v162
    %243 = vmatpush.msra.mxu0 %v160
    %244 = vmatpush.msra.mxu0 %v158
    %245 = vmatpush.msra.mxu0 %v156
    %246 = vmatpush.msra.mxu0 %v154
    %247 = vmatpush.msra.mxu0 %v152
    %248 = vmatpush.msra.mxu0 %v150
    %249 = vmatpush.msra.mxu0 %v148
    %250 = vmatpush.msra.mxu0 %v146
    %251 = vmatpush.msra.mxu0 %v144
    %252 = vmatpush.msra.mxu0 %v142
    %253 = vmatpush.msra.mxu0 %v140
    %254 = vmatpush.msra.mxu0 %v138
    %255 = vmatpush.msra.mxu0 %v136
    %256 = vmatpush.msra.mxu0 %v134
    %257 = vmatmul.f32.gmra.mxu0 %v33
    %v258 = vpop.f32.mrf.mxu0
    %v259 = vadd.f32 %v236, %v258
    %260 = vmatmul.f32.gmra.mxu0 %v37
    %v261 = vpop.f32.mrf.mxu0
    %v262 = vadd.f32 %v239, %v261
    %263 = vdwg.mxu0
    %264 = vmatpush.msra.mxu0 %v69
    %265 = vmatpush.msra.mxu0 %v67
    %266 = vmatpush.msra.mxu0 %v65
    %267 = vmatpush.msra.mxu0 %v63
    %268 = vmatpush.msra.mxu0 %v61
    %269 = vmatpush.msra.mxu0 %v59
    %270 = vmatpush.msra.mxu0 %v57
    %271 = vmatpush.msra.mxu0 %v55
    %272 = vmatpush.msra.mxu0 %v53
    %273 = vmatpush.msra.mxu0 %v51
    %274 = vmatpush.msra.mxu0 %v49
    %275 = vmatpush.msra.mxu0 %v47
    %276 = vmatpush.msra.mxu0 %v45
    %277 = vmatpush.msra.mxu0 %v43
    %278 = vmatpush.msra.mxu0 %v41
    %279 = vmatpush.msra.mxu0 %v39
    %280 = vmatmul.f32.gmra.mxu0 %v30
    %v281 = vpop.f32.mrf.mxu0
    %v282 = vadd.f32 %v169, %v281
    %283 = vmatmul.f32.gmra.mxu0 %v34
    %v284 = vpop.f32.mrf.mxu0
    %v285 = vadd.f32 %v169, %v284
    %286 = vdwg.mxu0
    %287 = vmatpush.msra.mxu0 %v101
    %288 = vmatpush.msra.mxu0 %v99
    %289 = vmatpush.msra.mxu0 %v97
    %290 = vmatpush.msra.mxu0 %v95
    %291 = vmatpush.msra.mxu0 %v93
    %292 = vmatpush.msra.mxu0 %v91
    %293 = vmatpush.msra.mxu0 %v89
    %294 = vmatpush.msra.mxu0 %v87
    %295 = vmatpush.msra.mxu0 %v85
    %296 = vmatpush.msra.mxu0 %v83
    %297 = vmatpush.msra.mxu0 %v81
    %298 = vmatpush.msra.mxu0 %v79
    %299 = vmatpush.msra.mxu0 %v77
    %300 = vmatpush.msra.mxu0 %v75
    %301 = vmatpush.msra.mxu0 %v73
    %302 = vmatpush.msra.mxu0 %v71
    %303 = vmatmul.f32.gmra.mxu0 %v31
    %v304 = vpop.f32.mrf.mxu0
    %v305 = vadd.f32 %v282, %v304
    %306 = vmatmul.f32.gmra.mxu0 %v35
    %v307 = vpop.f32.mrf.mxu0
    %v308 = vadd.f32 %v285, %v307
    %309 = vdwg.mxu0
    %310 = vmatpush.msra.mxu0 %v133
    %311 = vmatpush.msra.mxu0 %v131
    %312 = vmatpush.msra.mxu0 %v129
    %313 = vmatpush.msra.mxu0 %v127
    %314 = vmatpush.msra.mxu0 %v125
    %315 = vmatpush.msra.mxu0 %v123
    %316 = vmatpush.msra.mxu0 %v121
    %317 = vmatpush.msra.mxu0 %v119
    %318 = vmatpush.msra.mxu0 %v117
    %319 = vmatpush.msra.mxu0 %v115
    %320 = vmatpush.msra.mxu0 %v113
    %321 = vmatpush.msra.mxu0 %v111
    %322 = vmatpush.msra.mxu0 %v109
    %323 = vmatpush.msra.mxu0 %v107
    %324 = vmatpush.msra.mxu0 %v105
    %325 = vmatpush.msra.mxu0 %v103
    %326 = vmatmul.f32.gmra.mxu0 %v32
    %v327 = vpop.f32.mrf.mxu0
    %v328 = vadd.f32 %v305, %v327
    %329 = vmatmul.f32.gmra.mxu0 %v36
    %v330 = vpop.f32.mrf.mxu0
    %v331 = vadd.f32 %v308, %v330
    %332 = vdwg.mxu0
    %333 = vmatpush.msra.mxu0 %v165
    %334 = vmatpush.msra.mxu0 %v163
    %335 = vmatpush.msra.mxu0 %v161
    %336 = vmatpush.msra.mxu0 %v159
    %337 = vmatpush.msra.mxu0 %v157
    %338 = vmatpush.msra.mxu0 %v155
    %339 = vmatpush.msra.mxu0 %v153
    %340 = vmatpush.msra.mxu0 %v151
    %341 = vmatpush.msra.mxu0 %v149
    %342 = vmatpush.msra.mxu0 %v147
    %343 = vmatpush.msra.mxu0 %v145
    %344 = vmatpush.msra.mxu0 %v143
    %345 = vmatpush.msra.mxu0 %v141
    %346 = vmatpush.msra.mxu0 %v139
    %347 = vmatpush.msra.mxu0 %v137
    %348 = vmatpush.msra.mxu0 %v135
    %349 = vmatmul.f32.gmra.mxu0 %v33
    %v350 = vpop.f32.mrf.mxu0
    %v351 = vadd.f32 %v328, %v350
    %352 = vmatmul.f32.gmra.mxu0 %v37
    %v353 = vpop.f32.mrf.mxu0
    %v354 = vadd.f32 %v331, %v353
    %355 = vdwg.mxu0
    %356 = vst [vmem:[%s3] sm:$0xff] %v259
    %357 = vst [vmem:[%s3 + $0x8] sm:$0xff] %v351
    %358 = vst [vmem:[%s3 + $0x10] sm:$0xff] %v262
    %359 = vst [vmem:[%s3 + $0x18] sm:$0xff] %v354
    // Predicated region
    $region18: #{customgpt_forward.22} parent=1 // pred_check
      _
    $region19: #{customgpt_forward.22} parent=1 // pred_check_branch
      %361 = sbr.rel (0) target = $region21
    $region20: #{customgpt_forward.22} parent=1 // pred_region
      _
    $region21: #{customgpt_forward.22} parent=1 // pred_fallthru
      _
    // Predicated region
    $region22: #{customgpt_forward.22} parent=1 // pred_check
      _
    $region23: #{customgpt_forward.22} parent=1 // pred_check_branch
      %363 = sbr.rel (0) target = $region25
    $region24: #{customgpt_forward.22} parent=1 // pred_region
      _
    $region25: #{customgpt_forward.22} parent=1 // pred_fallthru
      _
    %364 = vsyncpa [#allocation3], 1

// kernel: customgpt_forward.31
$region0: #{customgpt_forward.31}
  #allocation0 [shape = 'u32[]', space=smem, size = 0x4, offset = 0x4, fixed_abs, tag = 'smem constant byte address 0x4 - core index']
  #allocation1 [shape = 'u32[72,128]{1,0:T(1,128)}', space=vmem, size = 0x9000, scoped, tag = 'internal scratch']
  %s0 = inlined_call_operand.vmem [shape: f32[16,256], index: 0, kind: input, shape index: {}]
  %s1 = inlined_call_operand.vmem [shape: f32[256,256], index: 1, kind: input, shape index: {}]
  %s2 = inlined_call_operand.vmem [shape: f32[1,256], index: 2, kind: input, shape index: {}]
  %s3 = inlined_call_operand.hbm [shape: f32[16,256], index: 3, kind: output, shape index: {}]
  %s4 = sld [smem:[#allocation0]]
  $region22: #{customgpt_forward.31} parent=0
    _
  %s6 = ssub.s32 1, %s4
  %s7 = scalar_select 0, %s6, %s4
  $region1: #{customgpt_forward.31} parent=0
    #allocation2 [shape = 'u8[16384]{0}', space=vmem, size = 0x4000, scoped, tag = 'output window, operand 0, single buffered']
    #allocation3 [shape = 's32[1]{0}', space=sflag, size = 0x4, scoped, tag = 'scoped memory for customgpt_forward.31']
    %8 = vsyncpa [#allocation3], 0
    // Predicated region
    $region2: #{customgpt_forward.31} parent=1 // pred_check
      _
    $region3: #{customgpt_forward.31} parent=1 // pred_check_branch
      %10 = sbr.rel (0) target = $region5
    $region4: #{customgpt_forward.31} parent=1 // pred_region
      _
    $region5: #{customgpt_forward.31} parent=1 // pred_fallthru
      _
    // Predicated region
    $region6: #{customgpt_forward.31} parent=1 // pred_check
      _
    $region7: #{customgpt_forward.31} parent=1 // pred_check_branch
      %12 = sbr.rel (0) target = $region9
    $region8: #{customgpt_forward.31} parent=1 // pred_region
      _
    $region9: #{customgpt_forward.31} parent=1 // pred_fallthru
      _
    // Predicated region
    $region10: #{customgpt_forward.31} parent=1 // pred_check
      _
    $region11: #{customgpt_forward.31} parent=1 // pred_check_branch
      %14 = sbr.rel (0) target = $region13
    $region12: #{customgpt_forward.31} parent=1 // pred_region
      _
    $region13: #{customgpt_forward.31} parent=1 // pred_fallthru
      _
    %v15 = vld [vmem:[%s0] sm:$0xff]
    %v16 = vld [vmem:[%s0 + $0x8] sm:$0xff]
    %v17 = vld [vmem:[%s0 + $0x10] sm:$0xff]
    %v18 = vld [vmem:[%s0 + $0x18] sm:$0xff]
    %v19 = vld [vmem:[%s1] sm:$0xff]
    %v20 = vld [vmem:[%s1 + $0x8] sm:$0xff]
    %v21 = vld [vmem:[%s1 + $0x10] sm:$0xff]
    %v22 = vld [vmem:[%s1 + $0x18] sm:$0xff]
    %v23 = vld [vmem:[%s1 + $0x20] sm:$0xff]
    %v24 = vld [vmem:[%s1 + $0x28] sm:$0xff]
    %v25 = vld [vmem:[%s1 + $0x30] sm:$0xff]
    %v26 = vld [vmem:[%s1 + $0x38] sm:$0xff]
    %v27 = vld [vmem:[%s1 + $0x40] sm:$0xff]
    %v28 = vld [vmem:[%s1 + $0x48] sm:$0xff]
    %v29 = vld [vmem:[%s1 + $0x50] sm:$0xff]
    %v30 = vld [vmem:[%s1 + $0x58] sm:$0xff]
    %v31 = vld [vmem:[%s1 + $0x60] sm:$0xff]
    %v32 = vld [vmem:[%s1 + $0x68] sm:$0xff]
    %v33 = vld [vmem:[%s1 + $0x70] sm:$0xff]
    %v34 = vld [vmem:[%s1 + $0x78] sm:$0xff]
    %v35 = vld [vmem:[%s1 + $0x80] sm:$0xff]
    %v36 = vld [vmem:[%s1 + $0x88] sm:$0xff]
    %v37 = vld [vmem:[%s1 + $0x90] sm:$0xff]
    %v38 = vld [vmem:[%s1 + $0x98] sm:$0xff]
    %v39 = vld [vmem:[%s1 + $0xa0] sm:$0xff]
    %v40 = vld [vmem:[%s1 + $0xa8] sm:$0xff]
    %v41 = vld [vmem:[%s1 + $0xb0] sm:$0xff]
    %v42 = vld [vmem:[%s1 + $0xb8] sm:$0xff]
    %v43 = vld [vmem:[%s1 + $0xc0] sm:$0xff]
    %v44 = vld [vmem:[%s1 + $0xc8] sm:$0xff]
    %v45 = vld [vmem:[%s1 + $0xd0] sm:$0xff]
    %v46 = vld [vmem:[%s1 + $0xd8] sm:$0xff]
    %v47 = vld [vmem:[%s1 + $0xe0] sm:$0xff]
    %v48 = vld [vmem:[%s1 + $0xe8] sm:$0xff]
    %v49 = vld [vmem:[%s1 + $0xf0] sm:$0xff]
    %v50 = vld [vmem:[%s1 + $0xf8] sm:$0xff]
    %v51 = vld [vmem:[%s1 + $0x100] sm:$0xff]
    %v52 = vld [vmem:[%s1 + $0x108] sm:$0xff]
    %v53 = vld [vmem:[%s1 + $0x110] sm:$0xff]
    %v54 = vld [vmem:[%s1 + $0x118] sm:$0xff]
    %v55 = vld [vmem:[%s1 + $0x120] sm:$0xff]
    %v56 = vld [vmem:[%s1 + $0x128] sm:$0xff]
    %v57 = vld [vmem:[%s1 + $0x130] sm:$0xff]
    %v58 = vld [vmem:[%s1 + $0x138] sm:$0xff]
    %v59 = vld [vmem:[%s1 + $0x140] sm:$0xff]
    %v60 = vld [vmem:[%s1 + $0x148] sm:$0xff]
    %v61 = vld [vmem:[%s1 + $0x150] sm:$0xff]
    %v62 = vld [vmem:[%s1 + $0x158] sm:$0xff]
    %v63 = vld [vmem:[%s1 + $0x160] sm:$0xff]
    %v64 = vld [vmem:[%s1 + $0x168] sm:$0xff]
    %v65 = vld [vmem:[%s1 + $0x170] sm:$0xff]
    %v66 = vld [vmem:[%s1 + $0x178] sm:$0xff]
    %v67 = vld [vmem:[%s1 + $0x180] sm:$0xff]
    %v68 = vld [vmem:[%s1 + $0x188] sm:$0xff]
    %v69 = vld [vmem:[%s1 + $0x190] sm:$0xff]
    %v70 = vld [vmem:[%s1 + $0x198] sm:$0xff]
    %v71 = vld [vmem:[%s1 + $0x1a0] sm:$0xff]
    %v72 = vld [vmem:[%s1 + $0x1a8] sm:$0xff]
    %v73 = vld [vmem:[%s1 + $0x1b0] sm:$0xff]
    %v74 = vld [vmem:[%s1 + $0x1b8] sm:$0xff]
    %v75 = vld [vmem:[%s1 + $0x1c0] sm:$0xff]
    %v76 = vld [vmem:[%s1 + $0x1c8] sm:$0xff]
    %v77 = vld [vmem:[%s1 + $0x1d0] sm:$0xff]
    %v78 = vld [vmem:[%s1 + $0x1d8] sm:$0xff]
    %v79 = vld [vmem:[%s1 + $0x1e0] sm:$0xff]
    %v80 = vld [vmem:[%s1 + $0x1e8] sm:$0xff]
    %v81 = vld [vmem:[%s1 + $0x1f0] sm:$0xff]
    %v82 = vld [vmem:[%s1 + $0x1f8] sm:$0xff]
    %v83 = vld [vmem:[%s2] sm:$0x3]
    %v85 = vperm.slane %v83, 0
    %v86 = vperm.slane %v83, 1
    %89 = vmatpush.msra.mxu0 %v49
    %90 = vmatpush.msra.mxu0 %v47
    %91 = vmatpush.msra.mxu0 %v45
    %92 = vmatpush.msra.mxu0 %v43
    %93 = vmatpush.msra.mxu0 %v41
    %94 = vmatpush.msra.mxu0 %v39
    %95 = vmatpush.msra.mxu0 %v37
    %96 = vmatpush.msra.mxu0 %v35
    %97 = vmatpush.msra.mxu0 %v33
    %98 = vmatpush.msra.mxu0 %v31
    %99 = vmatpush.msra.mxu0 %v29
    %100 = vmatpush.msra.mxu0 %v27
    %101 = vmatpush.msra.mxu0 %v25
    %102 = vmatpush.msra.mxu0 %v23
    %103 = vmatpush.msra.mxu0 %v21
    %104 = vmatpush.msra.mxu0 %v19
    %105 = vmatmul.f32.gmra.mxu0 %v15
    %v106 = vpop.f32.mrf.mxu0
    %v107 = vadd.f32 %v85, %v106
    %108 = vmatmul.f32.gmra.mxu0 %v17
    %v109 = vpop.f32.mrf.mxu0
    %v110 = vadd.f32 %v85, %v109
    %111 = vdwg.mxu0
    %112 = vmatpush.msra.mxu0 %v81
    %113 = vmatpush.msra.mxu0 %v79
    %114 = vmatpush.msra.mxu0 %v77
    %115 = vmatpush.msra.mxu0 %v75
    %116 = vmatpush.msra.mxu0 %v73
    %117 = vmatpush.msra.mxu0 %v71
    %118 = vmatpush.msra.mxu0 %v69
    %119 = vmatpush.msra.mxu0 %v67
    %120 = vmatpush.msra.mxu0 %v65
    %121 = vmatpush.msra.mxu0 %v63
    %122 = vmatpush.msra.mxu0 %v61
    %123 = vmatpush.msra.mxu0 %v59
    %124 = vmatpush.msra.mxu0 %v57
    %125 = vmatpush.msra.mxu0 %v55
    %126 = vmatpush.msra.mxu0 %v53
    %127 = vmatpush.msra.mxu0 %v51
    %128 = vmatmul.f32.gmra.mxu0 %v16
    %v129 = vpop.f32.mrf.mxu0
    %v130 = vadd.f32 %v107, %v129
    %131 = vmatmul.f32.gmra.mxu0 %v18
    %v132 = vpop.f32.mrf.mxu0
    %v133 = vadd.f32 %v110, %v132
    %134 = vdwg.mxu0
    %135 = vmatpush.msra.mxu0 %v50
    %136 = vmatpush.msra.mxu0 %v48
    %137 = vmatpush.msra.mxu0 %v46
    %138 = vmatpush.msra.mxu0 %v44
    %139 = vmatpush.msra.mxu0 %v42
    %140 = vmatpush.msra.mxu0 %v40
    %141 = vmatpush.msra.mxu0 %v38
    %142 = vmatpush.msra.mxu0 %v36
    %143 = vmatpush.msra.mxu0 %v34
    %144 = vmatpush.msra.mxu0 %v32
    %145 = vmatpush.msra.mxu0 %v30
    %146 = vmatpush.msra.mxu0 %v28
    %147 = vmatpush.msra.mxu0 %v26
    %148 = vmatpush.msra.mxu0 %v24
    %149 = vmatpush.msra.mxu0 %v22
    %150 = vmatpush.msra.mxu0 %v20
    %151 = vmatmul.f32.gmra.mxu0 %v15
    %v152 = vpop.f32.mrf.mxu0
    %v153 = vadd.f32 %v86, %v152
    %154 = vmatmul.f32.gmra.mxu0 %v17
    %v155 = vpop.f32.mrf.mxu0
    %v156 = vadd.f32 %v86, %v155
    %157 = vdwg.mxu0
    %158 = vmatpush.msra.mxu0 %v82
    %159 = vmatpush.msra.mxu0 %v80
    %160 = vmatpush.msra.mxu0 %v78
    %161 = vmatpush.msra.mxu0 %v76
    %162 = vmatpush.msra.mxu0 %v74
    %163 = vmatpush.msra.mxu0 %v72
    %164 = vmatpush.msra.mxu0 %v70
    %165 = vmatpush.msra.mxu0 %v68
    %166 = vmatpush.msra.mxu0 %v66
    %167 = vmatpush.msra.mxu0 %v64
    %168 = vmatpush.msra.mxu0 %v62
    %169 = vmatpush.msra.mxu0 %v60
    %170 = vmatpush.msra.mxu0 %v58
    %171 = vmatpush.msra.mxu0 %v56
    %172 = vmatpush.msra.mxu0 %v54
    %173 = vmatpush.msra.mxu0 %v52
    %174 = vmatmul.f32.gmra.mxu0 %v16
    %v175 = vpop.f32.mrf.mxu0
    %v176 = vadd.f32 %v153, %v175
    %177 = vmatmul.f32.gmra.mxu0 %v18
    %v178 = vpop.f32.mrf.mxu0
    %v179 = vadd.f32 %v156, %v178
    %180 = vdwg.mxu0
    %181 = vst [vmem:[#allocation2] sm:$0xff] %v130
    %182 = vst [vmem:[#allocation2 + $0x8] sm:$0xff] %v176
    %183 = vst [vmem:[#allocation2 + $0x10] sm:$0xff] %v133
    %184 = vst [vmem:[#allocation2 + $0x18] sm:$0xff] %v179
    // Predicated region
    $region14: #{customgpt_forward.31} parent=1 // pred_check
      _
    $region15: #{customgpt_forward.31} parent=1 // pred_check_branch
      %186 = sbr.rel (0) target = $region17
    $region16: #{customgpt_forward.31} parent=1 // pred_region
      %188 = vsyncadd [#allocation3], 0
      %s189 = sshll.u32 [#allocation2], 4
      %s190 = int_to_ptr.vmem [resolvable:$true] %s189
      %s191 = sshll.u32 %s3, 4
      %s192 = int_to_ptr.hbm [resolvable:$true] %s191
      %197 = dma.vmem_to_hbm [thread:$0]  %s190, 512, %s192, [#allocation3], 256, 256, 16
    $region17: #{customgpt_forward.31} parent=1 // pred_fallthru
      _
    // Predicated region
    $region18: #{customgpt_forward.31} parent=1 // pred_check
      _
    $region19: #{customgpt_forward.31} parent=1 // pred_check_branch
      %199 = sbr.rel (0) target = $region21
    $region20: #{customgpt_forward.31} parent=1 // pred_region
      %201 = dma.done [#allocation3], 512
    $region21: #{customgpt_forward.31} parent=1 // pred_fallthru
      _
    %202 = vsyncpa [#allocation3], 1

</llo_original>
